<compile_context>
chip_gen: v7x
topology: tpu7x:2x2x1
jax: 0.10.0
libtpu: 0.0.40
codegen_flags: <defaults>
</compile_context>

<pallas_src>
import jax
import jax.numpy as jnp
from jax.experimental import pallas as pl
from jax.experimental.pallas import tpu as pltpu


def _vmem_limit_bytes():
    """Generation-aware scoped-VMEM limit (v5e/v6e: 128 MiB phys, v7x: 64 MiB)."""
    try:
        cap = int(pltpu.get_tpu_info().vmem_capacity_bytes)
    except Exception:  # conservative default if the query is unavailable
        cap = 64 << 20
    return int(min(cap * 3 // 4, 96 << 20))


def _choose_batch_tile(B, L, H, itemsize, target_bytes):
    """Largest batch tile TB such that:
       * TB divides B (no padded rows -> softmax over L stays exact),
       * TB is a multiple of 8 (sublane rule for the (TB, H)/(TB, L) output
         blocks) or TB == B (block == full dim),
       * the (TB, L, H) tile plus its f32 elementwise temporaries stay near
         `target_bytes`,
       * the grid keeps >= 2 steps when B allows it, preferring an even step
         count (v7x: 2 TensorCores share the single 'parallel' axis).
    """
    # Size off the f32 footprint: the VPU contractions materialize f32 temps.
    row_bytes = max(1, L * H * max(itemsize, 4))
    want = max(1, target_bytes // row_bytes)
    if B >= 16:
        want = min(want, B // 2)
    best = None
    best_even = None
    tb = 8
    while tb <= min(B, want):
        if B % tb == 0:
            best = tb
            if (B // tb) % 2 == 0:
                best_even = tb
        tb += 8
    if best is None:
        return B
    # Prefer an even number of grid steps as long as the tile stays >= best/2.
    if best_even is not None and best_even * 2 >= best:
        return best_even
    return best


def dot_attention_kernel(x_ref, v_ref, rep_ref, attn_ref):
    # x_ref:    (TB, L, H)  batch tile
    # v_ref:    (1, H)      shared attention vector
    # rep_ref:  (TB, H)     weighted representations (lane-dense in H)
    # attn_ref: (TB, L)     attention weights (lane-dense in L)
    tb, L, H = x_ref.shape
    xf = x_ref[...].astype(jnp.float32)                 # (TB, L, H) f32 compute
    v = v_ref[...].astype(jnp.float32)                  # (1, H)

    # scores: contract H on the VPU (lane-broadcast of v, minor-axis reduce).
    scores = jnp.sum(xf * v.reshape(1, 1, H), axis=-1)  # (TB, L) f32

    # relu then softmax over the sequence axis (lane axis), all on 2-D arrays.
    e = jnp.maximum(scores, 0.0)
    m = jnp.max(e, axis=-1, keepdims=True)              # (TB, 1)
    p = jnp.exp(e - m)                                  # (TB, L)
    denom = jnp.sum(p, axis=-1, keepdims=True)          # (TB, 1)
    # PyTorch renormalizes again by sum(attn) == 1.0 (+/- ulp); both
    # normalizations fold into a single multiply by 1/denom (exact reciprocal).
    attn = p * pl.reciprocal(denom)                     # (TB, L) f32

    # weighted sum over L on the VPU: lane-broadcast attn over H, sublane reduce.
    rep = jnp.sum(xf * attn[:, :, None], axis=1)        # (TB, H) f32

    rep_ref[...] = rep.astype(rep_ref.dtype)            # (TB, H)
    attn_ref[...] = attn.astype(attn_ref.dtype)         # (TB, L)


def dot_attention(inputs, attn_vector, *, batch_tile=None):
    """inputs: (B, L, H); attn_vector: (1, H). Returns ((B, H), (B, L))."""
    B, L, H = inputs.shape
    vmem_limit = _vmem_limit_bytes()
    # 16 MiB tiles on v5e/v6e (96 MiB scoped limit); ~8 MiB on v7x (48 MiB),
    # leaving room for the double-buffered x plus the f32 VPU temporaries.
    target_tile_bytes = min(16 << 20, vmem_limit // 6)
    tb = batch_tile or _choose_batch_tile(B, L, H, inputs.dtype.itemsize,
                                          target_tile_bytes)
    assert B % tb == 0, (B, tb)

    rep_out, attn_out = pl.pallas_call(
        dot_attention_kernel,
        grid=(B // tb,),
        in_specs=[
            pl.BlockSpec((tb, L, H), lambda b: (b, 0, 0)),
            pl.BlockSpec((1, H), lambda b: (0, 0)),
        ],
        out_specs=(
            pl.BlockSpec((tb, H), lambda b: (b, 0)),
            pl.BlockSpec((tb, L), lambda b: (b, 0)),
        ),
        out_shape=(
            jax.ShapeDtypeStruct((B, H), inputs.dtype),
            jax.ShapeDtypeStruct((B, L), inputs.dtype),
        ),
        compiler_params=pltpu.CompilerParams(
            dimension_semantics=("parallel",),
            vmem_limit_bytes=vmem_limit,
        ),
    )(inputs, attn_vector)
    return rep_out, attn_out


def _reference(inputs, attn_vector):
    # pure-JAX reference mirroring the PyTorch forward
    scores = jnp.einsum("blh,oh->bl", inputs, attn_vector)
    e = jax.nn.softmax(jax.nn.relu(scores), axis=-1)
    attn = e / jnp.sum(e, axis=-1, keepdims=True)
    rep = jnp.sum(inputs * attn[..., None], axis=1)
    return rep, attn


if __name__ == "__main__":
    B, L, H = 16, 128, 128  # small but (8,128)-aligned; exercises TB=8, grid=2
    key = jax.random.PRNGKey(0)
    k_in, k_v = jax.random.split(key)

    inputs = jax.random.normal(k_in, (B, L, H), dtype=jnp.float32)

    # deterministic xavier_uniform init of attn_vector (1, H):
    # fan_in = H, fan_out = 1 -> bound = sqrt(6 / (H + 1))
    bound = (6.0 / (H + 1)) ** 0.5
    attn_vector = jax.random.uniform(
        k_v, (1, H), dtype=jnp.float32, minval=-bound, maxval=bound)

    representations, attn_weights = dot_attention(inputs, attn_vector)
    jax.block_until_ready((representations, attn_weights))

    rep_ref, attn_ref = _reference(inputs, attn_vector)
    assert representations.shape == (B, H)
    assert attn_weights.shape == (B, L)
    assert jnp.allclose(representations, rep_ref, atol=2e-5), \
        float(jnp.max(jnp.abs(representations - rep_ref)))
    assert jnp.allclose(attn_weights, attn_ref, atol=2e-5), \
        float(jnp.max(jnp.abs(attn_weights - attn_ref)))

    print("KERNEL_OK")
</pallas_src>

<mosaic_0001>
module attributes {stable_mosaic.version = 11 : i64} {
  func.func @dot_attention_kernel(%arg0: i32, %arg1: memref<8x128x128xf32, #tpu.memory_space<vmem>>, %arg2: memref<1x128xf32, #tpu.memory_space<vmem>>, %arg3: memref<8x128xf32, #tpu.memory_space<vmem>>, %arg4: memref<8x128xf32, #tpu.memory_space<vmem>>) attributes {dimension_semantics = [#tpu.dimension_semantics<parallel>], iteration_bounds = array<i64: 2>, scalar_prefetch = 0 : i64, scratch_operands = 0 : i64, tpu.core_type = #tpu.core_type<tc>, window_params = [{transform_indices = @transform_0, window_bounds = array<i64: 8, 128, 128>}, {pipeline_mode = #tpu.pipeline_mode<synchronous>, transform_indices = @transform_1, window_bounds = array<i64: 1, 128>}, {transform_indices = @transform_2, window_bounds = array<i64: 8, 128>}, {transform_indices = @transform_3, window_bounds = array<i64: 8, 128>}]} {
    %c0 = arith.constant 0 : index
    %c0_0 = arith.constant 0 : index
    %c0_1 = arith.constant 0 : index
    %0 = vector.load %arg1[%c0, %c0_0, %c0_1] : memref<8x128x128xf32, #tpu.memory_space<vmem>>, vector<8x128x128xf32>
    %c0_2 = arith.constant 0 : index
    %c0_3 = arith.constant 0 : index
    %1 = vector.load %arg2[%c0_2, %c0_3] : memref<1x128xf32, #tpu.memory_space<vmem>>, vector<1x128xf32>
    %2 = vector.shape_cast %1 : vector<1x128xf32> to vector<1x1x128xf32>
    %3 = vector.broadcast %2 : vector<1x1x128xf32> to vector<8x128x128xf32>
    %4 = arith.mulf %0, %3 : vector<8x128x128xf32>
    %cst = arith.constant dense<0.000000e+00> : vector<8x128xf32>
    %5 = vector.multi_reduction <add>, %4, %cst [2] : vector<8x128x128xf32> to vector<8x128xf32>
    %cst_4 = arith.constant 0.000000e+00 : f32
    %6 = vector.broadcast %cst_4 : f32 to vector<8x128xf32>
    %7 = arith.maximumf %5, %6 : vector<8x128xf32>
    %cst_5 = arith.constant dense<0xFF800000> : vector<8xf32>
    %8 = vector.multi_reduction <maximumf>, %7, %cst_5 [1] : vector<8x128xf32> to vector<8xf32>
    %9 = vector.shape_cast %8 : vector<8xf32> to vector<8x1xf32>
    %10 = vector.broadcast %9 : vector<8x1xf32> to vector<8x128xf32>
    %11 = arith.subf %7, %10 : vector<8x128xf32>
    %12 = math.exp %11 : vector<8x128xf32>
    %cst_6 = arith.constant dense<0.000000e+00> : vector<8xf32>
    %13 = vector.multi_reduction <add>, %12, %cst_6 [1] : vector<8x128xf32> to vector<8xf32>
    %14 = vector.shape_cast %13 : vector<8xf32> to vector<8x1xf32>
    %15 = tpu.reciprocal %14 : vector<8x1xf32> -> vector<8x1xf32>
    %16 = vector.broadcast %15 : vector<8x1xf32> to vector<8x128xf32>
    %17 = arith.mulf %12, %16 : vector<8x128xf32>
    %18 = vector.shape_cast %17 : vector<8x128xf32> to vector<8x128x1xf32>
    %19 = vector.broadcast %18 : vector<8x128x1xf32> to vector<8x128x128xf32>
    %20 = arith.mulf %0, %19 : vector<8x128x128xf32>
    %cst_7 = arith.constant dense<0.000000e+00> : vector<8x128xf32>
    %21 = vector.multi_reduction <add>, %20, %cst_7 [1] : vector<8x128x128xf32> to vector<8x128xf32>
    %c0_8 = arith.constant 0 : index
    %c0_9 = arith.constant 0 : index
    %22 = vector.load %arg3[%c0_8, %c0_9] : memref<8x128xf32, #tpu.memory_space<vmem>>, vector<8x128xf32>
    tpu.vector_store %arg3[%c0_8, %c0_9], %21 {strides = array<i32>} : memref<8x128xf32, #tpu.memory_space<vmem>>, vector<8x128xf32>,
    %c0_10 = arith.constant 0 : index
    %c0_11 = arith.constant 0 : index
    %23 = vector.load %arg4[%c0_10, %c0_11] : memref<8x128xf32, #tpu.memory_space<vmem>>, vector<8x128xf32>
    tpu.vector_store %arg4[%c0_10, %c0_11], %17 {strides = array<i32>} : memref<8x128xf32, #tpu.memory_space<vmem>>, vector<8x128xf32>,
    return
  }
  func.func @transform_0(%arg0: i32) -> (i32, i32, i32) {
    %c0_i32 = arith.constant 0 : i32
    %c0_i32_0 = arith.constant 0 : i32
    %c0_i32_1 = arith.constant 0 : i32
    return %arg0, %c0_i32, %c0_i32_0 : i32, i32, i32
  }
  func.func @transform_1(%arg0: i32) -> (i32, i32) {
    %c0_i32 = arith.constant 0 : i32
    %c0_i32_0 = arith.constant 0 : i32
    %c0_i32_1 = arith.constant 0 : i32
    return %c0_i32, %c0_i32_0 : i32, i32
  }
  func.func @transform_2(%arg0: i32) -> (i32, i32) {
    %c0_i32 = arith.constant 0 : i32
    %c0_i32_0 = arith.constant 0 : i32
    return %arg0, %c0_i32 : i32, i32
  }
  func.func @transform_3(%arg0: i32) -> (i32, i32) {
    %c0_i32 = arith.constant 0 : i32
    %c0_i32_0 = arith.constant 0 : i32
    return %arg0, %c0_i32 : i32, i32
  }
}

</mosaic_0001>

<llo_original>
// kernel: tpu_custom_call.1
$region0: #{tpu_custom_call.1}
  #allocation0 [shape = 'u32[]', space=smem, size = 0x4, offset = 0x4, fixed_abs, tag = 'smem constant byte address 0x4 - core index']
  #allocation1 [shape = 'u32[144,128]{1,0:T(1,128)}', space=vmem, size = 0x12000, scoped, tag = 'internal scratch']
  %s0 = inlined_call_operand.hbm [shape: f32[16,128,128], index: 0, kind: input, shape index: {}]
  %s1 = inlined_call_operand.vmem [shape: f32[1,128], index: 1, kind: input, shape index: {}]
  %s2 = inlined_call_operand.hbm [shape: f32[16,128], index: 2, kind: output, shape index: {0}]
  %s3 = inlined_call_operand.hbm [shape: f32[16,128], index: 3, kind: output, shape index: {1}]
  %4 = xla_tuple %s2, %s3
  %s5 = sld [smem:[#allocation0]]
  $region53: #{tpu_custom_call.1} parent=0
    _
  %s7 = ssub.s32 1, %s5
  %s8 = scalar_select 0, %s7, %s5
  $region1: #{tpu_custom_call.1} parent=0
    #allocation2 [shape = 'u8[1048576]{0}', space=vmem, size = 0x100000, scoped, tag = 'input window, operand 0']
    #allocation3 [shape = 's32[2]{0}', space=sflag, size = 0x8, scoped, tag = 'scoped memory for tpu_custom_call.1']
    #allocation4 [shape = 's32[2]{0}', space=sflag, size = 0x8, scoped, tag = 'scoped memory for tpu_custom_call.1']
    #allocation5 [shape = 'u8[8192]{0}', space=vmem, size = 0x2000, scoped, tag = 'output window, operand 0']
    #allocation6 [shape = 'u8[8192]{0}', space=vmem, size = 0x2000, scoped, tag = 'output window, operand 1']
    #allocation7 [shape = 's32[2]{0}', space=sflag, size = 0x8, scoped, tag = 'scoped memory for tpu_custom_call.1']
    %9 = vsyncpa [#allocation3], 0
    %s10 = scalar_lea.sflag [#allocation3], 1
    %11 = vsyncpa %s10, 0
    %12 = vsyncpa [#allocation4], 0
    %s13 = scalar_lea.sflag [#allocation4], 1
    %14 = vsyncpa %s13, 0
    %15 = vsyncpa [#allocation7], 0
    %s16 = scalar_lea.sflag [#allocation7], 1
    %17 = vsyncpa %s16, 0
    loop: start=0, step=1, limit=4
    $region2: #{tpu_custom_call.1} parent=1 // loop_pre_header
      _
    $region3: #{tpu_custom_call.1} parent=1 // loop_header
      %s19 = sphi 0, %s23
      %p20 = scmp.ge.s32.totalorder %s19, 4
      %s29 = sphi 0, %s31
      %s32 = sphi 0, %s29
      %s33 = sphi 0, %s32
      %s49 = sphi 0, %s33
      %s53 = sphi 0, %s53
      %s55 = sphi 0, %s53
      %s56 = sphi 0, %s55
      %s70 = sphi 0, %s56
      %s76 = sphi 0, %s78
      %s79 = sphi 0, %s76
      %s80 = sphi 0, %s79
      %s96 = sphi 0, %s80
      %s102 = sphi 0, %s104
      %s105 = sphi 0, %s102
      %s106 = sphi 0, %s105
      %s122 = sphi 0, %s106
    $region4: #{tpu_custom_call.1} parent=1 // loop_header_branch
      %22 = sbr.rel (%p20) target = $region8
    $region5: #{tpu_custom_call.1} parent=1 // loop_body
      %s24 = ssub.s32 %s19, 1
      %s25 = ssub.s32 %s19, 2
      %s26 = sadd.s32 %s19, 1
      %s27 = ssub.s32 %s19, %s26
      %p28 = scmp.eq.s32.totalorder %s27, 0
      %s30 = sadd.s32 %s29, 1
      %s31 = scalar_select %p28, %s29, %s30
      %p34 = pneg %p28
      %p35 = scmp.eq.s32.totalorder %s19, 1
      %p36 = por %p34, %p35
      %p37 = scmp.ne.s32.totalorder %s29, %s32
      %p38 = scmp.eq.s32.totalorder %s19, 0
      %p39 = por %p37, %p38
      %p40 = scmp.ne.s32.totalorder %s29, %s32
      %p41 = scmp.eq.s32.totalorder %s24, 1
      %p42 = por %p40, %p41
      %p43 = scmp.ne.s32.totalorder %s32, %s33
      %p44 = scmp.eq.s32.totalorder %s24, 0
      %p45 = por %p43, %p44
      %p46 = scmp.ne.s32.totalorder %s32, %s33
      %p47 = scmp.eq.s32.totalorder %s25, 1
      %p48 = por %p46, %p47
      %p50 = scmp.ne.s32.totalorder %s33, %s49
      %p51 = scmp.eq.s32.totalorder %s25, 0
      %p52 = por %p50, %p51
      %s54 = sadd.s32 %s53, 1
      %p57 = scmp.eq.s32.totalorder %s19, 1
      %p58 = scmp.ne.s32.totalorder %s53, %s55
      %p59 = scmp.eq.s32.totalorder %s19, 0
      %p60 = por %p58, %p59
      %p61 = scmp.ne.s32.totalorder %s53, %s55
      %p62 = scmp.eq.s32.totalorder %s24, 1
      %p63 = por %p61, %p62
      %p64 = scmp.ne.s32.totalorder %s55, %s56
      %p65 = scmp.eq.s32.totalorder %s24, 0
      %p66 = por %p64, %p65
      %p67 = scmp.ne.s32.totalorder %s55, %s56
      %p68 = scmp.eq.s32.totalorder %s25, 1
      %p69 = por %p67, %p68
      %p71 = scmp.ne.s32.totalorder %s56, %s70
      %p72 = scmp.eq.s32.totalorder %s25, 0
      %p73 = por %p71, %p72
      %s74 = ssub.s32 %s19, %s26
      %p75 = scmp.eq.s32.totalorder %s74, 0
      %s77 = sadd.s32 %s76, 1
      %s78 = scalar_select %p75, %s76, %s77
      %p81 = pneg %p75
      %p82 = scmp.eq.s32.totalorder %s19, 1
      %p83 = por %p81, %p82
      %p84 = scmp.ne.s32.totalorder %s76, %s79
      %p85 = scmp.eq.s32.totalorder %s19, 0
      %p86 = por %p84, %p85
      %p87 = scmp.ne.s32.totalorder %s76, %s79
      %p88 = scmp.eq.s32.totalorder %s24, 1
      %p89 = por %p87, %p88
      %p90 = scmp.ne.s32.totalorder %s79, %s80
      %p91 = scmp.eq.s32.totalorder %s24, 0
      %p92 = por %p90, %p91
      %p93 = scmp.ne.s32.totalorder %s79, %s80
      %p94 = scmp.eq.s32.totalorder %s25, 1
      %p95 = por %p93, %p94
      %p97 = scmp.ne.s32.totalorder %s80, %s96
      %p98 = scmp.eq.s32.totalorder %s25, 0
      %p99 = por %p97, %p98
      %s100 = ssub.s32 %s19, %s26
      %p101 = scmp.eq.s32.totalorder %s100, 0
      %s103 = sadd.s32 %s102, 1
      %s104 = scalar_select %p101, %s102, %s103
      %p107 = pneg %p101
      %p108 = scmp.eq.s32.totalorder %s19, 1
      %p109 = por %p107, %p108
      %p110 = scmp.ne.s32.totalorder %s102, %s105
      %p111 = scmp.eq.s32.totalorder %s19, 0
      %p112 = por %p110, %p111
      %p113 = scmp.ne.s32.totalorder %s102, %s105
      %p114 = scmp.eq.s32.totalorder %s24, 1
      %p115 = por %p113, %p114
      %p116 = scmp.ne.s32.totalorder %s105, %s106
      %p117 = scmp.eq.s32.totalorder %s24, 0
      %p118 = por %p116, %p117
      %p119 = scmp.ne.s32.totalorder %s105, %s106
      %p120 = scmp.eq.s32.totalorder %s25, 1
      %p121 = por %p119, %p120
      %p123 = scmp.ne.s32.totalorder %s106, %s122
      %p124 = scmp.eq.s32.totalorder %s25, 0
      %p125 = por %p123, %p124
      %p126 = scmp.le.s32.totalorder 1, %s19
      %p127 = scmp.lt.s32.totalorder %s19, 3
      %p128 = pnand %p126, %p127
      %p129 = pneg %p128
      // Predicated region
      $region9: #{tpu_custom_call.1} parent=5 // pred_check
        _
      $region10: #{tpu_custom_call.1} parent=5 // pred_check_branch
        %131 = sbr.rel (%p128) target = $region12
      $region11: #{tpu_custom_call.1} parent=5 // pred_region
        %s132 = ssub.s32 %s19, 1
        // Predicated region
        $region13: #{tpu_custom_call.1} parent=11 // pred_check
          %p133 = pneg %p66
        $region14: #{tpu_custom_call.1} parent=11 // pred_check_branch
          %135 = sbr.rel (%p133) target = $region16
        $region15: #{tpu_custom_call.1} parent=11 // pred_region
          _
        $region16: #{tpu_custom_call.1} parent=11 // pred_fallthru
          _
      $region12: #{tpu_custom_call.1} parent=5 // pred_fallthru
        _
      %p136 = scmp.lt.s32.totalorder %s19, 2
      // Predicated region
      $region17: #{tpu_custom_call.1} parent=5 // pred_check
        %p137 = pneg %p136
      $region18: #{tpu_custom_call.1} parent=5 // pred_check_branch
        %139 = sbr.rel (%p137) target = $region20
      $region19: #{tpu_custom_call.1} parent=5 // pred_region
        // Predicated region
        $region21: #{tpu_custom_call.1} parent=19 // pred_check
          %p140 = pneg %p39
        $region22: #{tpu_custom_call.1} parent=19 // pred_check_branch
          %142 = sbr.rel (%p140) target = $region24
        $region23: #{tpu_custom_call.1} parent=19 // pred_region
          %s143 = sand.u32 %s29, 1
          %s144 = scalar_lea.sflag [#allocation3], %s143
          %s145 = sand.u32 %s29, 1
          %s146 = smul.addr %s145, 1024
          %s147 = scalar_lea.vmem [#allocation2], %s146
          %s148 = smul.u32 8, %s19
          %s150 = ssub.s32 16384, 16384
          %151 = vsyncadd %s144, %s150
          %s152 = smul.addr %s148, 16
          %s153 = smul.addr %s152, 128
          %s154 = scalar_lea.hbm %s0, %s153
          %s155 = sshll.u32 %s147, 4
          %s156 = int_to_ptr.vmem [resolvable:$true] %s155
          %161 = dma.hbm_to_vmem [thread:$0]  %s154, 16384, %s156, %s144, 128, 128, 8
        $region24: #{tpu_custom_call.1} parent=19 // pred_fallthru
          _
      $region20: #{tpu_custom_call.1} parent=5 // pred_fallthru
        _
      %p162 = scmp.le.s32.totalorder 1, %s19
      %p163 = scmp.lt.s32.totalorder %s19, 3
      %p164 = pnand %p162, %p163
      %p165 = pneg %p164
      // Predicated region
      $region25: #{tpu_custom_call.1} parent=5 // pred_check
        _
      $region26: #{tpu_custom_call.1} parent=5 // pred_check_branch
        %167 = sbr.rel (%p164) target = $region28
      $region27: #{tpu_custom_call.1} parent=5 // pred_region
        %s168 = ssub.s32 %s19, 1
        %s169 = sand.u32 %s32, 1
        %s170 = scalar_lea.sflag [#allocation3], %s169
        %s171 = sand.u32 %s32, 1
        %s172 = smul.addr %s171, 1024
        %s173 = scalar_lea.vmem [#allocation2], %s172
        // Predicated region
        $region29: #{tpu_custom_call.1} parent=27 // pred_check
          %p174 = pneg %p45
        $region30: #{tpu_custom_call.1} parent=27 // pred_check_branch
          %176 = sbr.rel (%p174) target = $region32
        $region31: #{tpu_custom_call.1} parent=27 // pred_region
          %177 = dma.done %s170, 16384
        $region32: #{tpu_custom_call.1} parent=27 // pred_fallthru
          _
        %s178 = sand.u32 %s32, 1
        %s179 = scalar_lea.sflag [#allocation3], %s178
        %s180 = sand.u32 %s32, 1
        %s181 = smul.addr %s180, 1024
        %s182 = scalar_lea.vmem [#allocation2], %s181
        %p183 = pneg %p45
        %p184 = pneg %p42
        %p185 = pneg %p66
        %p186 = pneg %p63
        %p187 = pneg %p92
        %p188 = pneg %p89
        %s189 = sand.u32 %s79, 1
        %s190 = scalar_lea.sflag [#allocation4], %s189
        %s191 = sand.u32 %s79, 1
        %s192 = smul.addr %s191, 8
        %s193 = scalar_lea.vmem [#allocation5], %s192
        %p194 = pneg %p118
        %p195 = pneg %p115
        %s196 = sand.u32 %s105, 1
        %s197 = scalar_lea.sflag [#allocation7], %s196
        %s198 = sand.u32 %s105, 1
        %s199 = smul.addr %s198, 8
        %s200 = scalar_lea.vmem [#allocation6], %s199
        %s201 = smul.u32 8, %s24
        %v202 = vld [vmem:[%s173] sm:$0xff]
        %v203 = vld [vmem:[%s173 + $0x8] sm:$0xff]
        %v204 = vld [vmem:[%s173 + $0x10] sm:$0xff]
        %v205 = vld [vmem:[%s173 + $0x18] sm:$0xff]
        %v206 = vld [vmem:[%s173 + $0x20] sm:$0xff]
        %v207 = vld [vmem:[%s173 + $0x28] sm:$0xff]
        %v208 = vld [vmem:[%s173 + $0x30] sm:$0xff]
        %v209 = vld [vmem:[%s173 + $0x38] sm:$0xff]
        %v210 = vld [vmem:[%s173 + $0x40] sm:$0xff]
        %v211 = vld [vmem:[%s173 + $0x48] sm:$0xff]
        %v212 = vld [vmem:[%s173 + $0x50] sm:$0xff]
        %v213 = vld [vmem:[%s173 + $0x58] sm:$0xff]
        %v214 = vld [vmem:[%s173 + $0x60] sm:$0xff]
        %v215 = vld [vmem:[%s173 + $0x68] sm:$0xff]
        %v216 = vld [vmem:[%s173 + $0x70] sm:$0xff]
        %v217 = vld [vmem:[%s173 + $0x78] sm:$0xff]
        %v218 = vld [vmem:[%s173 + $0x80] sm:$0xff]
        %v219 = vld [vmem:[%s173 + $0x88] sm:$0xff]
        %v220 = vld [vmem:[%s173 + $0x90] sm:$0xff]
        %v221 = vld [vmem:[%s173 + $0x98] sm:$0xff]
        %v222 = vld [vmem:[%s173 + $0xa0] sm:$0xff]
        %v223 = vld [vmem:[%s173 + $0xa8] sm:$0xff]
        %v224 = vld [vmem:[%s173 + $0xb0] sm:$0xff]
        %v225 = vld [vmem:[%s173 + $0xb8] sm:$0xff]
        %v226 = vld [vmem:[%s173 + $0xc0] sm:$0xff]
        %v227 = vld [vmem:[%s173 + $0xc8] sm:$0xff]
        %v228 = vld [vmem:[%s173 + $0xd0] sm:$0xff]
        %v229 = vld [vmem:[%s173 + $0xd8] sm:$0xff]
        %v230 = vld [vmem:[%s173 + $0xe0] sm:$0xff]
        %v231 = vld [vmem:[%s173 + $0xe8] sm:$0xff]
        %v232 = vld [vmem:[%s173 + $0xf0] sm:$0xff]
        %v233 = vld [vmem:[%s173 + $0xf8] sm:$0xff]
        %v234 = vld [vmem:[%s173 + $0x100] sm:$0xff]
        %v235 = vld [vmem:[%s173 + $0x108] sm:$0xff]
        %v236 = vld [vmem:[%s173 + $0x110] sm:$0xff]
        %v237 = vld [vmem:[%s173 + $0x118] sm:$0xff]
        %v238 = vld [vmem:[%s173 + $0x120] sm:$0xff]
        %v239 = vld [vmem:[%s173 + $0x128] sm:$0xff]
        %v240 = vld [vmem:[%s173 + $0x130] sm:$0xff]
        %v241 = vld [vmem:[%s173 + $0x138] sm:$0xff]
        %v242 = vld [vmem:[%s173 + $0x140] sm:$0xff]
        %v243 = vld [vmem:[%s173 + $0x148] sm:$0xff]
        %v244 = vld [vmem:[%s173 + $0x150] sm:$0xff]
        %v245 = vld [vmem:[%s173 + $0x158] sm:$0xff]
        %v246 = vld [vmem:[%s173 + $0x160] sm:$0xff]
        %v247 = vld [vmem:[%s173 + $0x168] sm:$0xff]
        %v248 = vld [vmem:[%s173 + $0x170] sm:$0xff]
        %v249 = vld [vmem:[%s173 + $0x178] sm:$0xff]
        %v250 = vld [vmem:[%s173 + $0x180] sm:$0xff]
        %v251 = vld [vmem:[%s173 + $0x188] sm:$0xff]
        %v252 = vld [vmem:[%s173 + $0x190] sm:$0xff]
        %v253 = vld [vmem:[%s173 + $0x198] sm:$0xff]
        %v254 = vld [vmem:[%s173 + $0x1a0] sm:$0xff]
        %v255 = vld [vmem:[%s173 + $0x1a8] sm:$0xff]
        %v256 = vld [vmem:[%s173 + $0x1b0] sm:$0xff]
        %v257 = vld [vmem:[%s173 + $0x1b8] sm:$0xff]
        %v258 = vld [vmem:[%s173 + $0x1c0] sm:$0xff]
        %v259 = vld [vmem:[%s173 + $0x1c8] sm:$0xff]
        %v260 = vld [vmem:[%s173 + $0x1d0] sm:$0xff]
        %v261 = vld [vmem:[%s173 + $0x1d8] sm:$0xff]
        %v262 = vld [vmem:[%s173 + $0x1e0] sm:$0xff]
        %v263 = vld [vmem:[%s173 + $0x1e8] sm:$0xff]
        %v264 = vld [vmem:[%s173 + $0x1f0] sm:$0xff]
        %v265 = vld [vmem:[%s173 + $0x1f8] sm:$0xff]
        %v266 = vld [vmem:[%s173 + $0x200] sm:$0xff]
        %v267 = vld [vmem:[%s173 + $0x208] sm:$0xff]
        %v268 = vld [vmem:[%s173 + $0x210] sm:$0xff]
        %v269 = vld [vmem:[%s173 + $0x218] sm:$0xff]
        %v270 = vld [vmem:[%s173 + $0x220] sm:$0xff]
        %v271 = vld [vmem:[%s173 + $0x228] sm:$0xff]
        %v272 = vld [vmem:[%s173 + $0x230] sm:$0xff]
        %v273 = vld [vmem:[%s173 + $0x238] sm:$0xff]
        %v274 = vld [vmem:[%s173 + $0x240] sm:$0xff]
        %v275 = vld [vmem:[%s173 + $0x248] sm:$0xff]
        %v276 = vld [vmem:[%s173 + $0x250] sm:$0xff]
        %v277 = vld [vmem:[%s173 + $0x258] sm:$0xff]
        %v278 = vld [vmem:[%s173 + $0x260] sm:$0xff]
        %v279 = vld [vmem:[%s173 + $0x268] sm:$0xff]
        %v280 = vld [vmem:[%s173 + $0x270] sm:$0xff]
        %v281 = vld [vmem:[%s173 + $0x278] sm:$0xff]
        %v282 = vld [vmem:[%s173 + $0x280] sm:$0xff]
        %v283 = vld [vmem:[%s173 + $0x288] sm:$0xff]
        %v284 = vld [vmem:[%s173 + $0x290] sm:$0xff]
        %v285 = vld [vmem:[%s173 + $0x298] sm:$0xff]
        %v286 = vld [vmem:[%s173 + $0x2a0] sm:$0xff]
        %v287 = vld [vmem:[%s173 + $0x2a8] sm:$0xff]
        %v288 = vld [vmem:[%s173 + $0x2b0] sm:$0xff]
        %v289 = vld [vmem:[%s173 + $0x2b8] sm:$0xff]
        %v290 = vld [vmem:[%s173 + $0x2c0] sm:$0xff]
        %v291 = vld [vmem:[%s173 + $0x2c8] sm:$0xff]
        %v292 = vld [vmem:[%s173 + $0x2d0] sm:$0xff]
        %v293 = vld [vmem:[%s173 + $0x2d8] sm:$0xff]
        %v294 = vld [vmem:[%s173 + $0x2e0] sm:$0xff]
        %v295 = vld [vmem:[%s173 + $0x2e8] sm:$0xff]
        %v296 = vld [vmem:[%s173 + $0x2f0] sm:$0xff]
        %v297 = vld [vmem:[%s173 + $0x2f8] sm:$0xff]
        %v298 = vld [vmem:[%s173 + $0x300] sm:$0xff]
        %v299 = vld [vmem:[%s173 + $0x308] sm:$0xff]
        %v300 = vld [vmem:[%s173 + $0x310] sm:$0xff]
        %v301 = vld [vmem:[%s173 + $0x318] sm:$0xff]
        %v302 = vld [vmem:[%s173 + $0x320] sm:$0xff]
        %v303 = vld [vmem:[%s173 + $0x328] sm:$0xff]
        %v304 = vld [vmem:[%s173 + $0x330] sm:$0xff]
        %v305 = vld [vmem:[%s173 + $0x338] sm:$0xff]
        %v306 = vld [vmem:[%s173 + $0x340] sm:$0xff]
        %v307 = vld [vmem:[%s173 + $0x348] sm:$0xff]
        %v308 = vld [vmem:[%s173 + $0x350] sm:$0xff]
        %v309 = vld [vmem:[%s173 + $0x358] sm:$0xff]
        %v310 = vld [vmem:[%s173 + $0x360] sm:$0xff]
        %v311 = vld [vmem:[%s173 + $0x368] sm:$0xff]
        %v312 = vld [vmem:[%s173 + $0x370] sm:$0xff]
        %v313 = vld [vmem:[%s173 + $0x378] sm:$0xff]
        %v314 = vld [vmem:[%s173 + $0x380] sm:$0xff]
        %v315 = vld [vmem:[%s173 + $0x388] sm:$0xff]
        %v316 = vld [vmem:[%s173 + $0x390] sm:$0xff]
        %v317 = vld [vmem:[%s173 + $0x398] sm:$0xff]
        %v318 = vld [vmem:[%s173 + $0x3a0] sm:$0xff]
        %v319 = vld [vmem:[%s173 + $0x3a8] sm:$0xff]
        %v320 = vld [vmem:[%s173 + $0x3b0] sm:$0xff]
        %v321 = vld [vmem:[%s173 + $0x3b8] sm:$0xff]
        %v322 = vld [vmem:[%s173 + $0x3c0] sm:$0xff]
        %v323 = vld [vmem:[%s173 + $0x3c8] sm:$0xff]
        %v324 = vld [vmem:[%s173 + $0x3d0] sm:$0xff]
        %v325 = vld [vmem:[%s173 + $0x3d8] sm:$0xff]
        %v326 = vld [vmem:[%s173 + $0x3e0] sm:$0xff]
        %v327 = vld [vmem:[%s173 + $0x3e8] sm:$0xff]
        %v328 = vld [vmem:[%s173 + $0x3f0] sm:$0xff]
        %v329 = vld [vmem:[%s173 + $0x3f8] sm:$0xff]
        %v330 = vld [vmem:[%s1] sm:$0x1]
        %v332 = vlaneseq
        %v333 = vshrl.u32 %v332, 7
        %v334 = vsub.s32 0, %v333
        %v335 = vrot.slane %v330, %v334
        %v337 = vmul.f32 %v202, %v335
        %v338 = vmul.f32 %v203, %v335
        %v339 = vmul.f32 %v204, %v335
        %v340 = vmul.f32 %v205, %v335
        %v341 = vmul.f32 %v206, %v335
        %v342 = vmul.f32 %v207, %v335
        %v343 = vmul.f32 %v208, %v335
        %v344 = vmul.f32 %v209, %v335
        %v345 = vmul.f32 %v210, %v335
        %v346 = vmul.f32 %v211, %v335
        %v347 = vmul.f32 %v212, %v335
        %v348 = vmul.f32 %v213, %v335
        %v349 = vmul.f32 %v214, %v335
        %v350 = vmul.f32 %v215, %v335
        %v351 = vmul.f32 %v216, %v335
        %v352 = vmul.f32 %v217, %v335
        %v353 = vmul.f32 %v218, %v335
        %v354 = vmul.f32 %v219, %v335
        %v355 = vmul.f32 %v220, %v335
        %v356 = vmul.f32 %v221, %v335
        %v357 = vmul.f32 %v222, %v335
        %v358 = vmul.f32 %v223, %v335
        %v359 = vmul.f32 %v224, %v335
        %v360 = vmul.f32 %v225, %v335
        %v361 = vmul.f32 %v226, %v335
        %v362 = vmul.f32 %v227, %v335
        %v363 = vmul.f32 %v228, %v335
        %v364 = vmul.f32 %v229, %v335
        %v365 = vmul.f32 %v230, %v335
        %v366 = vmul.f32 %v231, %v335
        %v367 = vmul.f32 %v232, %v335
        %v368 = vmul.f32 %v233, %v335
        %v369 = vmul.f32 %v234, %v335
        %v370 = vmul.f32 %v235, %v335
        %v371 = vmul.f32 %v236, %v335
        %v372 = vmul.f32 %v237, %v335
        %v373 = vmul.f32 %v238, %v335
        %v374 = vmul.f32 %v239, %v335
        %v375 = vmul.f32 %v240, %v335
        %v376 = vmul.f32 %v241, %v335
        %v377 = vmul.f32 %v242, %v335
        %v378 = vmul.f32 %v243, %v335
        %v379 = vmul.f32 %v244, %v335
        %v380 = vmul.f32 %v245, %v335
        %v381 = vmul.f32 %v246, %v335
        %v382 = vmul.f32 %v247, %v335
        %v383 = vmul.f32 %v248, %v335
        %v384 = vmul.f32 %v249, %v335
        %v385 = vmul.f32 %v250, %v335
        %v386 = vmul.f32 %v251, %v335
        %v387 = vmul.f32 %v252, %v335
        %v388 = vmul.f32 %v253, %v335
        %v389 = vmul.f32 %v254, %v335
        %v390 = vmul.f32 %v255, %v335
        %v391 = vmul.f32 %v256, %v335
        %v392 = vmul.f32 %v257, %v335
        %v393 = vmul.f32 %v258, %v335
        %v394 = vmul.f32 %v259, %v335
        %v395 = vmul.f32 %v260, %v335
        %v396 = vmul.f32 %v261, %v335
        %v397 = vmul.f32 %v262, %v335
        %v398 = vmul.f32 %v263, %v335
        %v399 = vmul.f32 %v264, %v335
        %v400 = vmul.f32 %v265, %v335
        %v401 = vmul.f32 %v266, %v335
        %v402 = vmul.f32 %v267, %v335
        %v403 = vmul.f32 %v268, %v335
        %v404 = vmul.f32 %v269, %v335
        %v405 = vmul.f32 %v270, %v335
        %v406 = vmul.f32 %v271, %v335
        %v407 = vmul.f32 %v272, %v335
        %v408 = vmul.f32 %v273, %v335
        %v409 = vmul.f32 %v274, %v335
        %v410 = vmul.f32 %v275, %v335
        %v411 = vmul.f32 %v276, %v335
        %v412 = vmul.f32 %v277, %v335
        %v413 = vmul.f32 %v278, %v335
        %v414 = vmul.f32 %v279, %v335
        %v415 = vmul.f32 %v280, %v335
        %v416 = vmul.f32 %v281, %v335
        %v417 = vmul.f32 %v282, %v335
        %v418 = vmul.f32 %v283, %v335
        %v419 = vmul.f32 %v284, %v335
        %v420 = vmul.f32 %v285, %v335
        %v421 = vmul.f32 %v286, %v335
        %v422 = vmul.f32 %v287, %v335
        %v423 = vmul.f32 %v288, %v335
        %v424 = vmul.f32 %v289, %v335
        %v425 = vmul.f32 %v290, %v335
        %v426 = vmul.f32 %v291, %v335
        %v427 = vmul.f32 %v292, %v335
        %v428 = vmul.f32 %v293, %v335
        %v429 = vmul.f32 %v294, %v335
        %v430 = vmul.f32 %v295, %v335
        %v431 = vmul.f32 %v296, %v335
        %v432 = vmul.f32 %v297, %v335
        %v433 = vmul.f32 %v298, %v335
        %v434 = vmul.f32 %v299, %v335
        %v435 = vmul.f32 %v300, %v335
        %v436 = vmul.f32 %v301, %v335
        %v437 = vmul.f32 %v302, %v335
        %v438 = vmul.f32 %v303, %v335
        %v439 = vmul.f32 %v304, %v335
        %v440 = vmul.f32 %v305, %v335
        %v441 = vmul.f32 %v306, %v335
        %v442 = vmul.f32 %v307, %v335
        %v443 = vmul.f32 %v308, %v335
        %v444 = vmul.f32 %v309, %v335
        %v445 = vmul.f32 %v310, %v335
        %v446 = vmul.f32 %v311, %v335
        %v447 = vmul.f32 %v312, %v335
        %v448 = vmul.f32 %v313, %v335
        %v449 = vmul.f32 %v314, %v335
        %v450 = vmul.f32 %v315, %v335
        %v451 = vmul.f32 %v316, %v335
        %v452 = vmul.f32 %v317, %v335
        %v453 = vmul.f32 %v318, %v335
        %v454 = vmul.f32 %v319, %v335
        %v455 = vmul.f32 %v320, %v335
        %v456 = vmul.f32 %v321, %v335
        %v457 = vmul.f32 %v322, %v335
        %v458 = vmul.f32 %v323, %v335
        %v459 = vmul.f32 %v324, %v335
        %v460 = vmul.f32 %v325, %v335
        %v461 = vmul.f32 %v326, %v335
        %v462 = vmul.f32 %v327, %v335
        %v463 = vmul.f32 %v328, %v335
        %v464 = vmul.f32 %v329, %v335
        %465 = vadd.xlane.f32.xlu0 %v337
        %v466 = vpop.xlane.xlu0 %465
        %467 = vadd.xlane.f32.xlu0 %v338
        %v468 = vpop.xlane.xlu0 %467
        %469 = vadd.xlane.f32.xlu0 %v339
        %v470 = vpop.xlane.xlu0 %469
        %471 = vadd.xlane.f32.xlu0 %v340
        %v472 = vpop.xlane.xlu0 %471
        %473 = vadd.xlane.f32.xlu0 %v341
        %v474 = vpop.xlane.xlu0 %473
        %475 = vadd.xlane.f32.xlu0 %v342
        %v476 = vpop.xlane.xlu0 %475
        %477 = vadd.xlane.f32.xlu0 %v343
        %v478 = vpop.xlane.xlu0 %477
        %479 = vadd.xlane.f32.xlu0 %v344
        %v480 = vpop.xlane.xlu0 %479
        %481 = vadd.xlane.f32.xlu0 %v345
        %v482 = vpop.xlane.xlu0 %481
        %483 = vadd.xlane.f32.xlu0 %v346
        %v484 = vpop.xlane.xlu0 %483
        %485 = vadd.xlane.f32.xlu0 %v347
        %v486 = vpop.xlane.xlu0 %485
        %487 = vadd.xlane.f32.xlu0 %v348
        %v488 = vpop.xlane.xlu0 %487
        %489 = vadd.xlane.f32.xlu0 %v349
        %v490 = vpop.xlane.xlu0 %489
        %491 = vadd.xlane.f32.xlu0 %v350
        %v492 = vpop.xlane.xlu0 %491
        %493 = vadd.xlane.f32.xlu0 %v351
        %v494 = vpop.xlane.xlu0 %493
        %495 = vadd.xlane.f32.xlu0 %v352
        %v496 = vpop.xlane.xlu0 %495
        %497 = vadd.xlane.f32.xlu0 %v353
        %v498 = vpop.xlane.xlu0 %497
        %499 = vadd.xlane.f32.xlu0 %v354
        %v500 = vpop.xlane.xlu0 %499
        %501 = vadd.xlane.f32.xlu0 %v355
        %v502 = vpop.xlane.xlu0 %501
        %503 = vadd.xlane.f32.xlu0 %v356
        %v504 = vpop.xlane.xlu0 %503
        %505 = vadd.xlane.f32.xlu0 %v357
        %v506 = vpop.xlane.xlu0 %505
        %507 = vadd.xlane.f32.xlu0 %v358
        %v508 = vpop.xlane.xlu0 %507
        %509 = vadd.xlane.f32.xlu0 %v359
        %v510 = vpop.xlane.xlu0 %509
        %511 = vadd.xlane.f32.xlu0 %v360
        %v512 = vpop.xlane.xlu0 %511
        %513 = vadd.xlane.f32.xlu0 %v361
        %v514 = vpop.xlane.xlu0 %513
        %515 = vadd.xlane.f32.xlu0 %v362
        %v516 = vpop.xlane.xlu0 %515
        %517 = vadd.xlane.f32.xlu0 %v363
        %v518 = vpop.xlane.xlu0 %517
        %519 = vadd.xlane.f32.xlu0 %v364
        %v520 = vpop.xlane.xlu0 %519
        %521 = vadd.xlane.f32.xlu0 %v365
        %v522 = vpop.xlane.xlu0 %521
        %523 = vadd.xlane.f32.xlu0 %v366
        %v524 = vpop.xlane.xlu0 %523
        %525 = vadd.xlane.f32.xlu0 %v367
        %v526 = vpop.xlane.xlu0 %525
        %527 = vadd.xlane.f32.xlu0 %v368
        %v528 = vpop.xlane.xlu0 %527
        %529 = vadd.xlane.f32.xlu0 %v369
        %v530 = vpop.xlane.xlu0 %529
        %531 = vadd.xlane.f32.xlu0 %v370
        %v532 = vpop.xlane.xlu0 %531
        %533 = vadd.xlane.f32.xlu0 %v371
        %v534 = vpop.xlane.xlu0 %533
        %535 = vadd.xlane.f32.xlu0 %v372
        %v536 = vpop.xlane.xlu0 %535
        %537 = vadd.xlane.f32.xlu0 %v373
        %v538 = vpop.xlane.xlu0 %537
        %539 = vadd.xlane.f32.xlu0 %v374
        %v540 = vpop.xlane.xlu0 %539
        %541 = vadd.xlane.f32.xlu0 %v375
        %v542 = vpop.xlane.xlu0 %541
        %543 = vadd.xlane.f32.xlu0 %v376
        %v544 = vpop.xlane.xlu0 %543
        %545 = vadd.xlane.f32.xlu0 %v377
        %v546 = vpop.xlane.xlu0 %545
        %547 = vadd.xlane.f32.xlu0 %v378
        %v548 = vpop.xlane.xlu0 %547
        %549 = vadd.xlane.f32.xlu0 %v379
        %v550 = vpop.xlane.xlu0 %549
        %551 = vadd.xlane.f32.xlu0 %v380
        %v552 = vpop.xlane.xlu0 %551
        %553 = vadd.xlane.f32.xlu0 %v381
        %v554 = vpop.xlane.xlu0 %553
        %555 = vadd.xlane.f32.xlu0 %v382
        %v556 = vpop.xlane.xlu0 %555
        %557 = vadd.xlane.f32.xlu0 %v383
        %v558 = vpop.xlane.xlu0 %557
        %559 = vadd.xlane.f32.xlu0 %v384
        %v560 = vpop.xlane.xlu0 %559
        %561 = vadd.xlane.f32.xlu0 %v385
        %v562 = vpop.xlane.xlu0 %561
        %563 = vadd.xlane.f32.xlu0 %v386
        %v564 = vpop.xlane.xlu0 %563
        %565 = vadd.xlane.f32.xlu0 %v387
        %v566 = vpop.xlane.xlu0 %565
        %567 = vadd.xlane.f32.xlu0 %v388
        %v568 = vpop.xlane.xlu0 %567
        %569 = vadd.xlane.f32.xlu0 %v389
        %v570 = vpop.xlane.xlu0 %569
        %571 = vadd.xlane.f32.xlu0 %v390
        %v572 = vpop.xlane.xlu0 %571
        %573 = vadd.xlane.f32.xlu0 %v391
        %v574 = vpop.xlane.xlu0 %573
        %575 = vadd.xlane.f32.xlu0 %v392
        %v576 = vpop.xlane.xlu0 %575
        %577 = vadd.xlane.f32.xlu0 %v393
        %v578 = vpop.xlane.xlu0 %577
        %579 = vadd.xlane.f32.xlu0 %v394
        %v580 = vpop.xlane.xlu0 %579
        %581 = vadd.xlane.f32.xlu0 %v395
        %v582 = vpop.xlane.xlu0 %581
        %583 = vadd.xlane.f32.xlu0 %v396
        %v584 = vpop.xlane.xlu0 %583
        %585 = vadd.xlane.f32.xlu0 %v397
        %v586 = vpop.xlane.xlu0 %585
        %587 = vadd.xlane.f32.xlu0 %v398
        %v588 = vpop.xlane.xlu0 %587
        %589 = vadd.xlane.f32.xlu0 %v399
        %v590 = vpop.xlane.xlu0 %589
        %591 = vadd.xlane.f32.xlu0 %v400
        %v592 = vpop.xlane.xlu0 %591
        %593 = vadd.xlane.f32.xlu0 %v401
        %v594 = vpop.xlane.xlu0 %593
        %595 = vadd.xlane.f32.xlu0 %v402
        %v596 = vpop.xlane.xlu0 %595
        %597 = vadd.xlane.f32.xlu0 %v403
        %v598 = vpop.xlane.xlu0 %597
        %599 = vadd.xlane.f32.xlu0 %v404
        %v600 = vpop.xlane.xlu0 %599
        %601 = vadd.xlane.f32.xlu0 %v405
        %v602 = vpop.xlane.xlu0 %601
        %603 = vadd.xlane.f32.xlu0 %v406
        %v604 = vpop.xlane.xlu0 %603
        %605 = vadd.xlane.f32.xlu0 %v407
        %v606 = vpop.xlane.xlu0 %605
        %607 = vadd.xlane.f32.xlu0 %v408
        %v608 = vpop.xlane.xlu0 %607
        %609 = vadd.xlane.f32.xlu0 %v409
        %v610 = vpop.xlane.xlu0 %609
        %611 = vadd.xlane.f32.xlu0 %v410
        %v612 = vpop.xlane.xlu0 %611
        %613 = vadd.xlane.f32.xlu0 %v411
        %v614 = vpop.xlane.xlu0 %613
        %615 = vadd.xlane.f32.xlu0 %v412
        %v616 = vpop.xlane.xlu0 %615
        %617 = vadd.xlane.f32.xlu0 %v413
        %v618 = vpop.xlane.xlu0 %617
        %619 = vadd.xlane.f32.xlu0 %v414
        %v620 = vpop.xlane.xlu0 %619
        %621 = vadd.xlane.f32.xlu0 %v415
        %v622 = vpop.xlane.xlu0 %621
        %623 = vadd.xlane.f32.xlu0 %v416
        %v624 = vpop.xlane.xlu0 %623
        %625 = vadd.xlane.f32.xlu0 %v417
        %v626 = vpop.xlane.xlu0 %625
        %627 = vadd.xlane.f32.xlu0 %v418
        %v628 = vpop.xlane.xlu0 %627
        %629 = vadd.xlane.f32.xlu0 %v419
        %v630 = vpop.xlane.xlu0 %629
        %631 = vadd.xlane.f32.xlu0 %v420
        %v632 = vpop.xlane.xlu0 %631
        %633 = vadd.xlane.f32.xlu0 %v421
        %v634 = vpop.xlane.xlu0 %633
        %635 = vadd.xlane.f32.xlu0 %v422
        %v636 = vpop.xlane.xlu0 %635
        %637 = vadd.xlane.f32.xlu0 %v423
        %v638 = vpop.xlane.xlu0 %637
        %639 = vadd.xlane.f32.xlu0 %v424
        %v640 = vpop.xlane.xlu0 %639
        %641 = vadd.xlane.f32.xlu0 %v425
        %v642 = vpop.xlane.xlu0 %641
        %643 = vadd.xlane.f32.xlu0 %v426
        %v644 = vpop.xlane.xlu0 %643
        %645 = vadd.xlane.f32.xlu0 %v427
        %v646 = vpop.xlane.xlu0 %645
        %647 = vadd.xlane.f32.xlu0 %v428
        %v648 = vpop.xlane.xlu0 %647
        %649 = vadd.xlane.f32.xlu0 %v429
        %v650 = vpop.xlane.xlu0 %649
        %651 = vadd.xlane.f32.xlu0 %v430
        %v652 = vpop.xlane.xlu0 %651
        %653 = vadd.xlane.f32.xlu0 %v431
        %v654 = vpop.xlane.xlu0 %653
        %655 = vadd.xlane.f32.xlu0 %v432
        %v656 = vpop.xlane.xlu0 %655
        %657 = vadd.xlane.f32.xlu0 %v433
        %v658 = vpop.xlane.xlu0 %657
        %659 = vadd.xlane.f32.xlu0 %v434
        %v660 = vpop.xlane.xlu0 %659
        %661 = vadd.xlane.f32.xlu0 %v435
        %v662 = vpop.xlane.xlu0 %661
        %663 = vadd.xlane.f32.xlu0 %v436
        %v664 = vpop.xlane.xlu0 %663
        %665 = vadd.xlane.f32.xlu0 %v437
        %v666 = vpop.xlane.xlu0 %665
        %667 = vadd.xlane.f32.xlu0 %v438
        %v668 = vpop.xlane.xlu0 %667
        %669 = vadd.xlane.f32.xlu0 %v439
        %v670 = vpop.xlane.xlu0 %669
        %671 = vadd.xlane.f32.xlu0 %v440
        %v672 = vpop.xlane.xlu0 %671
        %673 = vadd.xlane.f32.xlu0 %v441
        %v674 = vpop.xlane.xlu0 %673
        %675 = vadd.xlane.f32.xlu0 %v442
        %v676 = vpop.xlane.xlu0 %675
        %677 = vadd.xlane.f32.xlu0 %v443
        %v678 = vpop.xlane.xlu0 %677
        %679 = vadd.xlane.f32.xlu0 %v444
        %v680 = vpop.xlane.xlu0 %679
        %681 = vadd.xlane.f32.xlu0 %v445
        %v682 = vpop.xlane.xlu0 %681
        %683 = vadd.xlane.f32.xlu0 %v446
        %v684 = vpop.xlane.xlu0 %683
        %685 = vadd.xlane.f32.xlu0 %v447
        %v686 = vpop.xlane.xlu0 %685
        %687 = vadd.xlane.f32.xlu0 %v448
        %v688 = vpop.xlane.xlu0 %687
        %689 = vadd.xlane.f32.xlu0 %v449
        %v690 = vpop.xlane.xlu0 %689
        %691 = vadd.xlane.f32.xlu0 %v450
        %v692 = vpop.xlane.xlu0 %691
        %693 = vadd.xlane.f32.xlu0 %v451
        %v694 = vpop.xlane.xlu0 %693
        %695 = vadd.xlane.f32.xlu0 %v452
        %v696 = vpop.xlane.xlu0 %695
        %697 = vadd.xlane.f32.xlu0 %v453
        %v698 = vpop.xlane.xlu0 %697
        %699 = vadd.xlane.f32.xlu0 %v454
        %v700 = vpop.xlane.xlu0 %699
        %701 = vadd.xlane.f32.xlu0 %v455
        %v702 = vpop.xlane.xlu0 %701
        %703 = vadd.xlane.f32.xlu0 %v456
        %v704 = vpop.xlane.xlu0 %703
        %705 = vadd.xlane.f32.xlu0 %v457
        %v706 = vpop.xlane.xlu0 %705
        %707 = vadd.xlane.f32.xlu0 %v458
        %v708 = vpop.xlane.xlu0 %707
        %709 = vadd.xlane.f32.xlu0 %v459
        %v710 = vpop.xlane.xlu0 %709
        %711 = vadd.xlane.f32.xlu0 %v460
        %v712 = vpop.xlane.xlu0 %711
        %713 = vadd.xlane.f32.xlu0 %v461
        %v714 = vpop.xlane.xlu0 %713
        %715 = vadd.xlane.f32.xlu0 %v462
        %v716 = vpop.xlane.xlu0 %715
        %717 = vadd.xlane.f32.xlu0 %v463
        %v718 = vpop.xlane.xlu0 %717
        %719 = vadd.xlane.f32.xlu0 %v464
        %v720 = vpop.xlane.xlu0 %719
        %v721 = vmax.f32 %v466, 0.0
        %v722 = vmax.f32 %v468, 0.0
        %v723 = vmax.f32 %v470, 0.0
        %v724 = vmax.f32 %v472, 0.0
        %v725 = vmax.f32 %v474, 0.0
        %v726 = vmax.f32 %v476, 0.0
        %v727 = vmax.f32 %v478, 0.0
        %v728 = vmax.f32 %v480, 0.0
        %v729 = vmax.f32 %v482, 0.0
        %v730 = vmax.f32 %v484, 0.0
        %v731 = vmax.f32 %v486, 0.0
        %v732 = vmax.f32 %v488, 0.0
        %v733 = vmax.f32 %v490, 0.0
        %v734 = vmax.f32 %v492, 0.0
        %v735 = vmax.f32 %v494, 0.0
        %v736 = vmax.f32 %v496, 0.0
        %v737 = vmax.f32 %v498, 0.0
        %v738 = vmax.f32 %v500, 0.0
        %v739 = vmax.f32 %v502, 0.0
        %v740 = vmax.f32 %v504, 0.0
        %v741 = vmax.f32 %v506, 0.0
        %v742 = vmax.f32 %v508, 0.0
        %v743 = vmax.f32 %v510, 0.0
        %v744 = vmax.f32 %v512, 0.0
        %v745 = vmax.f32 %v514, 0.0
        %v746 = vmax.f32 %v516, 0.0
        %v747 = vmax.f32 %v518, 0.0
        %v748 = vmax.f32 %v520, 0.0
        %v749 = vmax.f32 %v522, 0.0
        %v750 = vmax.f32 %v524, 0.0
        %v751 = vmax.f32 %v526, 0.0
        %v752 = vmax.f32 %v528, 0.0
        %v753 = vmax.f32 %v530, 0.0
        %v754 = vmax.f32 %v532, 0.0
        %v755 = vmax.f32 %v534, 0.0
        %v756 = vmax.f32 %v536, 0.0
        %v757 = vmax.f32 %v538, 0.0
        %v758 = vmax.f32 %v540, 0.0
        %v759 = vmax.f32 %v542, 0.0
        %v760 = vmax.f32 %v544, 0.0
        %v761 = vmax.f32 %v546, 0.0
        %v762 = vmax.f32 %v548, 0.0
        %v763 = vmax.f32 %v550, 0.0
        %v764 = vmax.f32 %v552, 0.0
        %v765 = vmax.f32 %v554, 0.0
        %v766 = vmax.f32 %v556, 0.0
        %v767 = vmax.f32 %v558, 0.0
        %v768 = vmax.f32 %v560, 0.0
        %v769 = vmax.f32 %v562, 0.0
        %v770 = vmax.f32 %v564, 0.0
        %v771 = vmax.f32 %v566, 0.0
        %v772 = vmax.f32 %v568, 0.0
        %v773 = vmax.f32 %v570, 0.0
        %v774 = vmax.f32 %v572, 0.0
        %v775 = vmax.f32 %v574, 0.0
        %v776 = vmax.f32 %v576, 0.0
        %v777 = vmax.f32 %v578, 0.0
        %v778 = vmax.f32 %v580, 0.0
        %v779 = vmax.f32 %v582, 0.0
        %v780 = vmax.f32 %v584, 0.0
        %v781 = vmax.f32 %v586, 0.0
        %v782 = vmax.f32 %v588, 0.0
        %v783 = vmax.f32 %v590, 0.0
        %v784 = vmax.f32 %v592, 0.0
        %v785 = vmax.f32 %v594, 0.0
        %v786 = vmax.f32 %v596, 0.0
        %v787 = vmax.f32 %v598, 0.0
        %v788 = vmax.f32 %v600, 0.0
        %v789 = vmax.f32 %v602, 0.0
        %v790 = vmax.f32 %v604, 0.0
        %v791 = vmax.f32 %v606, 0.0
        %v792 = vmax.f32 %v608, 0.0
        %v793 = vmax.f32 %v610, 0.0
        %v794 = vmax.f32 %v612, 0.0
        %v795 = vmax.f32 %v614, 0.0
        %v796 = vmax.f32 %v616, 0.0
        %v797 = vmax.f32 %v618, 0.0
        %v798 = vmax.f32 %v620, 0.0
        %v799 = vmax.f32 %v622, 0.0
        %v800 = vmax.f32 %v624, 0.0
        %v801 = vmax.f32 %v626, 0.0
        %v802 = vmax.f32 %v628, 0.0
        %v803 = vmax.f32 %v630, 0.0
        %v804 = vmax.f32 %v632, 0.0
        %v805 = vmax.f32 %v634, 0.0
        %v806 = vmax.f32 %v636, 0.0
        %v807 = vmax.f32 %v638, 0.0
        %v808 = vmax.f32 %v640, 0.0
        %v809 = vmax.f32 %v642, 0.0
        %v810 = vmax.f32 %v644, 0.0
        %v811 = vmax.f32 %v646, 0.0
        %v812 = vmax.f32 %v648, 0.0
        %v813 = vmax.f32 %v650, 0.0
        %v814 = vmax.f32 %v652, 0.0
        %v815 = vmax.f32 %v654, 0.0
        %v816 = vmax.f32 %v656, 0.0
        %v817 = vmax.f32 %v658, 0.0
        %v818 = vmax.f32 %v660, 0.0
        %v819 = vmax.f32 %v662, 0.0
        %v820 = vmax.f32 %v664, 0.0
        %v821 = vmax.f32 %v666, 0.0
        %v822 = vmax.f32 %v668, 0.0
        %v823 = vmax.f32 %v670, 0.0
        %v824 = vmax.f32 %v672, 0.0
        %v825 = vmax.f32 %v674, 0.0
        %v826 = vmax.f32 %v676, 0.0
        %v827 = vmax.f32 %v678, 0.0
        %v828 = vmax.f32 %v680, 0.0
        %v829 = vmax.f32 %v682, 0.0
        %v830 = vmax.f32 %v684, 0.0
        %v831 = vmax.f32 %v686, 0.0
        %v832 = vmax.f32 %v688, 0.0
        %v833 = vmax.f32 %v690, 0.0
        %v834 = vmax.f32 %v692, 0.0
        %v835 = vmax.f32 %v694, 0.0
        %v836 = vmax.f32 %v696, 0.0
        %v837 = vmax.f32 %v698, 0.0
        %v838 = vmax.f32 %v700, 0.0
        %v839 = vmax.f32 %v702, 0.0
        %v840 = vmax.f32 %v704, 0.0
        %v841 = vmax.f32 %v706, 0.0
        %v842 = vmax.f32 %v708, 0.0
        %v843 = vmax.f32 %v710, 0.0
        %v844 = vmax.f32 %v712, 0.0
        %v845 = vmax.f32 %v714, 0.0
        %v846 = vmax.f32 %v716, 0.0
        %v847 = vmax.f32 %v718, 0.0
        %v848 = vmax.f32 %v720, 0.0
        %v977 = vlaneseq
        %v978 = vand.u32 %v977, 127
        %v979 = vlaneseq
        %v980 = vshrl.u32 %v979, 7
        %v981 = vsub.s32 %v978, %v980
        %v982 = vrot.slane %v721, %v981
        %v983 = vadd.s32 %v978, 4294967288
        %v984 = vlaneseq
        %v985 = vshrl.u32 %v984, 7
        %v986 = vsub.s32 %v983, %v985
        %v987 = vrot.slane %v722, %v986
        %vm988 = vcmask 130112
        %v989 = vsel %vm988, %v987, %v982
        %v990 = vadd.s32 %v978, 4294967280
        %v991 = vlaneseq
        %v992 = vshrl.u32 %v991, 7
        %v993 = vsub.s32 %v990, %v992
        %v994 = vrot.slane %v723, %v993
        %vm995 = vcmask 195712
        %v996 = vsel %vm995, %v994, %v989
        %v997 = vadd.s32 %v978, 4294967272
        %v998 = vlaneseq
        %v999 = vshrl.u32 %v998, 7
        %v1000 = vsub.s32 %v997, %v999
        %v1001 = vrot.slane %v724, %v1000
        %vm1002 = vcmask 261312
        %v1003 = vsel %vm1002, %v1001, %v996
        %v1004 = vadd.s32 %v978, 4294967264
        %v1005 = vlaneseq
        %v1006 = vshrl.u32 %v1005, 7
        %v1007 = vsub.s32 %v1004, %v1006
        %v1008 = vrot.slane %v725, %v1007
        %vm1009 = vcmask 326912
        %v1010 = vsel %vm1009, %v1008, %v1003
        %v1011 = vadd.s32 %v978, 4294967256
        %v1012 = vlaneseq
        %v1013 = vshrl.u32 %v1012, 7
        %v1014 = vsub.s32 %v1011, %v1013
        %v1015 = vrot.slane %v726, %v1014
        %vm1016 = vcmask 392512
        %v1017 = vsel %vm1016, %v1015, %v1010
        %v1018 = vadd.s32 %v978, 4294967248
        %v1019 = vlaneseq
        %v1020 = vshrl.u32 %v1019, 7
        %v1021 = vsub.s32 %v1018, %v1020
        %v1022 = vrot.slane %v727, %v1021
        %vm1023 = vcmask 458112
        %v1024 = vsel %vm1023, %v1022, %v1017
        %v1025 = vadd.s32 %v978, 4294967240
        %v1026 = vlaneseq
        %v1027 = vshrl.u32 %v1026, 7
        %v1028 = vsub.s32 %v1025, %v1027
        %v1029 = vrot.slane %v728, %v1028
        %vm1030 = vcmask 523712
        %v1031 = vsel %vm1030, %v1029, %v1024
        %v1032 = vadd.s32 %v978, 4294967232
        %v1033 = vlaneseq
        %v1034 = vshrl.u32 %v1033, 7
        %v1035 = vsub.s32 %v1032, %v1034
        %v1036 = vrot.slane %v729, %v1035
        %vm1037 = vcmask 589312
        %v1038 = vsel %vm1037, %v1036, %v1031
        %v1039 = vadd.s32 %v978, 4294967224
        %v1040 = vlaneseq
        %v1041 = vshrl.u32 %v1040, 7
        %v1042 = vsub.s32 %v1039, %v1041
        %v1043 = vrot.slane %v730, %v1042
        %vm1044 = vcmask 654912
        %v1045 = vsel %vm1044, %v1043, %v1038
        %v1046 = vadd.s32 %v978, 4294967216
        %v1047 = vlaneseq
        %v1048 = vshrl.u32 %v1047, 7
        %v1049 = vsub.s32 %v1046, %v1048
        %v1050 = vrot.slane %v731, %v1049
        %vm1051 = vcmask 720512
        %v1052 = vsel %vm1051, %v1050, %v1045
        %v1053 = vadd.s32 %v978, 4294967208
        %v1054 = vlaneseq
        %v1055 = vshrl.u32 %v1054, 7
        %v1056 = vsub.s32 %v1053, %v1055
        %v1057 = vrot.slane %v732, %v1056
        %vm1058 = vcmask 786112
        %v1059 = vsel %vm1058, %v1057, %v1052
        %v1060 = vadd.s32 %v978, 4294967200
        %v1061 = vlaneseq
        %v1062 = vshrl.u32 %v1061, 7
        %v1063 = vsub.s32 %v1060, %v1062
        %v1064 = vrot.slane %v733, %v1063
        %vm1065 = vcmask 851712
        %v1066 = vsel %vm1065, %v1064, %v1059
        %v1067 = vadd.s32 %v978, 4294967192
        %v1068 = vlaneseq
        %v1069 = vshrl.u32 %v1068, 7
        %v1070 = vsub.s32 %v1067, %v1069
        %v1071 = vrot.slane %v734, %v1070
        %vm1072 = vcmask 917312
        %v1073 = vsel %vm1072, %v1071, %v1066
        %v1074 = vadd.s32 %v978, 4294967184
        %v1075 = vlaneseq
        %v1076 = vshrl.u32 %v1075, 7
        %v1077 = vsub.s32 %v1074, %v1076
        %v1078 = vrot.slane %v735, %v1077
        %vm1079 = vcmask 982912
        %v1080 = vsel %vm1079, %v1078, %v1073
        %v1081 = vadd.s32 %v978, 4294967176
        %v1082 = vlaneseq
        %v1083 = vshrl.u32 %v1082, 7
        %v1084 = vsub.s32 %v1081, %v1083
        %v1085 = vrot.slane %v736, %v1084
        %vm1086 = vcmask 1048512
        %v1087 = vsel %vm1086, %v1085, %v1080
        %v1088 = vlaneseq
        %v1089 = vshrl.u32 %v1088, 7
        %v1090 = vsub.s32 %v978, %v1089
        %v1091 = vrot.slane %v737, %v1090
        %v1092 = vlaneseq
        %v1093 = vshrl.u32 %v1092, 7
        %v1094 = vsub.s32 %v983, %v1093
        %v1095 = vrot.slane %v738, %v1094
        %v1096 = vsel %vm988, %v1095, %v1091
        %v1097 = vlaneseq
        %v1098 = vshrl.u32 %v1097, 7
        %v1099 = vsub.s32 %v990, %v1098
        %v1100 = vrot.slane %v739, %v1099
        %v1101 = vsel %vm995, %v1100, %v1096
        %v1102 = vlaneseq
        %v1103 = vshrl.u32 %v1102, 7
        %v1104 = vsub.s32 %v997, %v1103
        %v1105 = vrot.slane %v740, %v1104
        %v1106 = vsel %vm1002, %v1105, %v1101
        %v1107 = vlaneseq
        %v1108 = vshrl.u32 %v1107, 7
        %v1109 = vsub.s32 %v1004, %v1108
        %v1110 = vrot.slane %v741, %v1109
        %v1111 = vsel %vm1009, %v1110, %v1106
        %v1112 = vlaneseq
        %v1113 = vshrl.u32 %v1112, 7
        %v1114 = vsub.s32 %v1011, %v1113
        %v1115 = vrot.slane %v742, %v1114
        %v1116 = vsel %vm1016, %v1115, %v1111
        %v1117 = vlaneseq
        %v1118 = vshrl.u32 %v1117, 7
        %v1119 = vsub.s32 %v1018, %v1118
        %v1120 = vrot.slane %v743, %v1119
        %v1121 = vsel %vm1023, %v1120, %v1116
        %v1122 = vlaneseq
        %v1123 = vshrl.u32 %v1122, 7
        %v1124 = vsub.s32 %v1025, %v1123
        %v1125 = vrot.slane %v744, %v1124
        %v1126 = vsel %vm1030, %v1125, %v1121
        %v1127 = vlaneseq
        %v1128 = vshrl.u32 %v1127, 7
        %v1129 = vsub.s32 %v1032, %v1128
        %v1130 = vrot.slane %v745, %v1129
        %v1131 = vsel %vm1037, %v1130, %v1126
        %v1132 = vlaneseq
        %v1133 = vshrl.u32 %v1132, 7
        %v1134 = vsub.s32 %v1039, %v1133
        %v1135 = vrot.slane %v746, %v1134
        %v1136 = vsel %vm1044, %v1135, %v1131
        %v1137 = vlaneseq
        %v1138 = vshrl.u32 %v1137, 7
        %v1139 = vsub.s32 %v1046, %v1138
        %v1140 = vrot.slane %v747, %v1139
        %v1141 = vsel %vm1051, %v1140, %v1136
        %v1142 = vlaneseq
        %v1143 = vshrl.u32 %v1142, 7
        %v1144 = vsub.s32 %v1053, %v1143
        %v1145 = vrot.slane %v748, %v1144
        %v1146 = vsel %vm1058, %v1145, %v1141
        %v1147 = vlaneseq
        %v1148 = vshrl.u32 %v1147, 7
        %v1149 = vsub.s32 %v1060, %v1148
        %v1150 = vrot.slane %v749, %v1149
        %v1151 = vsel %vm1065, %v1150, %v1146
        %v1152 = vlaneseq
        %v1153 = vshrl.u32 %v1152, 7
        %v1154 = vsub.s32 %v1067, %v1153
        %v1155 = vrot.slane %v750, %v1154
        %v1156 = vsel %vm1072, %v1155, %v1151
        %v1157 = vlaneseq
        %v1158 = vshrl.u32 %v1157, 7
        %v1159 = vsub.s32 %v1074, %v1158
        %v1160 = vrot.slane %v751, %v1159
        %v1161 = vsel %vm1079, %v1160, %v1156
        %v1162 = vlaneseq
        %v1163 = vshrl.u32 %v1162, 7
        %v1164 = vsub.s32 %v1081, %v1163
        %v1165 = vrot.slane %v752, %v1164
        %v1166 = vsel %vm1086, %v1165, %v1161
        %v1167 = vlaneseq
        %v1168 = vshrl.u32 %v1167, 7
        %v1169 = vsub.s32 %v978, %v1168
        %v1170 = vrot.slane %v753, %v1169
        %v1171 = vlaneseq
        %v1172 = vshrl.u32 %v1171, 7
        %v1173 = vsub.s32 %v983, %v1172
        %v1174 = vrot.slane %v754, %v1173
        %v1175 = vsel %vm988, %v1174, %v1170
        %v1176 = vlaneseq
        %v1177 = vshrl.u32 %v1176, 7
        %v1178 = vsub.s32 %v990, %v1177
        %v1179 = vrot.slane %v755, %v1178
        %v1180 = vsel %vm995, %v1179, %v1175
        %v1181 = vlaneseq
        %v1182 = vshrl.u32 %v1181, 7
        %v1183 = vsub.s32 %v997, %v1182
        %v1184 = vrot.slane %v756, %v1183
        %v1185 = vsel %vm1002, %v1184, %v1180
        %v1186 = vlaneseq
        %v1187 = vshrl.u32 %v1186, 7
        %v1188 = vsub.s32 %v1004, %v1187
        %v1189 = vrot.slane %v757, %v1188
        %v1190 = vsel %vm1009, %v1189, %v1185
        %v1191 = vlaneseq
        %v1192 = vshrl.u32 %v1191, 7
        %v1193 = vsub.s32 %v1011, %v1192
        %v1194 = vrot.slane %v758, %v1193
        %v1195 = vsel %vm1016, %v1194, %v1190
        %v1196 = vlaneseq
        %v1197 = vshrl.u32 %v1196, 7
        %v1198 = vsub.s32 %v1018, %v1197
        %v1199 = vrot.slane %v759, %v1198
        %v1200 = vsel %vm1023, %v1199, %v1195
        %v1201 = vlaneseq
        %v1202 = vshrl.u32 %v1201, 7
        %v1203 = vsub.s32 %v1025, %v1202
        %v1204 = vrot.slane %v760, %v1203
        %v1205 = vsel %vm1030, %v1204, %v1200
        %v1206 = vlaneseq
        %v1207 = vshrl.u32 %v1206, 7
        %v1208 = vsub.s32 %v1032, %v1207
        %v1209 = vrot.slane %v761, %v1208
        %v1210 = vsel %vm1037, %v1209, %v1205
        %v1211 = vlaneseq
        %v1212 = vshrl.u32 %v1211, 7
        %v1213 = vsub.s32 %v1039, %v1212
        %v1214 = vrot.slane %v762, %v1213
        %v1215 = vsel %vm1044, %v1214, %v1210
        %v1216 = vlaneseq
        %v1217 = vshrl.u32 %v1216, 7
        %v1218 = vsub.s32 %v1046, %v1217
        %v1219 = vrot.slane %v763, %v1218
        %v1220 = vsel %vm1051, %v1219, %v1215
        %v1221 = vlaneseq
        %v1222 = vshrl.u32 %v1221, 7
        %v1223 = vsub.s32 %v1053, %v1222
        %v1224 = vrot.slane %v764, %v1223
        %v1225 = vsel %vm1058, %v1224, %v1220
        %v1226 = vlaneseq
        %v1227 = vshrl.u32 %v1226, 7
        %v1228 = vsub.s32 %v1060, %v1227
        %v1229 = vrot.slane %v765, %v1228
        %v1230 = vsel %vm1065, %v1229, %v1225
        %v1231 = vlaneseq
        %v1232 = vshrl.u32 %v1231, 7
        %v1233 = vsub.s32 %v1067, %v1232
        %v1234 = vrot.slane %v766, %v1233
        %v1235 = vsel %vm1072, %v1234, %v1230
        %v1236 = vlaneseq
        %v1237 = vshrl.u32 %v1236, 7
        %v1238 = vsub.s32 %v1074, %v1237
        %v1239 = vrot.slane %v767, %v1238
        %v1240 = vsel %vm1079, %v1239, %v1235
        %v1241 = vlaneseq
        %v1242 = vshrl.u32 %v1241, 7
        %v1243 = vsub.s32 %v1081, %v1242
        %v1244 = vrot.slane %v768, %v1243
        %v1245 = vsel %vm1086, %v1244, %v1240
        %v1246 = vlaneseq
        %v1247 = vshrl.u32 %v1246, 7
        %v1248 = vsub.s32 %v978, %v1247
        %v1249 = vrot.slane %v769, %v1248
        %v1250 = vlaneseq
        %v1251 = vshrl.u32 %v1250, 7
        %v1252 = vsub.s32 %v983, %v1251
        %v1253 = vrot.slane %v770, %v1252
        %v1254 = vsel %vm988, %v1253, %v1249
        %v1255 = vlaneseq
        %v1256 = vshrl.u32 %v1255, 7
        %v1257 = vsub.s32 %v990, %v1256
        %v1258 = vrot.slane %v771, %v1257
        %v1259 = vsel %vm995, %v1258, %v1254
        %v1260 = vlaneseq
        %v1261 = vshrl.u32 %v1260, 7
        %v1262 = vsub.s32 %v997, %v1261
        %v1263 = vrot.slane %v772, %v1262
        %v1264 = vsel %vm1002, %v1263, %v1259
        %v1265 = vlaneseq
        %v1266 = vshrl.u32 %v1265, 7
        %v1267 = vsub.s32 %v1004, %v1266
        %v1268 = vrot.slane %v773, %v1267
        %v1269 = vsel %vm1009, %v1268, %v1264
        %v1270 = vlaneseq
        %v1271 = vshrl.u32 %v1270, 7
        %v1272 = vsub.s32 %v1011, %v1271
        %v1273 = vrot.slane %v774, %v1272
        %v1274 = vsel %vm1016, %v1273, %v1269
        %v1275 = vlaneseq
        %v1276 = vshrl.u32 %v1275, 7
        %v1277 = vsub.s32 %v1018, %v1276
        %v1278 = vrot.slane %v775, %v1277
        %v1279 = vsel %vm1023, %v1278, %v1274
        %v1280 = vlaneseq
        %v1281 = vshrl.u32 %v1280, 7
        %v1282 = vsub.s32 %v1025, %v1281
        %v1283 = vrot.slane %v776, %v1282
        %v1284 = vsel %vm1030, %v1283, %v1279
        %v1285 = vlaneseq
        %v1286 = vshrl.u32 %v1285, 7
        %v1287 = vsub.s32 %v1032, %v1286
        %v1288 = vrot.slane %v777, %v1287
        %v1289 = vsel %vm1037, %v1288, %v1284
        %v1290 = vlaneseq
        %v1291 = vshrl.u32 %v1290, 7
        %v1292 = vsub.s32 %v1039, %v1291
        %v1293 = vrot.slane %v778, %v1292
        %v1294 = vsel %vm1044, %v1293, %v1289
        %v1295 = vlaneseq
        %v1296 = vshrl.u32 %v1295, 7
        %v1297 = vsub.s32 %v1046, %v1296
        %v1298 = vrot.slane %v779, %v1297
        %v1299 = vsel %vm1051, %v1298, %v1294
        %v1300 = vlaneseq
        %v1301 = vshrl.u32 %v1300, 7
        %v1302 = vsub.s32 %v1053, %v1301
        %v1303 = vrot.slane %v780, %v1302
        %v1304 = vsel %vm1058, %v1303, %v1299
        %v1305 = vlaneseq
        %v1306 = vshrl.u32 %v1305, 7
        %v1307 = vsub.s32 %v1060, %v1306
        %v1308 = vrot.slane %v781, %v1307
        %v1309 = vsel %vm1065, %v1308, %v1304
        %v1310 = vlaneseq
        %v1311 = vshrl.u32 %v1310, 7
        %v1312 = vsub.s32 %v1067, %v1311
        %v1313 = vrot.slane %v782, %v1312
        %v1314 = vsel %vm1072, %v1313, %v1309
        %v1315 = vlaneseq
        %v1316 = vshrl.u32 %v1315, 7
        %v1317 = vsub.s32 %v1074, %v1316
        %v1318 = vrot.slane %v783, %v1317
        %v1319 = vsel %vm1079, %v1318, %v1314
        %v1320 = vlaneseq
        %v1321 = vshrl.u32 %v1320, 7
        %v1322 = vsub.s32 %v1081, %v1321
        %v1323 = vrot.slane %v784, %v1322
        %v1324 = vsel %vm1086, %v1323, %v1319
        %v1325 = vlaneseq
        %v1326 = vshrl.u32 %v1325, 7
        %v1327 = vsub.s32 %v978, %v1326
        %v1328 = vrot.slane %v785, %v1327
        %v1329 = vlaneseq
        %v1330 = vshrl.u32 %v1329, 7
        %v1331 = vsub.s32 %v983, %v1330
        %v1332 = vrot.slane %v786, %v1331
        %v1333 = vsel %vm988, %v1332, %v1328
        %v1334 = vlaneseq
        %v1335 = vshrl.u32 %v1334, 7
        %v1336 = vsub.s32 %v990, %v1335
        %v1337 = vrot.slane %v787, %v1336
        %v1338 = vsel %vm995, %v1337, %v1333
        %v1339 = vlaneseq
        %v1340 = vshrl.u32 %v1339, 7
        %v1341 = vsub.s32 %v997, %v1340
        %v1342 = vrot.slane %v788, %v1341
        %v1343 = vsel %vm1002, %v1342, %v1338
        %v1344 = vlaneseq
        %v1345 = vshrl.u32 %v1344, 7
        %v1346 = vsub.s32 %v1004, %v1345
        %v1347 = vrot.slane %v789, %v1346
        %v1348 = vsel %vm1009, %v1347, %v1343
        %v1349 = vlaneseq
        %v1350 = vshrl.u32 %v1349, 7
        %v1351 = vsub.s32 %v1011, %v1350
        %v1352 = vrot.slane %v790, %v1351
        %v1353 = vsel %vm1016, %v1352, %v1348
        %v1354 = vlaneseq
        %v1355 = vshrl.u32 %v1354, 7
        %v1356 = vsub.s32 %v1018, %v1355
        %v1357 = vrot.slane %v791, %v1356
        %v1358 = vsel %vm1023, %v1357, %v1353
        %v1359 = vlaneseq
        %v1360 = vshrl.u32 %v1359, 7
        %v1361 = vsub.s32 %v1025, %v1360
        %v1362 = vrot.slane %v792, %v1361
        %v1363 = vsel %vm1030, %v1362, %v1358
        %v1364 = vlaneseq
        %v1365 = vshrl.u32 %v1364, 7
        %v1366 = vsub.s32 %v1032, %v1365
        %v1367 = vrot.slane %v793, %v1366
        %v1368 = vsel %vm1037, %v1367, %v1363
        %v1369 = vlaneseq
        %v1370 = vshrl.u32 %v1369, 7
        %v1371 = vsub.s32 %v1039, %v1370
        %v1372 = vrot.slane %v794, %v1371
        %v1373 = vsel %vm1044, %v1372, %v1368
        %v1374 = vlaneseq
        %v1375 = vshrl.u32 %v1374, 7
        %v1376 = vsub.s32 %v1046, %v1375
        %v1377 = vrot.slane %v795, %v1376
        %v1378 = vsel %vm1051, %v1377, %v1373
        %v1379 = vlaneseq
        %v1380 = vshrl.u32 %v1379, 7
        %v1381 = vsub.s32 %v1053, %v1380
        %v1382 = vrot.slane %v796, %v1381
        %v1383 = vsel %vm1058, %v1382, %v1378
        %v1384 = vlaneseq
        %v1385 = vshrl.u32 %v1384, 7
        %v1386 = vsub.s32 %v1060, %v1385
        %v1387 = vrot.slane %v797, %v1386
        %v1388 = vsel %vm1065, %v1387, %v1383
        %v1389 = vlaneseq
        %v1390 = vshrl.u32 %v1389, 7
        %v1391 = vsub.s32 %v1067, %v1390
        %v1392 = vrot.slane %v798, %v1391
        %v1393 = vsel %vm1072, %v1392, %v1388
        %v1394 = vlaneseq
        %v1395 = vshrl.u32 %v1394, 7
        %v1396 = vsub.s32 %v1074, %v1395
        %v1397 = vrot.slane %v799, %v1396
        %v1398 = vsel %vm1079, %v1397, %v1393
        %v1399 = vlaneseq
        %v1400 = vshrl.u32 %v1399, 7
        %v1401 = vsub.s32 %v1081, %v1400
        %v1402 = vrot.slane %v800, %v1401
        %v1403 = vsel %vm1086, %v1402, %v1398
        %v1404 = vlaneseq
        %v1405 = vshrl.u32 %v1404, 7
        %v1406 = vsub.s32 %v978, %v1405
        %v1407 = vrot.slane %v801, %v1406
        %v1408 = vlaneseq
        %v1409 = vshrl.u32 %v1408, 7
        %v1410 = vsub.s32 %v983, %v1409
        %v1411 = vrot.slane %v802, %v1410
        %v1412 = vsel %vm988, %v1411, %v1407
        %v1413 = vlaneseq
        %v1414 = vshrl.u32 %v1413, 7
        %v1415 = vsub.s32 %v990, %v1414
        %v1416 = vrot.slane %v803, %v1415
        %v1417 = vsel %vm995, %v1416, %v1412
        %v1418 = vlaneseq
        %v1419 = vshrl.u32 %v1418, 7
        %v1420 = vsub.s32 %v997, %v1419
        %v1421 = vrot.slane %v804, %v1420
        %v1422 = vsel %vm1002, %v1421, %v1417
        %v1423 = vlaneseq
        %v1424 = vshrl.u32 %v1423, 7
        %v1425 = vsub.s32 %v1004, %v1424
        %v1426 = vrot.slane %v805, %v1425
        %v1427 = vsel %vm1009, %v1426, %v1422
        %v1428 = vlaneseq
        %v1429 = vshrl.u32 %v1428, 7
        %v1430 = vsub.s32 %v1011, %v1429
        %v1431 = vrot.slane %v806, %v1430
        %v1432 = vsel %vm1016, %v1431, %v1427
        %v1433 = vlaneseq
        %v1434 = vshrl.u32 %v1433, 7
        %v1435 = vsub.s32 %v1018, %v1434
        %v1436 = vrot.slane %v807, %v1435
        %v1437 = vsel %vm1023, %v1436, %v1432
        %v1438 = vlaneseq
        %v1439 = vshrl.u32 %v1438, 7
        %v1440 = vsub.s32 %v1025, %v1439
        %v1441 = vrot.slane %v808, %v1440
        %v1442 = vsel %vm1030, %v1441, %v1437
        %v1443 = vlaneseq
        %v1444 = vshrl.u32 %v1443, 7
        %v1445 = vsub.s32 %v1032, %v1444
        %v1446 = vrot.slane %v809, %v1445
        %v1447 = vsel %vm1037, %v1446, %v1442
        %v1448 = vlaneseq
        %v1449 = vshrl.u32 %v1448, 7
        %v1450 = vsub.s32 %v1039, %v1449
        %v1451 = vrot.slane %v810, %v1450
        %v1452 = vsel %vm1044, %v1451, %v1447
        %v1453 = vlaneseq
        %v1454 = vshrl.u32 %v1453, 7
        %v1455 = vsub.s32 %v1046, %v1454
        %v1456 = vrot.slane %v811, %v1455
        %v1457 = vsel %vm1051, %v1456, %v1452
        %v1458 = vlaneseq
        %v1459 = vshrl.u32 %v1458, 7
        %v1460 = vsub.s32 %v1053, %v1459
        %v1461 = vrot.slane %v812, %v1460
        %v1462 = vsel %vm1058, %v1461, %v1457
        %v1463 = vlaneseq
        %v1464 = vshrl.u32 %v1463, 7
        %v1465 = vsub.s32 %v1060, %v1464
        %v1466 = vrot.slane %v813, %v1465
        %v1467 = vsel %vm1065, %v1466, %v1462
        %v1468 = vlaneseq
        %v1469 = vshrl.u32 %v1468, 7
        %v1470 = vsub.s32 %v1067, %v1469
        %v1471 = vrot.slane %v814, %v1470
        %v1472 = vsel %vm1072, %v1471, %v1467
        %v1473 = vlaneseq
        %v1474 = vshrl.u32 %v1473, 7
        %v1475 = vsub.s32 %v1074, %v1474
        %v1476 = vrot.slane %v815, %v1475
        %v1477 = vsel %vm1079, %v1476, %v1472
        %v1478 = vlaneseq
        %v1479 = vshrl.u32 %v1478, 7
        %v1480 = vsub.s32 %v1081, %v1479
        %v1481 = vrot.slane %v816, %v1480
        %v1482 = vsel %vm1086, %v1481, %v1477
        %v1483 = vlaneseq
        %v1484 = vshrl.u32 %v1483, 7
        %v1485 = vsub.s32 %v978, %v1484
        %v1486 = vrot.slane %v817, %v1485
        %v1487 = vlaneseq
        %v1488 = vshrl.u32 %v1487, 7
        %v1489 = vsub.s32 %v983, %v1488
        %v1490 = vrot.slane %v818, %v1489
        %v1491 = vsel %vm988, %v1490, %v1486
        %v1492 = vlaneseq
        %v1493 = vshrl.u32 %v1492, 7
        %v1494 = vsub.s32 %v990, %v1493
        %v1495 = vrot.slane %v819, %v1494
        %v1496 = vsel %vm995, %v1495, %v1491
        %v1497 = vlaneseq
        %v1498 = vshrl.u32 %v1497, 7
        %v1499 = vsub.s32 %v997, %v1498
        %v1500 = vrot.slane %v820, %v1499
        %v1501 = vsel %vm1002, %v1500, %v1496
        %v1502 = vlaneseq
        %v1503 = vshrl.u32 %v1502, 7
        %v1504 = vsub.s32 %v1004, %v1503
        %v1505 = vrot.slane %v821, %v1504
        %v1506 = vsel %vm1009, %v1505, %v1501
        %v1507 = vlaneseq
        %v1508 = vshrl.u32 %v1507, 7
        %v1509 = vsub.s32 %v1011, %v1508
        %v1510 = vrot.slane %v822, %v1509
        %v1511 = vsel %vm1016, %v1510, %v1506
        %v1512 = vlaneseq
        %v1513 = vshrl.u32 %v1512, 7
        %v1514 = vsub.s32 %v1018, %v1513
        %v1515 = vrot.slane %v823, %v1514
        %v1516 = vsel %vm1023, %v1515, %v1511
        %v1517 = vlaneseq
        %v1518 = vshrl.u32 %v1517, 7
        %v1519 = vsub.s32 %v1025, %v1518
        %v1520 = vrot.slane %v824, %v1519
        %v1521 = vsel %vm1030, %v1520, %v1516
        %v1522 = vlaneseq
        %v1523 = vshrl.u32 %v1522, 7
        %v1524 = vsub.s32 %v1032, %v1523
        %v1525 = vrot.slane %v825, %v1524
        %v1526 = vsel %vm1037, %v1525, %v1521
        %v1527 = vlaneseq
        %v1528 = vshrl.u32 %v1527, 7
        %v1529 = vsub.s32 %v1039, %v1528
        %v1530 = vrot.slane %v826, %v1529
        %v1531 = vsel %vm1044, %v1530, %v1526
        %v1532 = vlaneseq
        %v1533 = vshrl.u32 %v1532, 7
        %v1534 = vsub.s32 %v1046, %v1533
        %v1535 = vrot.slane %v827, %v1534
        %v1536 = vsel %vm1051, %v1535, %v1531
        %v1537 = vlaneseq
        %v1538 = vshrl.u32 %v1537, 7
        %v1539 = vsub.s32 %v1053, %v1538
        %v1540 = vrot.slane %v828, %v1539
        %v1541 = vsel %vm1058, %v1540, %v1536
        %v1542 = vlaneseq
        %v1543 = vshrl.u32 %v1542, 7
        %v1544 = vsub.s32 %v1060, %v1543
        %v1545 = vrot.slane %v829, %v1544
        %v1546 = vsel %vm1065, %v1545, %v1541
        %v1547 = vlaneseq
        %v1548 = vshrl.u32 %v1547, 7
        %v1549 = vsub.s32 %v1067, %v1548
        %v1550 = vrot.slane %v830, %v1549
        %v1551 = vsel %vm1072, %v1550, %v1546
        %v1552 = vlaneseq
        %v1553 = vshrl.u32 %v1552, 7
        %v1554 = vsub.s32 %v1074, %v1553
        %v1555 = vrot.slane %v831, %v1554
        %v1556 = vsel %vm1079, %v1555, %v1551
        %v1557 = vlaneseq
        %v1558 = vshrl.u32 %v1557, 7
        %v1559 = vsub.s32 %v1081, %v1558
        %v1560 = vrot.slane %v832, %v1559
        %v1561 = vsel %vm1086, %v1560, %v1556
        %v1562 = vlaneseq
        %v1563 = vshrl.u32 %v1562, 7
        %v1564 = vsub.s32 %v978, %v1563
        %v1565 = vrot.slane %v833, %v1564
        %v1566 = vlaneseq
        %v1567 = vshrl.u32 %v1566, 7
        %v1568 = vsub.s32 %v983, %v1567
        %v1569 = vrot.slane %v834, %v1568
        %v1570 = vsel %vm988, %v1569, %v1565
        %v1571 = vlaneseq
        %v1572 = vshrl.u32 %v1571, 7
        %v1573 = vsub.s32 %v990, %v1572
        %v1574 = vrot.slane %v835, %v1573
        %v1575 = vsel %vm995, %v1574, %v1570
        %v1576 = vlaneseq
        %v1577 = vshrl.u32 %v1576, 7
        %v1578 = vsub.s32 %v997, %v1577
        %v1579 = vrot.slane %v836, %v1578
        %v1580 = vsel %vm1002, %v1579, %v1575
        %v1581 = vlaneseq
        %v1582 = vshrl.u32 %v1581, 7
        %v1583 = vsub.s32 %v1004, %v1582
        %v1584 = vrot.slane %v837, %v1583
        %v1585 = vsel %vm1009, %v1584, %v1580
        %v1586 = vlaneseq
        %v1587 = vshrl.u32 %v1586, 7
        %v1588 = vsub.s32 %v1011, %v1587
        %v1589 = vrot.slane %v838, %v1588
        %v1590 = vsel %vm1016, %v1589, %v1585
        %v1591 = vlaneseq
        %v1592 = vshrl.u32 %v1591, 7
        %v1593 = vsub.s32 %v1018, %v1592
        %v1594 = vrot.slane %v839, %v1593
        %v1595 = vsel %vm1023, %v1594, %v1590
        %v1596 = vlaneseq
        %v1597 = vshrl.u32 %v1596, 7
        %v1598 = vsub.s32 %v1025, %v1597
        %v1599 = vrot.slane %v840, %v1598
        %v1600 = vsel %vm1030, %v1599, %v1595
        %v1601 = vlaneseq
        %v1602 = vshrl.u32 %v1601, 7
        %v1603 = vsub.s32 %v1032, %v1602
        %v1604 = vrot.slane %v841, %v1603
        %v1605 = vsel %vm1037, %v1604, %v1600
        %v1606 = vlaneseq
        %v1607 = vshrl.u32 %v1606, 7
        %v1608 = vsub.s32 %v1039, %v1607
        %v1609 = vrot.slane %v842, %v1608
        %v1610 = vsel %vm1044, %v1609, %v1605
        %v1611 = vlaneseq
        %v1612 = vshrl.u32 %v1611, 7
        %v1613 = vsub.s32 %v1046, %v1612
        %v1614 = vrot.slane %v843, %v1613
        %v1615 = vsel %vm1051, %v1614, %v1610
        %v1616 = vlaneseq
        %v1617 = vshrl.u32 %v1616, 7
        %v1618 = vsub.s32 %v1053, %v1617
        %v1619 = vrot.slane %v844, %v1618
        %v1620 = vsel %vm1058, %v1619, %v1615
        %v1621 = vlaneseq
        %v1622 = vshrl.u32 %v1621, 7
        %v1623 = vsub.s32 %v1060, %v1622
        %v1624 = vrot.slane %v845, %v1623
        %v1625 = vsel %vm1065, %v1624, %v1620
        %v1626 = vlaneseq
        %v1627 = vshrl.u32 %v1626, 7
        %v1628 = vsub.s32 %v1067, %v1627
        %v1629 = vrot.slane %v846, %v1628
        %v1630 = vsel %vm1072, %v1629, %v1625
        %v1631 = vlaneseq
        %v1632 = vshrl.u32 %v1631, 7
        %v1633 = vsub.s32 %v1074, %v1632
        %v1634 = vrot.slane %v847, %v1633
        %v1635 = vsel %vm1079, %v1634, %v1630
        %v1636 = vlaneseq
        %v1637 = vshrl.u32 %v1636, 7
        %v1638 = vsub.s32 %v1081, %v1637
        %v1639 = vrot.slane %v848, %v1638
        %v1640 = vsel %vm1086, %v1639, %v1635
        %vm1641 = vcmask 1041409
        %v1642 = vsel %vm1641, %v1166, %v1087
        %vm1643 = vcmask 1042434
        %v1644 = vsel %vm1643, %v1245, %v1642
        %vm1645 = vcmask 1043459
        %v1646 = vsel %vm1645, %v1324, %v1644
        %vm1647 = vcmask 1044484
        %v1648 = vsel %vm1647, %v1403, %v1646
        %vm1649 = vcmask 1045509
        %v1650 = vsel %vm1649, %v1482, %v1648
        %vm1651 = vcmask 1046534
        %v1652 = vsel %vm1651, %v1561, %v1650
        %vm1653 = vcmask 1047559
        %v1654 = vsel %vm1653, %v1640, %v1652
        %1656 = vmax.xlane.f32.xlu0 %v1654
        %v1657 = vpop.xlane.xlu0 %1656
        %v1659 = vlaneseq
        %v1660 = vshrl.u32 %v1659, 7
        %v1661 = vsub.s32 0, %v1660
        %v1662 = vrot.slane %v1657, %v1661
        %v1663 = vlaneseq
        %v1664 = vshrl.u32 %v1663, 7
        %v1665 = vsub.s32 1, %v1664
        %v1666 = vrot.slane %v1657, %v1665
        %v1667 = vlaneseq
        %v1668 = vshrl.u32 %v1667, 7
        %v1669 = vsub.s32 2, %v1668
        %v1670 = vrot.slane %v1657, %v1669
        %v1671 = vlaneseq
        %v1672 = vshrl.u32 %v1671, 7
        %v1673 = vsub.s32 3, %v1672
        %v1674 = vrot.slane %v1657, %v1673
        %v1675 = vlaneseq
        %v1676 = vshrl.u32 %v1675, 7
        %v1677 = vsub.s32 4, %v1676
        %v1678 = vrot.slane %v1657, %v1677
        %v1679 = vlaneseq
        %v1680 = vshrl.u32 %v1679, 7
        %v1681 = vsub.s32 5, %v1680
        %v1682 = vrot.slane %v1657, %v1681
        %v1683 = vlaneseq
        %v1684 = vshrl.u32 %v1683, 7
        %v1685 = vsub.s32 6, %v1684
        %v1686 = vrot.slane %v1657, %v1685
        %v1687 = vlaneseq
        %v1688 = vshrl.u32 %v1687, 7
        %v1689 = vsub.s32 7, %v1688
        %v1690 = vrot.slane %v1657, %v1689
        %v1699 = vsub.f32 %v721, %v1662
        %v1700 = vsub.f32 %v722, %v1662
        %v1701 = vsub.f32 %v723, %v1662
        %v1702 = vsub.f32 %v724, %v1662
        %v1703 = vsub.f32 %v725, %v1662
        %v1704 = vsub.f32 %v726, %v1662
        %v1705 = vsub.f32 %v727, %v1662
        %v1706 = vsub.f32 %v728, %v1662
        %v1707 = vsub.f32 %v729, %v1662
        %v1708 = vsub.f32 %v730, %v1662
        %v1709 = vsub.f32 %v731, %v1662
        %v1710 = vsub.f32 %v732, %v1662
        %v1711 = vsub.f32 %v733, %v1662
        %v1712 = vsub.f32 %v734, %v1662
        %v1713 = vsub.f32 %v735, %v1662
        %v1714 = vsub.f32 %v736, %v1662
        %v1715 = vsub.f32 %v737, %v1666
        %v1716 = vsub.f32 %v738, %v1666
        %v1717 = vsub.f32 %v739, %v1666
        %v1718 = vsub.f32 %v740, %v1666
        %v1719 = vsub.f32 %v741, %v1666
        %v1720 = vsub.f32 %v742, %v1666
        %v1721 = vsub.f32 %v743, %v1666
        %v1722 = vsub.f32 %v744, %v1666
        %v1723 = vsub.f32 %v745, %v1666
        %v1724 = vsub.f32 %v746, %v1666
        %v1725 = vsub.f32 %v747, %v1666
        %v1726 = vsub.f32 %v748, %v1666
        %v1727 = vsub.f32 %v749, %v1666
        %v1728 = vsub.f32 %v750, %v1666
        %v1729 = vsub.f32 %v751, %v1666
        %v1730 = vsub.f32 %v752, %v1666
        %v1731 = vsub.f32 %v753, %v1670
        %v1732 = vsub.f32 %v754, %v1670
        %v1733 = vsub.f32 %v755, %v1670
        %v1734 = vsub.f32 %v756, %v1670
        %v1735 = vsub.f32 %v757, %v1670
        %v1736 = vsub.f32 %v758, %v1670
        %v1737 = vsub.f32 %v759, %v1670
        %v1738 = vsub.f32 %v760, %v1670
        %v1739 = vsub.f32 %v761, %v1670
        %v1740 = vsub.f32 %v762, %v1670
        %v1741 = vsub.f32 %v763, %v1670
        %v1742 = vsub.f32 %v764, %v1670
        %v1743 = vsub.f32 %v765, %v1670
        %v1744 = vsub.f32 %v766, %v1670
        %v1745 = vsub.f32 %v767, %v1670
        %v1746 = vsub.f32 %v768, %v1670
        %v1747 = vsub.f32 %v769, %v1674
        %v1748 = vsub.f32 %v770, %v1674
        %v1749 = vsub.f32 %v771, %v1674
        %v1750 = vsub.f32 %v772, %v1674
        %v1751 = vsub.f32 %v773, %v1674
        %v1752 = vsub.f32 %v774, %v1674
        %v1753 = vsub.f32 %v775, %v1674
        %v1754 = vsub.f32 %v776, %v1674
        %v1755 = vsub.f32 %v777, %v1674
        %v1756 = vsub.f32 %v778, %v1674
        %v1757 = vsub.f32 %v779, %v1674
        %v1758 = vsub.f32 %v780, %v1674
        %v1759 = vsub.f32 %v781, %v1674
        %v1760 = vsub.f32 %v782, %v1674
        %v1761 = vsub.f32 %v783, %v1674
        %v1762 = vsub.f32 %v784, %v1674
        %v1763 = vsub.f32 %v785, %v1678
        %v1764 = vsub.f32 %v786, %v1678
        %v1765 = vsub.f32 %v787, %v1678
        %v1766 = vsub.f32 %v788, %v1678
        %v1767 = vsub.f32 %v789, %v1678
        %v1768 = vsub.f32 %v790, %v1678
        %v1769 = vsub.f32 %v791, %v1678
        %v1770 = vsub.f32 %v792, %v1678
        %v1771 = vsub.f32 %v793, %v1678
        %v1772 = vsub.f32 %v794, %v1678
        %v1773 = vsub.f32 %v795, %v1678
        %v1774 = vsub.f32 %v796, %v1678
        %v1775 = vsub.f32 %v797, %v1678
        %v1776 = vsub.f32 %v798, %v1678
        %v1777 = vsub.f32 %v799, %v1678
        %v1778 = vsub.f32 %v800, %v1678
        %v1779 = vsub.f32 %v801, %v1682
        %v1780 = vsub.f32 %v802, %v1682
        %v1781 = vsub.f32 %v803, %v1682
        %v1782 = vsub.f32 %v804, %v1682
        %v1783 = vsub.f32 %v805, %v1682
        %v1784 = vsub.f32 %v806, %v1682
        %v1785 = vsub.f32 %v807, %v1682
        %v1786 = vsub.f32 %v808, %v1682
        %v1787 = vsub.f32 %v809, %v1682
        %v1788 = vsub.f32 %v810, %v1682
        %v1789 = vsub.f32 %v811, %v1682
        %v1790 = vsub.f32 %v812, %v1682
        %v1791 = vsub.f32 %v813, %v1682
        %v1792 = vsub.f32 %v814, %v1682
        %v1793 = vsub.f32 %v815, %v1682
        %v1794 = vsub.f32 %v816, %v1682
        %v1795 = vsub.f32 %v817, %v1686
        %v1796 = vsub.f32 %v818, %v1686
        %v1797 = vsub.f32 %v819, %v1686
        %v1798 = vsub.f32 %v820, %v1686
        %v1799 = vsub.f32 %v821, %v1686
        %v1800 = vsub.f32 %v822, %v1686
        %v1801 = vsub.f32 %v823, %v1686
        %v1802 = vsub.f32 %v824, %v1686
        %v1803 = vsub.f32 %v825, %v1686
        %v1804 = vsub.f32 %v826, %v1686
        %v1805 = vsub.f32 %v827, %v1686
        %v1806 = vsub.f32 %v828, %v1686
        %v1807 = vsub.f32 %v829, %v1686
        %v1808 = vsub.f32 %v830, %v1686
        %v1809 = vsub.f32 %v831, %v1686
        %v1810 = vsub.f32 %v832, %v1686
        %v1811 = vsub.f32 %v833, %v1690
        %v1812 = vsub.f32 %v834, %v1690
        %v1813 = vsub.f32 %v835, %v1690
        %v1814 = vsub.f32 %v836, %v1690
        %v1815 = vsub.f32 %v837, %v1690
        %v1816 = vsub.f32 %v838, %v1690
        %v1817 = vsub.f32 %v839, %v1690
        %v1818 = vsub.f32 %v840, %v1690
        %v1819 = vsub.f32 %v841, %v1690
        %v1820 = vsub.f32 %v842, %v1690
        %v1821 = vsub.f32 %v843, %v1690
        %v1822 = vsub.f32 %v844, %v1690
        %v1823 = vsub.f32 %v845, %v1690
        %v1824 = vsub.f32 %v846, %v1690
        %v1825 = vsub.f32 %v847, %v1690
        %v1826 = vsub.f32 %v848, %v1690
        %v1827 = vmul.f32 %v1699, 1.442695
        %v1828 = vpow.pop %v1827
        %v1829 = vmul.f32 %v1700, 1.442695
        %v1830 = vpow.pop %v1829
        %v1831 = vmul.f32 %v1701, 1.442695
        %v1832 = vpow.pop %v1831
        %v1833 = vmul.f32 %v1702, 1.442695
        %v1834 = vpow.pop %v1833
        %v1835 = vmul.f32 %v1703, 1.442695
        %v1836 = vpow.pop %v1835
        %v1837 = vmul.f32 %v1704, 1.442695
        %v1838 = vpow.pop %v1837
        %v1839 = vmul.f32 %v1705, 1.442695
        %v1840 = vpow.pop %v1839
        %v1841 = vmul.f32 %v1706, 1.442695
        %v1842 = vpow.pop %v1841
        %v1843 = vmul.f32 %v1707, 1.442695
        %v1844 = vpow.pop %v1843
        %v1845 = vmul.f32 %v1708, 1.442695
        %v1846 = vpow.pop %v1845
        %v1847 = vmul.f32 %v1709, 1.442695
        %v1848 = vpow.pop %v1847
        %v1849 = vmul.f32 %v1710, 1.442695
        %v1850 = vpow.pop %v1849
        %v1851 = vmul.f32 %v1711, 1.442695
        %v1852 = vpow.pop %v1851
        %v1853 = vmul.f32 %v1712, 1.442695
        %v1854 = vpow.pop %v1853
        %v1855 = vmul.f32 %v1713, 1.442695
        %v1856 = vpow.pop %v1855
        %v1857 = vmul.f32 %v1714, 1.442695
        %v1858 = vpow.pop %v1857
        %v1859 = vmul.f32 %v1715, 1.442695
        %v1860 = vpow.pop %v1859
        %v1861 = vmul.f32 %v1716, 1.442695
        %v1862 = vpow.pop %v1861
        %v1863 = vmul.f32 %v1717, 1.442695
        %v1864 = vpow.pop %v1863
        %v1865 = vmul.f32 %v1718, 1.442695
        %v1866 = vpow.pop %v1865
        %v1867 = vmul.f32 %v1719, 1.442695
        %v1868 = vpow.pop %v1867
        %v1869 = vmul.f32 %v1720, 1.442695
        %v1870 = vpow.pop %v1869
        %v1871 = vmul.f32 %v1721, 1.442695
        %v1872 = vpow.pop %v1871
        %v1873 = vmul.f32 %v1722, 1.442695
        %v1874 = vpow.pop %v1873
        %v1875 = vmul.f32 %v1723, 1.442695
        %v1876 = vpow.pop %v1875
        %v1877 = vmul.f32 %v1724, 1.442695
        %v1878 = vpow.pop %v1877
        %v1879 = vmul.f32 %v1725, 1.442695
        %v1880 = vpow.pop %v1879
        %v1881 = vmul.f32 %v1726, 1.442695
        %v1882 = vpow.pop %v1881
        %v1883 = vmul.f32 %v1727, 1.442695
        %v1884 = vpow.pop %v1883
        %v1885 = vmul.f32 %v1728, 1.442695
        %v1886 = vpow.pop %v1885
        %v1887 = vmul.f32 %v1729, 1.442695
        %v1888 = vpow.pop %v1887
        %v1889 = vmul.f32 %v1730, 1.442695
        %v1890 = vpow.pop %v1889
        %v1891 = vmul.f32 %v1731, 1.442695
        %v1892 = vpow.pop %v1891
        %v1893 = vmul.f32 %v1732, 1.442695
        %v1894 = vpow.pop %v1893
        %v1895 = vmul.f32 %v1733, 1.442695
        %v1896 = vpow.pop %v1895
        %v1897 = vmul.f32 %v1734, 1.442695
        %v1898 = vpow.pop %v1897
        %v1899 = vmul.f32 %v1735, 1.442695
        %v1900 = vpow.pop %v1899
        %v1901 = vmul.f32 %v1736, 1.442695
        %v1902 = vpow.pop %v1901
        %v1903 = vmul.f32 %v1737, 1.442695
        %v1904 = vpow.pop %v1903
        %v1905 = vmul.f32 %v1738, 1.442695
        %v1906 = vpow.pop %v1905
        %v1907 = vmul.f32 %v1739, 1.442695
        %v1908 = vpow.pop %v1907
        %v1909 = vmul.f32 %v1740, 1.442695
        %v1910 = vpow.pop %v1909
        %v1911 = vmul.f32 %v1741, 1.442695
        %v1912 = vpow.pop %v1911
        %v1913 = vmul.f32 %v1742, 1.442695
        %v1914 = vpow.pop %v1913
        %v1915 = vmul.f32 %v1743, 1.442695
        %v1916 = vpow.pop %v1915
        %v1917 = vmul.f32 %v1744, 1.442695
        %v1918 = vpow.pop %v1917
        %v1919 = vmul.f32 %v1745, 1.442695
        %v1920 = vpow.pop %v1919
        %v1921 = vmul.f32 %v1746, 1.442695
        %v1922 = vpow.pop %v1921
        %v1923 = vmul.f32 %v1747, 1.442695
        %v1924 = vpow.pop %v1923
        %v1925 = vmul.f32 %v1748, 1.442695
        %v1926 = vpow.pop %v1925
        %v1927 = vmul.f32 %v1749, 1.442695
        %v1928 = vpow.pop %v1927
        %v1929 = vmul.f32 %v1750, 1.442695
        %v1930 = vpow.pop %v1929
        %v1931 = vmul.f32 %v1751, 1.442695
        %v1932 = vpow.pop %v1931
        %v1933 = vmul.f32 %v1752, 1.442695
        %v1934 = vpow.pop %v1933
        %v1935 = vmul.f32 %v1753, 1.442695
        %v1936 = vpow.pop %v1935
        %v1937 = vmul.f32 %v1754, 1.442695
        %v1938 = vpow.pop %v1937
        %v1939 = vmul.f32 %v1755, 1.442695
        %v1940 = vpow.pop %v1939
        %v1941 = vmul.f32 %v1756, 1.442695
        %v1942 = vpow.pop %v1941
        %v1943 = vmul.f32 %v1757, 1.442695
        %v1944 = vpow.pop %v1943
        %v1945 = vmul.f32 %v1758, 1.442695
        %v1946 = vpow.pop %v1945
        %v1947 = vmul.f32 %v1759, 1.442695
        %v1948 = vpow.pop %v1947
        %v1949 = vmul.f32 %v1760, 1.442695
        %v1950 = vpow.pop %v1949
        %v1951 = vmul.f32 %v1761, 1.442695
        %v1952 = vpow.pop %v1951
        %v1953 = vmul.f32 %v1762, 1.442695
        %v1954 = vpow.pop %v1953
        %v1955 = vmul.f32 %v1763, 1.442695
        %v1956 = vpow.pop %v1955
        %v1957 = vmul.f32 %v1764, 1.442695
        %v1958 = vpow.pop %v1957
        %v1959 = vmul.f32 %v1765, 1.442695
        %v1960 = vpow.pop %v1959
        %v1961 = vmul.f32 %v1766, 1.442695
        %v1962 = vpow.pop %v1961
        %v1963 = vmul.f32 %v1767, 1.442695
        %v1964 = vpow.pop %v1963
        %v1965 = vmul.f32 %v1768, 1.442695
        %v1966 = vpow.pop %v1965
        %v1967 = vmul.f32 %v1769, 1.442695
        %v1968 = vpow.pop %v1967
        %v1969 = vmul.f32 %v1770, 1.442695
        %v1970 = vpow.pop %v1969
        %v1971 = vmul.f32 %v1771, 1.442695
        %v1972 = vpow.pop %v1971
        %v1973 = vmul.f32 %v1772, 1.442695
        %v1974 = vpow.pop %v1973
        %v1975 = vmul.f32 %v1773, 1.442695
        %v1976 = vpow.pop %v1975
        %v1977 = vmul.f32 %v1774, 1.442695
        %v1978 = vpow.pop %v1977
        %v1979 = vmul.f32 %v1775, 1.442695
        %v1980 = vpow.pop %v1979
        %v1981 = vmul.f32 %v1776, 1.442695
        %v1982 = vpow.pop %v1981
        %v1983 = vmul.f32 %v1777, 1.442695
        %v1984 = vpow.pop %v1983
        %v1985 = vmul.f32 %v1778, 1.442695
        %v1986 = vpow.pop %v1985
        %v1987 = vmul.f32 %v1779, 1.442695
        %v1988 = vpow.pop %v1987
        %v1989 = vmul.f32 %v1780, 1.442695
        %v1990 = vpow.pop %v1989
        %v1991 = vmul.f32 %v1781, 1.442695
        %v1992 = vpow.pop %v1991
        %v1993 = vmul.f32 %v1782, 1.442695
        %v1994 = vpow.pop %v1993
        %v1995 = vmul.f32 %v1783, 1.442695
        %v1996 = vpow.pop %v1995
        %v1997 = vmul.f32 %v1784, 1.442695
        %v1998 = vpow.pop %v1997
        %v1999 = vmul.f32 %v1785, 1.442695
        %v2000 = vpow.pop %v1999
        %v2001 = vmul.f32 %v1786, 1.442695
        %v2002 = vpow.pop %v2001
        %v2003 = vmul.f32 %v1787, 1.442695
        %v2004 = vpow.pop %v2003
        %v2005 = vmul.f32 %v1788, 1.442695
        %v2006 = vpow.pop %v2005
        %v2007 = vmul.f32 %v1789, 1.442695
        %v2008 = vpow.pop %v2007
        %v2009 = vmul.f32 %v1790, 1.442695
        %v2010 = vpow.pop %v2009
        %v2011 = vmul.f32 %v1791, 1.442695
        %v2012 = vpow.pop %v2011
        %v2013 = vmul.f32 %v1792, 1.442695
        %v2014 = vpow.pop %v2013
        %v2015 = vmul.f32 %v1793, 1.442695
        %v2016 = vpow.pop %v2015
        %v2017 = vmul.f32 %v1794, 1.442695
        %v2018 = vpow.pop %v2017
        %v2019 = vmul.f32 %v1795, 1.442695
        %v2020 = vpow.pop %v2019
        %v2021 = vmul.f32 %v1796, 1.442695
        %v2022 = vpow.pop %v2021
        %v2023 = vmul.f32 %v1797, 1.442695
        %v2024 = vpow.pop %v2023
        %v2025 = vmul.f32 %v1798, 1.442695
        %v2026 = vpow.pop %v2025
        %v2027 = vmul.f32 %v1799, 1.442695
        %v2028 = vpow.pop %v2027
        %v2029 = vmul.f32 %v1800, 1.442695
        %v2030 = vpow.pop %v2029
        %v2031 = vmul.f32 %v1801, 1.442695
        %v2032 = vpow.pop %v2031
        %v2033 = vmul.f32 %v1802, 1.442695
        %v2034 = vpow.pop %v2033
        %v2035 = vmul.f32 %v1803, 1.442695
        %v2036 = vpow.pop %v2035
        %v2037 = vmul.f32 %v1804, 1.442695
        %v2038 = vpow.pop %v2037
        %v2039 = vmul.f32 %v1805, 1.442695
        %v2040 = vpow.pop %v2039
        %v2041 = vmul.f32 %v1806, 1.442695
        %v2042 = vpow.pop %v2041
        %v2043 = vmul.f32 %v1807, 1.442695
        %v2044 = vpow.pop %v2043
        %v2045 = vmul.f32 %v1808, 1.442695
        %v2046 = vpow.pop %v2045
        %v2047 = vmul.f32 %v1809, 1.442695
        %v2048 = vpow.pop %v2047
        %v2049 = vmul.f32 %v1810, 1.442695
        %v2050 = vpow.pop %v2049
        %v2051 = vmul.f32 %v1811, 1.442695
        %v2052 = vpow.pop %v2051
        %v2053 = vmul.f32 %v1812, 1.442695
        %v2054 = vpow.pop %v2053
        %v2055 = vmul.f32 %v1813, 1.442695
        %v2056 = vpow.pop %v2055
        %v2057 = vmul.f32 %v1814, 1.442695
        %v2058 = vpow.pop %v2057
        %v2059 = vmul.f32 %v1815, 1.442695
        %v2060 = vpow.pop %v2059
        %v2061 = vmul.f32 %v1816, 1.442695
        %v2062 = vpow.pop %v2061
        %v2063 = vmul.f32 %v1817, 1.442695
        %v2064 = vpow.pop %v2063
        %v2065 = vmul.f32 %v1818, 1.442695
        %v2066 = vpow.pop %v2065
        %v2067 = vmul.f32 %v1819, 1.442695
        %v2068 = vpow.pop %v2067
        %v2069 = vmul.f32 %v1820, 1.442695
        %v2070 = vpow.pop %v2069
        %v2071 = vmul.f32 %v1821, 1.442695
        %v2072 = vpow.pop %v2071
        %v2073 = vmul.f32 %v1822, 1.442695
        %v2074 = vpow.pop %v2073
        %v2075 = vmul.f32 %v1823, 1.442695
        %v2076 = vpow.pop %v2075
        %v2077 = vmul.f32 %v1824, 1.442695
        %v2078 = vpow.pop %v2077
        %v2079 = vmul.f32 %v1825, 1.442695
        %v2080 = vpow.pop %v2079
        %v2081 = vmul.f32 %v1826, 1.442695
        %v2082 = vpow.pop %v2081
        %2211 = vset.pattern.permute.xlu0 0
        %2212 = vperm.xlu0 %2211, %v1828
        %v2213 = vpop.permute.xlu0 %2212
        %2214 = vset.pattern.permute.xlu0 0
        %2215 = vperm.xlu0 %2214, %v1830
        %v2216 = vpop.permute.xlu0 %2215
        %2217 = vset.pattern.permute.xlu0 0
        %2218 = vperm.xlu0 %2217, %v1832
        %v2219 = vpop.permute.xlu0 %2218
        %2220 = vset.pattern.permute.xlu0 0
        %2221 = vperm.xlu0 %2220, %v1834
        %v2222 = vpop.permute.xlu0 %2221
        %2223 = vset.pattern.permute.xlu0 0
        %2224 = vperm.xlu0 %2223, %v1836
        %v2225 = vpop.permute.xlu0 %2224
        %2226 = vset.pattern.permute.xlu0 0
        %2227 = vperm.xlu0 %2226, %v1838
        %v2228 = vpop.permute.xlu0 %2227
        %2229 = vset.pattern.permute.xlu0 0
        %2230 = vperm.xlu0 %2229, %v1840
        %v2231 = vpop.permute.xlu0 %2230
        %2232 = vset.pattern.permute.xlu0 0
        %2233 = vperm.xlu0 %2232, %v1842
        %v2234 = vpop.permute.xlu0 %2233
        %2235 = vset.pattern.permute.xlu0 0
        %2236 = vperm.xlu0 %2235, %v1844
        %v2237 = vpop.permute.xlu0 %2236
        %2238 = vset.pattern.permute.xlu0 0
        %2239 = vperm.xlu0 %2238, %v1846
        %v2240 = vpop.permute.xlu0 %2239
        %2241 = vset.pattern.permute.xlu0 0
        %2242 = vperm.xlu0 %2241, %v1848
        %v2243 = vpop.permute.xlu0 %2242
        %2244 = vset.pattern.permute.xlu0 0
        %2245 = vperm.xlu0 %2244, %v1850
        %v2246 = vpop.permute.xlu0 %2245
        %2247 = vset.pattern.permute.xlu0 0
        %2248 = vperm.xlu0 %2247, %v1852
        %v2249 = vpop.permute.xlu0 %2248
        %2250 = vset.pattern.permute.xlu0 0
        %2251 = vperm.xlu0 %2250, %v1854
        %v2252 = vpop.permute.xlu0 %2251
        %2253 = vset.pattern.permute.xlu0 0
        %2254 = vperm.xlu0 %2253, %v1856
        %v2255 = vpop.permute.xlu0 %2254
        %2256 = vset.pattern.permute.xlu0 0
        %2257 = vperm.xlu0 %2256, %v1858
        %v2258 = vpop.permute.xlu0 %2257
        %2259 = vset.pattern.permute.xlu0 0
        %2260 = vperm.xlu0 %2259, %v1860
        %v2261 = vpop.permute.xlu0 %2260
        %2262 = vset.pattern.permute.xlu0 0
        %2263 = vperm.xlu0 %2262, %v1862
        %v2264 = vpop.permute.xlu0 %2263
        %2265 = vset.pattern.permute.xlu0 0
        %2266 = vperm.xlu0 %2265, %v1864
        %v2267 = vpop.permute.xlu0 %2266
        %2268 = vset.pattern.permute.xlu0 0
        %2269 = vperm.xlu0 %2268, %v1866
        %v2270 = vpop.permute.xlu0 %2269
        %2271 = vset.pattern.permute.xlu0 0
        %2272 = vperm.xlu0 %2271, %v1868
        %v2273 = vpop.permute.xlu0 %2272
        %2274 = vset.pattern.permute.xlu0 0
        %2275 = vperm.xlu0 %2274, %v1870
        %v2276 = vpop.permute.xlu0 %2275
        %2277 = vset.pattern.permute.xlu0 0
        %2278 = vperm.xlu0 %2277, %v1872
        %v2279 = vpop.permute.xlu0 %2278
        %2280 = vset.pattern.permute.xlu0 0
        %2281 = vperm.xlu0 %2280, %v1874
        %v2282 = vpop.permute.xlu0 %2281
        %2283 = vset.pattern.permute.xlu0 0
        %2284 = vperm.xlu0 %2283, %v1876
        %v2285 = vpop.permute.xlu0 %2284
        %2286 = vset.pattern.permute.xlu0 0
        %2287 = vperm.xlu0 %2286, %v1878
        %v2288 = vpop.permute.xlu0 %2287
        %2289 = vset.pattern.permute.xlu0 0
        %2290 = vperm.xlu0 %2289, %v1880
        %v2291 = vpop.permute.xlu0 %2290
        %2292 = vset.pattern.permute.xlu0 0
        %2293 = vperm.xlu0 %2292, %v1882
        %v2294 = vpop.permute.xlu0 %2293
        %2295 = vset.pattern.permute.xlu0 0
        %2296 = vperm.xlu0 %2295, %v1884
        %v2297 = vpop.permute.xlu0 %2296
        %2298 = vset.pattern.permute.xlu0 0
        %2299 = vperm.xlu0 %2298, %v1886
        %v2300 = vpop.permute.xlu0 %2299
        %2301 = vset.pattern.permute.xlu0 0
        %2302 = vperm.xlu0 %2301, %v1888
        %v2303 = vpop.permute.xlu0 %2302
        %2304 = vset.pattern.permute.xlu0 0
        %2305 = vperm.xlu0 %2304, %v1890
        %v2306 = vpop.permute.xlu0 %2305
        %2307 = vset.pattern.permute.xlu0 0
        %2308 = vperm.xlu0 %2307, %v1892
        %v2309 = vpop.permute.xlu0 %2308
        %2310 = vset.pattern.permute.xlu0 0
        %2311 = vperm.xlu0 %2310, %v1894
        %v2312 = vpop.permute.xlu0 %2311
        %2313 = vset.pattern.permute.xlu0 0
        %2314 = vperm.xlu0 %2313, %v1896
        %v2315 = vpop.permute.xlu0 %2314
        %2316 = vset.pattern.permute.xlu0 0
        %2317 = vperm.xlu0 %2316, %v1898
        %v2318 = vpop.permute.xlu0 %2317
        %2319 = vset.pattern.permute.xlu0 0
        %2320 = vperm.xlu0 %2319, %v1900
        %v2321 = vpop.permute.xlu0 %2320
        %2322 = vset.pattern.permute.xlu0 0
        %2323 = vperm.xlu0 %2322, %v1902
        %v2324 = vpop.permute.xlu0 %2323
        %2325 = vset.pattern.permute.xlu0 0
        %2326 = vperm.xlu0 %2325, %v1904
        %v2327 = vpop.permute.xlu0 %2326
        %2328 = vset.pattern.permute.xlu0 0
        %2329 = vperm.xlu0 %2328, %v1906
        %v2330 = vpop.permute.xlu0 %2329
        %2331 = vset.pattern.permute.xlu0 0
        %2332 = vperm.xlu0 %2331, %v1908
        %v2333 = vpop.permute.xlu0 %2332
        %2334 = vset.pattern.permute.xlu0 0
        %2335 = vperm.xlu0 %2334, %v1910
        %v2336 = vpop.permute.xlu0 %2335
        %2337 = vset.pattern.permute.xlu0 0
        %2338 = vperm.xlu0 %2337, %v1912
        %v2339 = vpop.permute.xlu0 %2338
        %2340 = vset.pattern.permute.xlu0 0
        %2341 = vperm.xlu0 %2340, %v1914
        %v2342 = vpop.permute.xlu0 %2341
        %2343 = vset.pattern.permute.xlu0 0
        %2344 = vperm.xlu0 %2343, %v1916
        %v2345 = vpop.permute.xlu0 %2344
        %2346 = vset.pattern.permute.xlu0 0
        %2347 = vperm.xlu0 %2346, %v1918
        %v2348 = vpop.permute.xlu0 %2347
        %2349 = vset.pattern.permute.xlu0 0
        %2350 = vperm.xlu0 %2349, %v1920
        %v2351 = vpop.permute.xlu0 %2350
        %2352 = vset.pattern.permute.xlu0 0
        %2353 = vperm.xlu0 %2352, %v1922
        %v2354 = vpop.permute.xlu0 %2353
        %2355 = vset.pattern.permute.xlu0 0
        %2356 = vperm.xlu0 %2355, %v1924
        %v2357 = vpop.permute.xlu0 %2356
        %2358 = vset.pattern.permute.xlu0 0
        %2359 = vperm.xlu0 %2358, %v1926
        %v2360 = vpop.permute.xlu0 %2359
        %2361 = vset.pattern.permute.xlu0 0
        %2362 = vperm.xlu0 %2361, %v1928
        %v2363 = vpop.permute.xlu0 %2362
        %2364 = vset.pattern.permute.xlu0 0
        %2365 = vperm.xlu0 %2364, %v1930
        %v2366 = vpop.permute.xlu0 %2365
        %2367 = vset.pattern.permute.xlu0 0
        %2368 = vperm.xlu0 %2367, %v1932
        %v2369 = vpop.permute.xlu0 %2368
        %2370 = vset.pattern.permute.xlu0 0
        %2371 = vperm.xlu0 %2370, %v1934
        %v2372 = vpop.permute.xlu0 %2371
        %2373 = vset.pattern.permute.xlu0 0
        %2374 = vperm.xlu0 %2373, %v1936
        %v2375 = vpop.permute.xlu0 %2374
        %2376 = vset.pattern.permute.xlu0 0
        %2377 = vperm.xlu0 %2376, %v1938
        %v2378 = vpop.permute.xlu0 %2377
        %2379 = vset.pattern.permute.xlu0 0
        %2380 = vperm.xlu0 %2379, %v1940
        %v2381 = vpop.permute.xlu0 %2380
        %2382 = vset.pattern.permute.xlu0 0
        %2383 = vperm.xlu0 %2382, %v1942
        %v2384 = vpop.permute.xlu0 %2383
        %2385 = vset.pattern.permute.xlu0 0
        %2386 = vperm.xlu0 %2385, %v1944
        %v2387 = vpop.permute.xlu0 %2386
        %2388 = vset.pattern.permute.xlu0 0
        %2389 = vperm.xlu0 %2388, %v1946
        %v2390 = vpop.permute.xlu0 %2389
        %2391 = vset.pattern.permute.xlu0 0
        %2392 = vperm.xlu0 %2391, %v1948
        %v2393 = vpop.permute.xlu0 %2392
        %2394 = vset.pattern.permute.xlu0 0
        %2395 = vperm.xlu0 %2394, %v1950
        %v2396 = vpop.permute.xlu0 %2395
        %2397 = vset.pattern.permute.xlu0 0
        %2398 = vperm.xlu0 %2397, %v1952
        %v2399 = vpop.permute.xlu0 %2398
        %2400 = vset.pattern.permute.xlu0 0
        %2401 = vperm.xlu0 %2400, %v1954
        %v2402 = vpop.permute.xlu0 %2401
        %2403 = vset.pattern.permute.xlu0 0
        %2404 = vperm.xlu0 %2403, %v1956
        %v2405 = vpop.permute.xlu0 %2404
        %2406 = vset.pattern.permute.xlu0 0
        %2407 = vperm.xlu0 %2406, %v1958
        %v2408 = vpop.permute.xlu0 %2407
        %2409 = vset.pattern.permute.xlu0 0
        %2410 = vperm.xlu0 %2409, %v1960
        %v2411 = vpop.permute.xlu0 %2410
        %2412 = vset.pattern.permute.xlu0 0
        %2413 = vperm.xlu0 %2412, %v1962
        %v2414 = vpop.permute.xlu0 %2413
        %2415 = vset.pattern.permute.xlu0 0
        %2416 = vperm.xlu0 %2415, %v1964
        %v2417 = vpop.permute.xlu0 %2416
        %2418 = vset.pattern.permute.xlu0 0
        %2419 = vperm.xlu0 %2418, %v1966
        %v2420 = vpop.permute.xlu0 %2419
        %2421 = vset.pattern.permute.xlu0 0
        %2422 = vperm.xlu0 %2421, %v1968
        %v2423 = vpop.permute.xlu0 %2422
        %2424 = vset.pattern.permute.xlu0 0
        %2425 = vperm.xlu0 %2424, %v1970
        %v2426 = vpop.permute.xlu0 %2425
        %2427 = vset.pattern.permute.xlu0 0
        %2428 = vperm.xlu0 %2427, %v1972
        %v2429 = vpop.permute.xlu0 %2428
        %2430 = vset.pattern.permute.xlu0 0
        %2431 = vperm.xlu0 %2430, %v1974
        %v2432 = vpop.permute.xlu0 %2431
        %2433 = vset.pattern.permute.xlu0 0
        %2434 = vperm.xlu0 %2433, %v1976
        %v2435 = vpop.permute.xlu0 %2434
        %2436 = vset.pattern.permute.xlu0 0
        %2437 = vperm.xlu0 %2436, %v1978
        %v2438 = vpop.permute.xlu0 %2437
        %2439 = vset.pattern.permute.xlu0 0
        %2440 = vperm.xlu0 %2439, %v1980
        %v2441 = vpop.permute.xlu0 %2440
        %2442 = vset.pattern.permute.xlu0 0
        %2443 = vperm.xlu0 %2442, %v1982
        %v2444 = vpop.permute.xlu0 %2443
        %2445 = vset.pattern.permute.xlu0 0
        %2446 = vperm.xlu0 %2445, %v1984
        %v2447 = vpop.permute.xlu0 %2446
        %2448 = vset.pattern.permute.xlu0 0
        %2449 = vperm.xlu0 %2448, %v1986
        %v2450 = vpop.permute.xlu0 %2449
        %2451 = vset.pattern.permute.xlu0 0
        %2452 = vperm.xlu0 %2451, %v1988
        %v2453 = vpop.permute.xlu0 %2452
        %2454 = vset.pattern.permute.xlu0 0
        %2455 = vperm.xlu0 %2454, %v1990
        %v2456 = vpop.permute.xlu0 %2455
        %2457 = vset.pattern.permute.xlu0 0
        %2458 = vperm.xlu0 %2457, %v1992
        %v2459 = vpop.permute.xlu0 %2458
        %2460 = vset.pattern.permute.xlu0 0
        %2461 = vperm.xlu0 %2460, %v1994
        %v2462 = vpop.permute.xlu0 %2461
        %2463 = vset.pattern.permute.xlu0 0
        %2464 = vperm.xlu0 %2463, %v1996
        %v2465 = vpop.permute.xlu0 %2464
        %2466 = vset.pattern.permute.xlu0 0
        %2467 = vperm.xlu0 %2466, %v1998
        %v2468 = vpop.permute.xlu0 %2467
        %2469 = vset.pattern.permute.xlu0 0
        %2470 = vperm.xlu0 %2469, %v2000
        %v2471 = vpop.permute.xlu0 %2470
        %2472 = vset.pattern.permute.xlu0 0
        %2473 = vperm.xlu0 %2472, %v2002
        %v2474 = vpop.permute.xlu0 %2473
        %2475 = vset.pattern.permute.xlu0 0
        %2476 = vperm.xlu0 %2475, %v2004
        %v2477 = vpop.permute.xlu0 %2476
        %2478 = vset.pattern.permute.xlu0 0
        %2479 = vperm.xlu0 %2478, %v2006
        %v2480 = vpop.permute.xlu0 %2479
        %2481 = vset.pattern.permute.xlu0 0
        %2482 = vperm.xlu0 %2481, %v2008
        %v2483 = vpop.permute.xlu0 %2482
        %2484 = vset.pattern.permute.xlu0 0
        %2485 = vperm.xlu0 %2484, %v2010
        %v2486 = vpop.permute.xlu0 %2485
        %2487 = vset.pattern.permute.xlu0 0
        %2488 = vperm.xlu0 %2487, %v2012
        %v2489 = vpop.permute.xlu0 %2488
        %2490 = vset.pattern.permute.xlu0 0
        %2491 = vperm.xlu0 %2490, %v2014
        %v2492 = vpop.permute.xlu0 %2491
        %2493 = vset.pattern.permute.xlu0 0
        %2494 = vperm.xlu0 %2493, %v2016
        %v2495 = vpop.permute.xlu0 %2494
        %2496 = vset.pattern.permute.xlu0 0
        %2497 = vperm.xlu0 %2496, %v2018
        %v2498 = vpop.permute.xlu0 %2497
        %2499 = vset.pattern.permute.xlu0 0
        %2500 = vperm.xlu0 %2499, %v2020
        %v2501 = vpop.permute.xlu0 %2500
        %2502 = vset.pattern.permute.xlu0 0
        %2503 = vperm.xlu0 %2502, %v2022
        %v2504 = vpop.permute.xlu0 %2503
        %2505 = vset.pattern.permute.xlu0 0
        %2506 = vperm.xlu0 %2505, %v2024
        %v2507 = vpop.permute.xlu0 %2506
        %2508 = vset.pattern.permute.xlu0 0
        %2509 = vperm.xlu0 %2508, %v2026
        %v2510 = vpop.permute.xlu0 %2509
        %2511 = vset.pattern.permute.xlu0 0
        %2512 = vperm.xlu0 %2511, %v2028
        %v2513 = vpop.permute.xlu0 %2512
        %2514 = vset.pattern.permute.xlu0 0
        %2515 = vperm.xlu0 %2514, %v2030
        %v2516 = vpop.permute.xlu0 %2515
        %2517 = vset.pattern.permute.xlu0 0
        %2518 = vperm.xlu0 %2517, %v2032
        %v2519 = vpop.permute.xlu0 %2518
        %2520 = vset.pattern.permute.xlu0 0
        %2521 = vperm.xlu0 %2520, %v2034
        %v2522 = vpop.permute.xlu0 %2521
        %2523 = vset.pattern.permute.xlu0 0
        %2524 = vperm.xlu0 %2523, %v2036
        %v2525 = vpop.permute.xlu0 %2524
        %2526 = vset.pattern.permute.xlu0 0
        %2527 = vperm.xlu0 %2526, %v2038
        %v2528 = vpop.permute.xlu0 %2527
        %2529 = vset.pattern.permute.xlu0 0
        %2530 = vperm.xlu0 %2529, %v2040
        %v2531 = vpop.permute.xlu0 %2530
        %2532 = vset.pattern.permute.xlu0 0
        %2533 = vperm.xlu0 %2532, %v2042
        %v2534 = vpop.permute.xlu0 %2533
        %2535 = vset.pattern.permute.xlu0 0
        %2536 = vperm.xlu0 %2535, %v2044
        %v2537 = vpop.permute.xlu0 %2536
        %2538 = vset.pattern.permute.xlu0 0
        %2539 = vperm.xlu0 %2538, %v2046
        %v2540 = vpop.permute.xlu0 %2539
        %2541 = vset.pattern.permute.xlu0 0
        %2542 = vperm.xlu0 %2541, %v2048
        %v2543 = vpop.permute.xlu0 %2542
        %2544 = vset.pattern.permute.xlu0 0
        %2545 = vperm.xlu0 %2544, %v2050
        %v2546 = vpop.permute.xlu0 %2545
        %2547 = vset.pattern.permute.xlu0 0
        %2548 = vperm.xlu0 %2547, %v2052
        %v2549 = vpop.permute.xlu0 %2548
        %2550 = vset.pattern.permute.xlu0 0
        %2551 = vperm.xlu0 %2550, %v2054
        %v2552 = vpop.permute.xlu0 %2551
        %2553 = vset.pattern.permute.xlu0 0
        %2554 = vperm.xlu0 %2553, %v2056
        %v2555 = vpop.permute.xlu0 %2554
        %2556 = vset.pattern.permute.xlu0 0
        %2557 = vperm.xlu0 %2556, %v2058
        %v2558 = vpop.permute.xlu0 %2557
        %2559 = vset.pattern.permute.xlu0 0
        %2560 = vperm.xlu0 %2559, %v2060
        %v2561 = vpop.permute.xlu0 %2560
        %2562 = vset.pattern.permute.xlu0 0
        %2563 = vperm.xlu0 %2562, %v2062
        %v2564 = vpop.permute.xlu0 %2563
        %2565 = vset.pattern.permute.xlu0 0
        %2566 = vperm.xlu0 %2565, %v2064
        %v2567 = vpop.permute.xlu0 %2566
        %2568 = vset.pattern.permute.xlu0 0
        %2569 = vperm.xlu0 %2568, %v2066
        %v2570 = vpop.permute.xlu0 %2569
        %2571 = vset.pattern.permute.xlu0 0
        %2572 = vperm.xlu0 %2571, %v2068
        %v2573 = vpop.permute.xlu0 %2572
        %2574 = vset.pattern.permute.xlu0 0
        %2575 = vperm.xlu0 %2574, %v2070
        %v2576 = vpop.permute.xlu0 %2575
        %2577 = vset.pattern.permute.xlu0 0
        %2578 = vperm.xlu0 %2577, %v2072
        %v2579 = vpop.permute.xlu0 %2578
        %2580 = vset.pattern.permute.xlu0 0
        %2581 = vperm.xlu0 %2580, %v2074
        %v2582 = vpop.permute.xlu0 %2581
        %2583 = vset.pattern.permute.xlu0 0
        %2584 = vperm.xlu0 %2583, %v2076
        %v2585 = vpop.permute.xlu0 %2584
        %2586 = vset.pattern.permute.xlu0 0
        %2587 = vperm.xlu0 %2586, %v2078
        %v2588 = vpop.permute.xlu0 %2587
        %2589 = vset.pattern.permute.xlu0 0
        %2590 = vperm.xlu0 %2589, %v2080
        %v2591 = vpop.permute.xlu0 %2590
        %2592 = vset.pattern.permute.xlu0 0
        %2593 = vperm.xlu0 %2592, %v2082
        %v2594 = vpop.permute.xlu0 %2593
        %v2595 = vlaneseq
        %v2596 = vshrl.u32 %v2595, 7
        %v2597 = vsub.s32 %v978, %v2596
        %v2598 = vrot.slane %v2213, %v2597
        %v2599 = vlaneseq
        %v2600 = vshrl.u32 %v2599, 7
        %v2601 = vsub.s32 %v983, %v2600
        %v2602 = vrot.slane %v2216, %v2601
        %v2603 = vsel %vm988, %v2602, %v2598
        %v2604 = vlaneseq
        %v2605 = vshrl.u32 %v2604, 7
        %v2606 = vsub.s32 %v990, %v2605
        %v2607 = vrot.slane %v2219, %v2606
        %v2608 = vsel %vm995, %v2607, %v2603
        %v2609 = vlaneseq
        %v2610 = vshrl.u32 %v2609, 7
        %v2611 = vsub.s32 %v997, %v2610
        %v2612 = vrot.slane %v2222, %v2611
        %v2613 = vsel %vm1002, %v2612, %v2608
        %v2614 = vlaneseq
        %v2615 = vshrl.u32 %v2614, 7
        %v2616 = vsub.s32 %v1004, %v2615
        %v2617 = vrot.slane %v2225, %v2616
        %v2618 = vsel %vm1009, %v2617, %v2613
        %v2619 = vlaneseq
        %v2620 = vshrl.u32 %v2619, 7
        %v2621 = vsub.s32 %v1011, %v2620
        %v2622 = vrot.slane %v2228, %v2621
        %v2623 = vsel %vm1016, %v2622, %v2618
        %v2624 = vlaneseq
        %v2625 = vshrl.u32 %v2624, 7
        %v2626 = vsub.s32 %v1018, %v2625
        %v2627 = vrot.slane %v2231, %v2626
        %v2628 = vsel %vm1023, %v2627, %v2623
        %v2629 = vlaneseq
        %v2630 = vshrl.u32 %v2629, 7
        %v2631 = vsub.s32 %v1025, %v2630
        %v2632 = vrot.slane %v2234, %v2631
        %v2633 = vsel %vm1030, %v2632, %v2628
        %v2634 = vlaneseq
        %v2635 = vshrl.u32 %v2634, 7
        %v2636 = vsub.s32 %v1032, %v2635
        %v2637 = vrot.slane %v2237, %v2636
        %v2638 = vsel %vm1037, %v2637, %v2633
        %v2639 = vlaneseq
        %v2640 = vshrl.u32 %v2639, 7
        %v2641 = vsub.s32 %v1039, %v2640
        %v2642 = vrot.slane %v2240, %v2641
        %v2643 = vsel %vm1044, %v2642, %v2638
        %v2644 = vlaneseq
        %v2645 = vshrl.u32 %v2644, 7
        %v2646 = vsub.s32 %v1046, %v2645
        %v2647 = vrot.slane %v2243, %v2646
        %v2648 = vsel %vm1051, %v2647, %v2643
        %v2649 = vlaneseq
        %v2650 = vshrl.u32 %v2649, 7
        %v2651 = vsub.s32 %v1053, %v2650
        %v2652 = vrot.slane %v2246, %v2651
        %v2653 = vsel %vm1058, %v2652, %v2648
        %v2654 = vlaneseq
        %v2655 = vshrl.u32 %v2654, 7
        %v2656 = vsub.s32 %v1060, %v2655
        %v2657 = vrot.slane %v2249, %v2656
        %v2658 = vsel %vm1065, %v2657, %v2653
        %v2659 = vlaneseq
        %v2660 = vshrl.u32 %v2659, 7
        %v2661 = vsub.s32 %v1067, %v2660
        %v2662 = vrot.slane %v2252, %v2661
        %v2663 = vsel %vm1072, %v2662, %v2658
        %v2664 = vlaneseq
        %v2665 = vshrl.u32 %v2664, 7
        %v2666 = vsub.s32 %v1074, %v2665
        %v2667 = vrot.slane %v2255, %v2666
        %v2668 = vsel %vm1079, %v2667, %v2663
        %v2669 = vlaneseq
        %v2670 = vshrl.u32 %v2669, 7
        %v2671 = vsub.s32 %v1081, %v2670
        %v2672 = vrot.slane %v2258, %v2671
        %v2673 = vsel %vm1086, %v2672, %v2668
        %v2674 = vlaneseq
        %v2675 = vshrl.u32 %v2674, 7
        %v2676 = vsub.s32 %v978, %v2675
        %v2677 = vrot.slane %v2261, %v2676
        %v2678 = vlaneseq
        %v2679 = vshrl.u32 %v2678, 7
        %v2680 = vsub.s32 %v983, %v2679
        %v2681 = vrot.slane %v2264, %v2680
        %v2682 = vsel %vm988, %v2681, %v2677
        %v2683 = vlaneseq
        %v2684 = vshrl.u32 %v2683, 7
        %v2685 = vsub.s32 %v990, %v2684
        %v2686 = vrot.slane %v2267, %v2685
        %v2687 = vsel %vm995, %v2686, %v2682
        %v2688 = vlaneseq
        %v2689 = vshrl.u32 %v2688, 7
        %v2690 = vsub.s32 %v997, %v2689
        %v2691 = vrot.slane %v2270, %v2690
        %v2692 = vsel %vm1002, %v2691, %v2687
        %v2693 = vlaneseq
        %v2694 = vshrl.u32 %v2693, 7
        %v2695 = vsub.s32 %v1004, %v2694
        %v2696 = vrot.slane %v2273, %v2695
        %v2697 = vsel %vm1009, %v2696, %v2692
        %v2698 = vlaneseq
        %v2699 = vshrl.u32 %v2698, 7
        %v2700 = vsub.s32 %v1011, %v2699
        %v2701 = vrot.slane %v2276, %v2700
        %v2702 = vsel %vm1016, %v2701, %v2697
        %v2703 = vlaneseq
        %v2704 = vshrl.u32 %v2703, 7
        %v2705 = vsub.s32 %v1018, %v2704
        %v2706 = vrot.slane %v2279, %v2705
        %v2707 = vsel %vm1023, %v2706, %v2702
        %v2708 = vlaneseq
        %v2709 = vshrl.u32 %v2708, 7
        %v2710 = vsub.s32 %v1025, %v2709
        %v2711 = vrot.slane %v2282, %v2710
        %v2712 = vsel %vm1030, %v2711, %v2707
        %v2713 = vlaneseq
        %v2714 = vshrl.u32 %v2713, 7
        %v2715 = vsub.s32 %v1032, %v2714
        %v2716 = vrot.slane %v2285, %v2715
        %v2717 = vsel %vm1037, %v2716, %v2712
        %v2718 = vlaneseq
        %v2719 = vshrl.u32 %v2718, 7
        %v2720 = vsub.s32 %v1039, %v2719
        %v2721 = vrot.slane %v2288, %v2720
        %v2722 = vsel %vm1044, %v2721, %v2717
        %v2723 = vlaneseq
        %v2724 = vshrl.u32 %v2723, 7
        %v2725 = vsub.s32 %v1046, %v2724
        %v2726 = vrot.slane %v2291, %v2725
        %v2727 = vsel %vm1051, %v2726, %v2722
        %v2728 = vlaneseq
        %v2729 = vshrl.u32 %v2728, 7
        %v2730 = vsub.s32 %v1053, %v2729
        %v2731 = vrot.slane %v2294, %v2730
        %v2732 = vsel %vm1058, %v2731, %v2727
        %v2733 = vlaneseq
        %v2734 = vshrl.u32 %v2733, 7
        %v2735 = vsub.s32 %v1060, %v2734
        %v2736 = vrot.slane %v2297, %v2735
        %v2737 = vsel %vm1065, %v2736, %v2732
        %v2738 = vlaneseq
        %v2739 = vshrl.u32 %v2738, 7
        %v2740 = vsub.s32 %v1067, %v2739
        %v2741 = vrot.slane %v2300, %v2740
        %v2742 = vsel %vm1072, %v2741, %v2737
        %v2743 = vlaneseq
        %v2744 = vshrl.u32 %v2743, 7
        %v2745 = vsub.s32 %v1074, %v2744
        %v2746 = vrot.slane %v2303, %v2745
        %v2747 = vsel %vm1079, %v2746, %v2742
        %v2748 = vlaneseq
        %v2749 = vshrl.u32 %v2748, 7
        %v2750 = vsub.s32 %v1081, %v2749
        %v2751 = vrot.slane %v2306, %v2750
        %v2752 = vsel %vm1086, %v2751, %v2747
        %v2753 = vlaneseq
        %v2754 = vshrl.u32 %v2753, 7
        %v2755 = vsub.s32 %v978, %v2754
        %v2756 = vrot.slane %v2309, %v2755
        %v2757 = vlaneseq
        %v2758 = vshrl.u32 %v2757, 7
        %v2759 = vsub.s32 %v983, %v2758
        %v2760 = vrot.slane %v2312, %v2759
        %v2761 = vsel %vm988, %v2760, %v2756
        %v2762 = vlaneseq
        %v2763 = vshrl.u32 %v2762, 7
        %v2764 = vsub.s32 %v990, %v2763
        %v2765 = vrot.slane %v2315, %v2764
        %v2766 = vsel %vm995, %v2765, %v2761
        %v2767 = vlaneseq
        %v2768 = vshrl.u32 %v2767, 7
        %v2769 = vsub.s32 %v997, %v2768
        %v2770 = vrot.slane %v2318, %v2769
        %v2771 = vsel %vm1002, %v2770, %v2766
        %v2772 = vlaneseq
        %v2773 = vshrl.u32 %v2772, 7
        %v2774 = vsub.s32 %v1004, %v2773
        %v2775 = vrot.slane %v2321, %v2774
        %v2776 = vsel %vm1009, %v2775, %v2771
        %v2777 = vlaneseq
        %v2778 = vshrl.u32 %v2777, 7
        %v2779 = vsub.s32 %v1011, %v2778
        %v2780 = vrot.slane %v2324, %v2779
        %v2781 = vsel %vm1016, %v2780, %v2776
        %v2782 = vlaneseq
        %v2783 = vshrl.u32 %v2782, 7
        %v2784 = vsub.s32 %v1018, %v2783
        %v2785 = vrot.slane %v2327, %v2784
        %v2786 = vsel %vm1023, %v2785, %v2781
        %v2787 = vlaneseq
        %v2788 = vshrl.u32 %v2787, 7
        %v2789 = vsub.s32 %v1025, %v2788
        %v2790 = vrot.slane %v2330, %v2789
        %v2791 = vsel %vm1030, %v2790, %v2786
        %v2792 = vlaneseq
        %v2793 = vshrl.u32 %v2792, 7
        %v2794 = vsub.s32 %v1032, %v2793
        %v2795 = vrot.slane %v2333, %v2794
        %v2796 = vsel %vm1037, %v2795, %v2791
        %v2797 = vlaneseq
        %v2798 = vshrl.u32 %v2797, 7
        %v2799 = vsub.s32 %v1039, %v2798
        %v2800 = vrot.slane %v2336, %v2799
        %v2801 = vsel %vm1044, %v2800, %v2796
        %v2802 = vlaneseq
        %v2803 = vshrl.u32 %v2802, 7
        %v2804 = vsub.s32 %v1046, %v2803
        %v2805 = vrot.slane %v2339, %v2804
        %v2806 = vsel %vm1051, %v2805, %v2801
        %v2807 = vlaneseq
        %v2808 = vshrl.u32 %v2807, 7
        %v2809 = vsub.s32 %v1053, %v2808
        %v2810 = vrot.slane %v2342, %v2809
        %v2811 = vsel %vm1058, %v2810, %v2806
        %v2812 = vlaneseq
        %v2813 = vshrl.u32 %v2812, 7
        %v2814 = vsub.s32 %v1060, %v2813
        %v2815 = vrot.slane %v2345, %v2814
        %v2816 = vsel %vm1065, %v2815, %v2811
        %v2817 = vlaneseq
        %v2818 = vshrl.u32 %v2817, 7
        %v2819 = vsub.s32 %v1067, %v2818
        %v2820 = vrot.slane %v2348, %v2819
        %v2821 = vsel %vm1072, %v2820, %v2816
        %v2822 = vlaneseq
        %v2823 = vshrl.u32 %v2822, 7
        %v2824 = vsub.s32 %v1074, %v2823
        %v2825 = vrot.slane %v2351, %v2824
        %v2826 = vsel %vm1079, %v2825, %v2821
        %v2827 = vlaneseq
        %v2828 = vshrl.u32 %v2827, 7
        %v2829 = vsub.s32 %v1081, %v2828
        %v2830 = vrot.slane %v2354, %v2829
        %v2831 = vsel %vm1086, %v2830, %v2826
        %v2832 = vlaneseq
        %v2833 = vshrl.u32 %v2832, 7
        %v2834 = vsub.s32 %v978, %v2833
        %v2835 = vrot.slane %v2357, %v2834
        %v2836 = vlaneseq
        %v2837 = vshrl.u32 %v2836, 7
        %v2838 = vsub.s32 %v983, %v2837
        %v2839 = vrot.slane %v2360, %v2838
        %v2840 = vsel %vm988, %v2839, %v2835
        %v2841 = vlaneseq
        %v2842 = vshrl.u32 %v2841, 7
        %v2843 = vsub.s32 %v990, %v2842
        %v2844 = vrot.slane %v2363, %v2843
        %v2845 = vsel %vm995, %v2844, %v2840
        %v2846 = vlaneseq
        %v2847 = vshrl.u32 %v2846, 7
        %v2848 = vsub.s32 %v997, %v2847
        %v2849 = vrot.slane %v2366, %v2848
        %v2850 = vsel %vm1002, %v2849, %v2845
        %v2851 = vlaneseq
        %v2852 = vshrl.u32 %v2851, 7
        %v2853 = vsub.s32 %v1004, %v2852
        %v2854 = vrot.slane %v2369, %v2853
        %v2855 = vsel %vm1009, %v2854, %v2850
        %v2856 = vlaneseq
        %v2857 = vshrl.u32 %v2856, 7
        %v2858 = vsub.s32 %v1011, %v2857
        %v2859 = vrot.slane %v2372, %v2858
        %v2860 = vsel %vm1016, %v2859, %v2855
        %v2861 = vlaneseq
        %v2862 = vshrl.u32 %v2861, 7
        %v2863 = vsub.s32 %v1018, %v2862
        %v2864 = vrot.slane %v2375, %v2863
        %v2865 = vsel %vm1023, %v2864, %v2860
        %v2866 = vlaneseq
        %v2867 = vshrl.u32 %v2866, 7
        %v2868 = vsub.s32 %v1025, %v2867
        %v2869 = vrot.slane %v2378, %v2868
        %v2870 = vsel %vm1030, %v2869, %v2865
        %v2871 = vlaneseq
        %v2872 = vshrl.u32 %v2871, 7
        %v2873 = vsub.s32 %v1032, %v2872
        %v2874 = vrot.slane %v2381, %v2873
        %v2875 = vsel %vm1037, %v2874, %v2870
        %v2876 = vlaneseq
        %v2877 = vshrl.u32 %v2876, 7
        %v2878 = vsub.s32 %v1039, %v2877
        %v2879 = vrot.slane %v2384, %v2878
        %v2880 = vsel %vm1044, %v2879, %v2875
        %v2881 = vlaneseq
        %v2882 = vshrl.u32 %v2881, 7
        %v2883 = vsub.s32 %v1046, %v2882
        %v2884 = vrot.slane %v2387, %v2883
        %v2885 = vsel %vm1051, %v2884, %v2880
        %v2886 = vlaneseq
        %v2887 = vshrl.u32 %v2886, 7
        %v2888 = vsub.s32 %v1053, %v2887
        %v2889 = vrot.slane %v2390, %v2888
        %v2890 = vsel %vm1058, %v2889, %v2885
        %v2891 = vlaneseq
        %v2892 = vshrl.u32 %v2891, 7
        %v2893 = vsub.s32 %v1060, %v2892
        %v2894 = vrot.slane %v2393, %v2893
        %v2895 = vsel %vm1065, %v2894, %v2890
        %v2896 = vlaneseq
        %v2897 = vshrl.u32 %v2896, 7
        %v2898 = vsub.s32 %v1067, %v2897
        %v2899 = vrot.slane %v2396, %v2898
        %v2900 = vsel %vm1072, %v2899, %v2895
        %v2901 = vlaneseq
        %v2902 = vshrl.u32 %v2901, 7
        %v2903 = vsub.s32 %v1074, %v2902
        %v2904 = vrot.slane %v2399, %v2903
        %v2905 = vsel %vm1079, %v2904, %v2900
        %v2906 = vlaneseq
        %v2907 = vshrl.u32 %v2906, 7
        %v2908 = vsub.s32 %v1081, %v2907
        %v2909 = vrot.slane %v2402, %v2908
        %v2910 = vsel %vm1086, %v2909, %v2905
        %v2911 = vlaneseq
        %v2912 = vshrl.u32 %v2911, 7
        %v2913 = vsub.s32 %v978, %v2912
        %v2914 = vrot.slane %v2405, %v2913
        %v2915 = vlaneseq
        %v2916 = vshrl.u32 %v2915, 7
        %v2917 = vsub.s32 %v983, %v2916
        %v2918 = vrot.slane %v2408, %v2917
        %v2919 = vsel %vm988, %v2918, %v2914
        %v2920 = vlaneseq
        %v2921 = vshrl.u32 %v2920, 7
        %v2922 = vsub.s32 %v990, %v2921
        %v2923 = vrot.slane %v2411, %v2922
        %v2924 = vsel %vm995, %v2923, %v2919
        %v2925 = vlaneseq
        %v2926 = vshrl.u32 %v2925, 7
        %v2927 = vsub.s32 %v997, %v2926
        %v2928 = vrot.slane %v2414, %v2927
        %v2929 = vsel %vm1002, %v2928, %v2924
        %v2930 = vlaneseq
        %v2931 = vshrl.u32 %v2930, 7
        %v2932 = vsub.s32 %v1004, %v2931
        %v2933 = vrot.slane %v2417, %v2932
        %v2934 = vsel %vm1009, %v2933, %v2929
        %v2935 = vlaneseq
        %v2936 = vshrl.u32 %v2935, 7
        %v2937 = vsub.s32 %v1011, %v2936
        %v2938 = vrot.slane %v2420, %v2937
        %v2939 = vsel %vm1016, %v2938, %v2934
        %v2940 = vlaneseq
        %v2941 = vshrl.u32 %v2940, 7
        %v2942 = vsub.s32 %v1018, %v2941
        %v2943 = vrot.slane %v2423, %v2942
        %v2944 = vsel %vm1023, %v2943, %v2939
        %v2945 = vlaneseq
        %v2946 = vshrl.u32 %v2945, 7
        %v2947 = vsub.s32 %v1025, %v2946
        %v2948 = vrot.slane %v2426, %v2947
        %v2949 = vsel %vm1030, %v2948, %v2944
        %v2950 = vlaneseq
        %v2951 = vshrl.u32 %v2950, 7
        %v2952 = vsub.s32 %v1032, %v2951
        %v2953 = vrot.slane %v2429, %v2952
        %v2954 = vsel %vm1037, %v2953, %v2949
        %v2955 = vlaneseq
        %v2956 = vshrl.u32 %v2955, 7
        %v2957 = vsub.s32 %v1039, %v2956
        %v2958 = vrot.slane %v2432, %v2957
        %v2959 = vsel %vm1044, %v2958, %v2954
        %v2960 = vlaneseq
        %v2961 = vshrl.u32 %v2960, 7
        %v2962 = vsub.s32 %v1046, %v2961
        %v2963 = vrot.slane %v2435, %v2962
        %v2964 = vsel %vm1051, %v2963, %v2959
        %v2965 = vlaneseq
        %v2966 = vshrl.u32 %v2965, 7
        %v2967 = vsub.s32 %v1053, %v2966
        %v2968 = vrot.slane %v2438, %v2967
        %v2969 = vsel %vm1058, %v2968, %v2964
        %v2970 = vlaneseq
        %v2971 = vshrl.u32 %v2970, 7
        %v2972 = vsub.s32 %v1060, %v2971
        %v2973 = vrot.slane %v2441, %v2972
        %v2974 = vsel %vm1065, %v2973, %v2969
        %v2975 = vlaneseq
        %v2976 = vshrl.u32 %v2975, 7
        %v2977 = vsub.s32 %v1067, %v2976
        %v2978 = vrot.slane %v2444, %v2977
        %v2979 = vsel %vm1072, %v2978, %v2974
        %v2980 = vlaneseq
        %v2981 = vshrl.u32 %v2980, 7
        %v2982 = vsub.s32 %v1074, %v2981
        %v2983 = vrot.slane %v2447, %v2982
        %v2984 = vsel %vm1079, %v2983, %v2979
        %v2985 = vlaneseq
        %v2986 = vshrl.u32 %v2985, 7
        %v2987 = vsub.s32 %v1081, %v2986
        %v2988 = vrot.slane %v2450, %v2987
        %v2989 = vsel %vm1086, %v2988, %v2984
        %v2990 = vlaneseq
        %v2991 = vshrl.u32 %v2990, 7
        %v2992 = vsub.s32 %v978, %v2991
        %v2993 = vrot.slane %v2453, %v2992
        %v2994 = vlaneseq
        %v2995 = vshrl.u32 %v2994, 7
        %v2996 = vsub.s32 %v983, %v2995
        %v2997 = vrot.slane %v2456, %v2996
        %v2998 = vsel %vm988, %v2997, %v2993
        %v2999 = vlaneseq
        %v3000 = vshrl.u32 %v2999, 7
        %v3001 = vsub.s32 %v990, %v3000
        %v3002 = vrot.slane %v2459, %v3001
        %v3003 = vsel %vm995, %v3002, %v2998
        %v3004 = vlaneseq
        %v3005 = vshrl.u32 %v3004, 7
        %v3006 = vsub.s32 %v997, %v3005
        %v3007 = vrot.slane %v2462, %v3006
        %v3008 = vsel %vm1002, %v3007, %v3003
        %v3009 = vlaneseq
        %v3010 = vshrl.u32 %v3009, 7
        %v3011 = vsub.s32 %v1004, %v3010
        %v3012 = vrot.slane %v2465, %v3011
        %v3013 = vsel %vm1009, %v3012, %v3008
        %v3014 = vlaneseq
        %v3015 = vshrl.u32 %v3014, 7
        %v3016 = vsub.s32 %v1011, %v3015
        %v3017 = vrot.slane %v2468, %v3016
        %v3018 = vsel %vm1016, %v3017, %v3013
        %v3019 = vlaneseq
        %v3020 = vshrl.u32 %v3019, 7
        %v3021 = vsub.s32 %v1018, %v3020
        %v3022 = vrot.slane %v2471, %v3021
        %v3023 = vsel %vm1023, %v3022, %v3018
        %v3024 = vlaneseq
        %v3025 = vshrl.u32 %v3024, 7
        %v3026 = vsub.s32 %v1025, %v3025
        %v3027 = vrot.slane %v2474, %v3026
        %v3028 = vsel %vm1030, %v3027, %v3023
        %v3029 = vlaneseq
        %v3030 = vshrl.u32 %v3029, 7
        %v3031 = vsub.s32 %v1032, %v3030
        %v3032 = vrot.slane %v2477, %v3031
        %v3033 = vsel %vm1037, %v3032, %v3028
        %v3034 = vlaneseq
        %v3035 = vshrl.u32 %v3034, 7
        %v3036 = vsub.s32 %v1039, %v3035
        %v3037 = vrot.slane %v2480, %v3036
        %v3038 = vsel %vm1044, %v3037, %v3033
        %v3039 = vlaneseq
        %v3040 = vshrl.u32 %v3039, 7
        %v3041 = vsub.s32 %v1046, %v3040
        %v3042 = vrot.slane %v2483, %v3041
        %v3043 = vsel %vm1051, %v3042, %v3038
        %v3044 = vlaneseq
        %v3045 = vshrl.u32 %v3044, 7
        %v3046 = vsub.s32 %v1053, %v3045
        %v3047 = vrot.slane %v2486, %v3046
        %v3048 = vsel %vm1058, %v3047, %v3043
        %v3049 = vlaneseq
        %v3050 = vshrl.u32 %v3049, 7
        %v3051 = vsub.s32 %v1060, %v3050
        %v3052 = vrot.slane %v2489, %v3051
        %v3053 = vsel %vm1065, %v3052, %v3048
        %v3054 = vlaneseq
        %v3055 = vshrl.u32 %v3054, 7
        %v3056 = vsub.s32 %v1067, %v3055
        %v3057 = vrot.slane %v2492, %v3056
        %v3058 = vsel %vm1072, %v3057, %v3053
        %v3059 = vlaneseq
        %v3060 = vshrl.u32 %v3059, 7
        %v3061 = vsub.s32 %v1074, %v3060
        %v3062 = vrot.slane %v2495, %v3061
        %v3063 = vsel %vm1079, %v3062, %v3058
        %v3064 = vlaneseq
        %v3065 = vshrl.u32 %v3064, 7
        %v3066 = vsub.s32 %v1081, %v3065
        %v3067 = vrot.slane %v2498, %v3066
        %v3068 = vsel %vm1086, %v3067, %v3063
        %v3069 = vlaneseq
        %v3070 = vshrl.u32 %v3069, 7
        %v3071 = vsub.s32 %v978, %v3070
        %v3072 = vrot.slane %v2501, %v3071
        %v3073 = vlaneseq
        %v3074 = vshrl.u32 %v3073, 7
        %v3075 = vsub.s32 %v983, %v3074
        %v3076 = vrot.slane %v2504, %v3075
        %v3077 = vsel %vm988, %v3076, %v3072
        %v3078 = vlaneseq
        %v3079 = vshrl.u32 %v3078, 7
        %v3080 = vsub.s32 %v990, %v3079
        %v3081 = vrot.slane %v2507, %v3080
        %v3082 = vsel %vm995, %v3081, %v3077
        %v3083 = vlaneseq
        %v3084 = vshrl.u32 %v3083, 7
        %v3085 = vsub.s32 %v997, %v3084
        %v3086 = vrot.slane %v2510, %v3085
        %v3087 = vsel %vm1002, %v3086, %v3082
        %v3088 = vlaneseq
        %v3089 = vshrl.u32 %v3088, 7
        %v3090 = vsub.s32 %v1004, %v3089
        %v3091 = vrot.slane %v2513, %v3090
        %v3092 = vsel %vm1009, %v3091, %v3087
        %v3093 = vlaneseq
        %v3094 = vshrl.u32 %v3093, 7
        %v3095 = vsub.s32 %v1011, %v3094
        %v3096 = vrot.slane %v2516, %v3095
        %v3097 = vsel %vm1016, %v3096, %v3092
        %v3098 = vlaneseq
        %v3099 = vshrl.u32 %v3098, 7
        %v3100 = vsub.s32 %v1018, %v3099
        %v3101 = vrot.slane %v2519, %v3100
        %v3102 = vsel %vm1023, %v3101, %v3097
        %v3103 = vlaneseq
        %v3104 = vshrl.u32 %v3103, 7
        %v3105 = vsub.s32 %v1025, %v3104
        %v3106 = vrot.slane %v2522, %v3105
        %v3107 = vsel %vm1030, %v3106, %v3102
        %v3108 = vlaneseq
        %v3109 = vshrl.u32 %v3108, 7
        %v3110 = vsub.s32 %v1032, %v3109
        %v3111 = vrot.slane %v2525, %v3110
        %v3112 = vsel %vm1037, %v3111, %v3107
        %v3113 = vlaneseq
        %v3114 = vshrl.u32 %v3113, 7
        %v3115 = vsub.s32 %v1039, %v3114
        %v3116 = vrot.slane %v2528, %v3115
        %v3117 = vsel %vm1044, %v3116, %v3112
        %v3118 = vlaneseq
        %v3119 = vshrl.u32 %v3118, 7
        %v3120 = vsub.s32 %v1046, %v3119
        %v3121 = vrot.slane %v2531, %v3120
        %v3122 = vsel %vm1051, %v3121, %v3117
        %v3123 = vlaneseq
        %v3124 = vshrl.u32 %v3123, 7
        %v3125 = vsub.s32 %v1053, %v3124
        %v3126 = vrot.slane %v2534, %v3125
        %v3127 = vsel %vm1058, %v3126, %v3122
        %v3128 = vlaneseq
        %v3129 = vshrl.u32 %v3128, 7
        %v3130 = vsub.s32 %v1060, %v3129
        %v3131 = vrot.slane %v2537, %v3130
        %v3132 = vsel %vm1065, %v3131, %v3127
        %v3133 = vlaneseq
        %v3134 = vshrl.u32 %v3133, 7
        %v3135 = vsub.s32 %v1067, %v3134
        %v3136 = vrot.slane %v2540, %v3135
        %v3137 = vsel %vm1072, %v3136, %v3132
        %v3138 = vlaneseq
        %v3139 = vshrl.u32 %v3138, 7
        %v3140 = vsub.s32 %v1074, %v3139
        %v3141 = vrot.slane %v2543, %v3140
        %v3142 = vsel %vm1079, %v3141, %v3137
        %v3143 = vlaneseq
        %v3144 = vshrl.u32 %v3143, 7
        %v3145 = vsub.s32 %v1081, %v3144
        %v3146 = vrot.slane %v2546, %v3145
        %v3147 = vsel %vm1086, %v3146, %v3142
        %v3148 = vlaneseq
        %v3149 = vshrl.u32 %v3148, 7
        %v3150 = vsub.s32 %v978, %v3149
        %v3151 = vrot.slane %v2549, %v3150
        %v3152 = vlaneseq
        %v3153 = vshrl.u32 %v3152, 7
        %v3154 = vsub.s32 %v983, %v3153
        %v3155 = vrot.slane %v2552, %v3154
        %v3156 = vsel %vm988, %v3155, %v3151
        %v3157 = vlaneseq
        %v3158 = vshrl.u32 %v3157, 7
        %v3159 = vsub.s32 %v990, %v3158
        %v3160 = vrot.slane %v2555, %v3159
        %v3161 = vsel %vm995, %v3160, %v3156
        %v3162 = vlaneseq
        %v3163 = vshrl.u32 %v3162, 7
        %v3164 = vsub.s32 %v997, %v3163
        %v3165 = vrot.slane %v2558, %v3164
        %v3166 = vsel %vm1002, %v3165, %v3161
        %v3167 = vlaneseq
        %v3168 = vshrl.u32 %v3167, 7
        %v3169 = vsub.s32 %v1004, %v3168
        %v3170 = vrot.slane %v2561, %v3169
        %v3171 = vsel %vm1009, %v3170, %v3166
        %v3172 = vlaneseq
        %v3173 = vshrl.u32 %v3172, 7
        %v3174 = vsub.s32 %v1011, %v3173
        %v3175 = vrot.slane %v2564, %v3174
        %v3176 = vsel %vm1016, %v3175, %v3171
        %v3177 = vlaneseq
        %v3178 = vshrl.u32 %v3177, 7
        %v3179 = vsub.s32 %v1018, %v3178
        %v3180 = vrot.slane %v2567, %v3179
        %v3181 = vsel %vm1023, %v3180, %v3176
        %v3182 = vlaneseq
        %v3183 = vshrl.u32 %v3182, 7
        %v3184 = vsub.s32 %v1025, %v3183
        %v3185 = vrot.slane %v2570, %v3184
        %v3186 = vsel %vm1030, %v3185, %v3181
        %v3187 = vlaneseq
        %v3188 = vshrl.u32 %v3187, 7
        %v3189 = vsub.s32 %v1032, %v3188
        %v3190 = vrot.slane %v2573, %v3189
        %v3191 = vsel %vm1037, %v3190, %v3186
        %v3192 = vlaneseq
        %v3193 = vshrl.u32 %v3192, 7
        %v3194 = vsub.s32 %v1039, %v3193
        %v3195 = vrot.slane %v2576, %v3194
        %v3196 = vsel %vm1044, %v3195, %v3191
        %v3197 = vlaneseq
        %v3198 = vshrl.u32 %v3197, 7
        %v3199 = vsub.s32 %v1046, %v3198
        %v3200 = vrot.slane %v2579, %v3199
        %v3201 = vsel %vm1051, %v3200, %v3196
        %v3202 = vlaneseq
        %v3203 = vshrl.u32 %v3202, 7
        %v3204 = vsub.s32 %v1053, %v3203
        %v3205 = vrot.slane %v2582, %v3204
        %v3206 = vsel %vm1058, %v3205, %v3201
        %v3207 = vlaneseq
        %v3208 = vshrl.u32 %v3207, 7
        %v3209 = vsub.s32 %v1060, %v3208
        %v3210 = vrot.slane %v2585, %v3209
        %v3211 = vsel %vm1065, %v3210, %v3206
        %v3212 = vlaneseq
        %v3213 = vshrl.u32 %v3212, 7
        %v3214 = vsub.s32 %v1067, %v3213
        %v3215 = vrot.slane %v2588, %v3214
        %v3216 = vsel %vm1072, %v3215, %v3211
        %v3217 = vlaneseq
        %v3218 = vshrl.u32 %v3217, 7
        %v3219 = vsub.s32 %v1074, %v3218
        %v3220 = vrot.slane %v2591, %v3219
        %v3221 = vsel %vm1079, %v3220, %v3216
        %v3222 = vlaneseq
        %v3223 = vshrl.u32 %v3222, 7
        %v3224 = vsub.s32 %v1081, %v3223
        %v3225 = vrot.slane %v2594, %v3224
        %v3226 = vsel %vm1086, %v3225, %v3221
        %v3227 = vsel %vm1641, %v2752, %v2673
        %v3228 = vsel %vm1643, %v2831, %v3227
        %v3229 = vsel %vm1645, %v2910, %v3228
        %v3230 = vsel %vm1647, %v2989, %v3229
        %v3231 = vsel %vm1649, %v3068, %v3230
        %v3232 = vsel %vm1651, %v3147, %v3231
        %v3233 = vsel %vm1653, %v3226, %v3232
        %3235 = vadd.xlane.f32.xlu0 %v3233
        %v3236 = vpop.xlane.xlu0 %3235
        %v3237 = vrcp.pop %v3236
        %v3239 = vlaneseq
        %v3240 = vshrl.u32 %v3239, 7
        %v3241 = vsub.s32 0, %v3240
        %v3242 = vrot.slane %v3237, %v3241
        %v3243 = vlaneseq
        %v3244 = vshrl.u32 %v3243, 7
        %v3245 = vsub.s32 1, %v3244
        %v3246 = vrot.slane %v3237, %v3245
        %v3247 = vlaneseq
        %v3248 = vshrl.u32 %v3247, 7
        %v3249 = vsub.s32 2, %v3248
        %v3250 = vrot.slane %v3237, %v3249
        %v3251 = vlaneseq
        %v3252 = vshrl.u32 %v3251, 7
        %v3253 = vsub.s32 3, %v3252
        %v3254 = vrot.slane %v3237, %v3253
        %v3255 = vlaneseq
        %v3256 = vshrl.u32 %v3255, 7
        %v3257 = vsub.s32 4, %v3256
        %v3258 = vrot.slane %v3237, %v3257
        %v3259 = vlaneseq
        %v3260 = vshrl.u32 %v3259, 7
        %v3261 = vsub.s32 5, %v3260
        %v3262 = vrot.slane %v3237, %v3261
        %v3263 = vlaneseq
        %v3264 = vshrl.u32 %v3263, 7
        %v3265 = vsub.s32 6, %v3264
        %v3266 = vrot.slane %v3237, %v3265
        %v3267 = vlaneseq
        %v3268 = vshrl.u32 %v3267, 7
        %v3269 = vsub.s32 7, %v3268
        %v3270 = vrot.slane %v3237, %v3269
        %v3279 = vmul.f32 %v1828, %v3242
        %v3280 = vmul.f32 %v1830, %v3242
        %v3281 = vmul.f32 %v1832, %v3242
        %v3282 = vmul.f32 %v1834, %v3242
        %v3283 = vmul.f32 %v1836, %v3242
        %v3284 = vmul.f32 %v1838, %v3242
        %v3285 = vmul.f32 %v1840, %v3242
        %v3286 = vmul.f32 %v1842, %v3242
        %v3287 = vmul.f32 %v1844, %v3242
        %v3288 = vmul.f32 %v1846, %v3242
        %v3289 = vmul.f32 %v1848, %v3242
        %v3290 = vmul.f32 %v1850, %v3242
        %v3291 = vmul.f32 %v1852, %v3242
        %v3292 = vmul.f32 %v1854, %v3242
        %v3293 = vmul.f32 %v1856, %v3242
        %v3294 = vmul.f32 %v1858, %v3242
        %v3295 = vmul.f32 %v1860, %v3246
        %v3296 = vmul.f32 %v1862, %v3246
        %v3297 = vmul.f32 %v1864, %v3246
        %v3298 = vmul.f32 %v1866, %v3246
        %v3299 = vmul.f32 %v1868, %v3246
        %v3300 = vmul.f32 %v1870, %v3246
        %v3301 = vmul.f32 %v1872, %v3246
        %v3302 = vmul.f32 %v1874, %v3246
        %v3303 = vmul.f32 %v1876, %v3246
        %v3304 = vmul.f32 %v1878, %v3246
        %v3305 = vmul.f32 %v1880, %v3246
        %v3306 = vmul.f32 %v1882, %v3246
        %v3307 = vmul.f32 %v1884, %v3246
        %v3308 = vmul.f32 %v1886, %v3246
        %v3309 = vmul.f32 %v1888, %v3246
        %v3310 = vmul.f32 %v1890, %v3246
        %v3311 = vmul.f32 %v1892, %v3250
        %v3312 = vmul.f32 %v1894, %v3250
        %v3313 = vmul.f32 %v1896, %v3250
        %v3314 = vmul.f32 %v1898, %v3250
        %v3315 = vmul.f32 %v1900, %v3250
        %v3316 = vmul.f32 %v1902, %v3250
        %v3317 = vmul.f32 %v1904, %v3250
        %v3318 = vmul.f32 %v1906, %v3250
        %v3319 = vmul.f32 %v1908, %v3250
        %v3320 = vmul.f32 %v1910, %v3250
        %v3321 = vmul.f32 %v1912, %v3250
        %v3322 = vmul.f32 %v1914, %v3250
        %v3323 = vmul.f32 %v1916, %v3250
        %v3324 = vmul.f32 %v1918, %v3250
        %v3325 = vmul.f32 %v1920, %v3250
        %v3326 = vmul.f32 %v1922, %v3250
        %v3327 = vmul.f32 %v1924, %v3254
        %v3328 = vmul.f32 %v1926, %v3254
        %v3329 = vmul.f32 %v1928, %v3254
        %v3330 = vmul.f32 %v1930, %v3254
        %v3331 = vmul.f32 %v1932, %v3254
        %v3332 = vmul.f32 %v1934, %v3254
        %v3333 = vmul.f32 %v1936, %v3254
        %v3334 = vmul.f32 %v1938, %v3254
        %v3335 = vmul.f32 %v1940, %v3254
        %v3336 = vmul.f32 %v1942, %v3254
        %v3337 = vmul.f32 %v1944, %v3254
        %v3338 = vmul.f32 %v1946, %v3254
        %v3339 = vmul.f32 %v1948, %v3254
        %v3340 = vmul.f32 %v1950, %v3254
        %v3341 = vmul.f32 %v1952, %v3254
        %v3342 = vmul.f32 %v1954, %v3254
        %v3343 = vmul.f32 %v1956, %v3258
        %v3344 = vmul.f32 %v1958, %v3258
        %v3345 = vmul.f32 %v1960, %v3258
        %v3346 = vmul.f32 %v1962, %v3258
        %v3347 = vmul.f32 %v1964, %v3258
        %v3348 = vmul.f32 %v1966, %v3258
        %v3349 = vmul.f32 %v1968, %v3258
        %v3350 = vmul.f32 %v1970, %v3258
        %v3351 = vmul.f32 %v1972, %v3258
        %v3352 = vmul.f32 %v1974, %v3258
        %v3353 = vmul.f32 %v1976, %v3258
        %v3354 = vmul.f32 %v1978, %v3258
        %v3355 = vmul.f32 %v1980, %v3258
        %v3356 = vmul.f32 %v1982, %v3258
        %v3357 = vmul.f32 %v1984, %v3258
        %v3358 = vmul.f32 %v1986, %v3258
        %v3359 = vmul.f32 %v1988, %v3262
        %v3360 = vmul.f32 %v1990, %v3262
        %v3361 = vmul.f32 %v1992, %v3262
        %v3362 = vmul.f32 %v1994, %v3262
        %v3363 = vmul.f32 %v1996, %v3262
        %v3364 = vmul.f32 %v1998, %v3262
        %v3365 = vmul.f32 %v2000, %v3262
        %v3366 = vmul.f32 %v2002, %v3262
        %v3367 = vmul.f32 %v2004, %v3262
        %v3368 = vmul.f32 %v2006, %v3262
        %v3369 = vmul.f32 %v2008, %v3262
        %v3370 = vmul.f32 %v2010, %v3262
        %v3371 = vmul.f32 %v2012, %v3262
        %v3372 = vmul.f32 %v2014, %v3262
        %v3373 = vmul.f32 %v2016, %v3262
        %v3374 = vmul.f32 %v2018, %v3262
        %v3375 = vmul.f32 %v2020, %v3266
        %v3376 = vmul.f32 %v2022, %v3266
        %v3377 = vmul.f32 %v2024, %v3266
        %v3378 = vmul.f32 %v2026, %v3266
        %v3379 = vmul.f32 %v2028, %v3266
        %v3380 = vmul.f32 %v2030, %v3266
        %v3381 = vmul.f32 %v2032, %v3266
        %v3382 = vmul.f32 %v2034, %v3266
        %v3383 = vmul.f32 %v2036, %v3266
        %v3384 = vmul.f32 %v2038, %v3266
        %v3385 = vmul.f32 %v2040, %v3266
        %v3386 = vmul.f32 %v2042, %v3266
        %v3387 = vmul.f32 %v2044, %v3266
        %v3388 = vmul.f32 %v2046, %v3266
        %v3389 = vmul.f32 %v2048, %v3266
        %v3390 = vmul.f32 %v2050, %v3266
        %v3391 = vmul.f32 %v2052, %v3270
        %v3392 = vmul.f32 %v2054, %v3270
        %v3393 = vmul.f32 %v2056, %v3270
        %v3394 = vmul.f32 %v2058, %v3270
        %v3395 = vmul.f32 %v2060, %v3270
        %v3396 = vmul.f32 %v2062, %v3270
        %v3397 = vmul.f32 %v2064, %v3270
        %v3398 = vmul.f32 %v2066, %v3270
        %v3399 = vmul.f32 %v2068, %v3270
        %v3400 = vmul.f32 %v2070, %v3270
        %v3401 = vmul.f32 %v2072, %v3270
        %v3402 = vmul.f32 %v2074, %v3270
        %v3403 = vmul.f32 %v2076, %v3270
        %v3404 = vmul.f32 %v2078, %v3270
        %v3405 = vmul.f32 %v2080, %v3270
        %v3406 = vmul.f32 %v2082, %v3270
        %3408 = vset.pattern.permute.xlu0 0
        %3409 = vperm.xlu0 %3408, %v3279
        %v3410 = vpop.permute.xlu0 %3409
        %3413 = vset.pattern.permute.xlu0 0
        %3414 = vperm.xlu0 %3413, %v3280
        %v3415 = vpop.permute.xlu0 %3414
        %3418 = vset.pattern.permute.xlu0 0
        %3419 = vperm.xlu0 %3418, %v3281
        %v3420 = vpop.permute.xlu0 %3419
        %3423 = vset.pattern.permute.xlu0 0
        %3424 = vperm.xlu0 %3423, %v3282
        %v3425 = vpop.permute.xlu0 %3424
        %3428 = vset.pattern.permute.xlu0 0
        %3429 = vperm.xlu0 %3428, %v3283
        %v3430 = vpop.permute.xlu0 %3429
        %3433 = vset.pattern.permute.xlu0 0
        %3434 = vperm.xlu0 %3433, %v3284
        %v3435 = vpop.permute.xlu0 %3434
        %3438 = vset.pattern.permute.xlu0 0
        %3439 = vperm.xlu0 %3438, %v3285
        %v3440 = vpop.permute.xlu0 %3439
        %3443 = vset.pattern.permute.xlu0 0
        %3444 = vperm.xlu0 %3443, %v3286
        %v3445 = vpop.permute.xlu0 %3444
        %3448 = vset.pattern.permute.xlu0 0
        %3449 = vperm.xlu0 %3448, %v3287
        %v3450 = vpop.permute.xlu0 %3449
        %3453 = vset.pattern.permute.xlu0 0
        %3454 = vperm.xlu0 %3453, %v3288
        %v3455 = vpop.permute.xlu0 %3454
        %3458 = vset.pattern.permute.xlu0 0
        %3459 = vperm.xlu0 %3458, %v3289
        %v3460 = vpop.permute.xlu0 %3459
        %3463 = vset.pattern.permute.xlu0 0
        %3464 = vperm.xlu0 %3463, %v3290
        %v3465 = vpop.permute.xlu0 %3464
        %3468 = vset.pattern.permute.xlu0 0
        %3469 = vperm.xlu0 %3468, %v3291
        %v3470 = vpop.permute.xlu0 %3469
        %3473 = vset.pattern.permute.xlu0 0
        %3474 = vperm.xlu0 %3473, %v3292
        %v3475 = vpop.permute.xlu0 %3474
        %3478 = vset.pattern.permute.xlu0 0
        %3479 = vperm.xlu0 %3478, %v3293
        %v3480 = vpop.permute.xlu0 %3479
        %3483 = vset.pattern.permute.xlu0 0
        %3484 = vperm.xlu0 %3483, %v3294
        %v3485 = vpop.permute.xlu0 %3484
        %3488 = vset.pattern.permute.xlu0 0
        %3489 = vperm.xlu0 %3488, %v3295
        %v3490 = vpop.permute.xlu0 %3489
        %3493 = vset.pattern.permute.xlu0 0
        %3494 = vperm.xlu0 %3493, %v3296
        %v3495 = vpop.permute.xlu0 %3494
        %3498 = vset.pattern.permute.xlu0 0
        %3499 = vperm.xlu0 %3498, %v3297
        %v3500 = vpop.permute.xlu0 %3499
        %3503 = vset.pattern.permute.xlu0 0
        %3504 = vperm.xlu0 %3503, %v3298
        %v3505 = vpop.permute.xlu0 %3504
        %3508 = vset.pattern.permute.xlu0 0
        %3509 = vperm.xlu0 %3508, %v3299
        %v3510 = vpop.permute.xlu0 %3509
        %3513 = vset.pattern.permute.xlu0 0
        %3514 = vperm.xlu0 %3513, %v3300
        %v3515 = vpop.permute.xlu0 %3514
        %3518 = vset.pattern.permute.xlu0 0
        %3519 = vperm.xlu0 %3518, %v3301
        %v3520 = vpop.permute.xlu0 %3519
        %3523 = vset.pattern.permute.xlu0 0
        %3524 = vperm.xlu0 %3523, %v3302
        %v3525 = vpop.permute.xlu0 %3524
        %3528 = vset.pattern.permute.xlu0 0
        %3529 = vperm.xlu0 %3528, %v3303
        %v3530 = vpop.permute.xlu0 %3529
        %3533 = vset.pattern.permute.xlu0 0
        %3534 = vperm.xlu0 %3533, %v3304
        %v3535 = vpop.permute.xlu0 %3534
        %3538 = vset.pattern.permute.xlu0 0
        %3539 = vperm.xlu0 %3538, %v3305
        %v3540 = vpop.permute.xlu0 %3539
        %3543 = vset.pattern.permute.xlu0 0
        %3544 = vperm.xlu0 %3543, %v3306
        %v3545 = vpop.permute.xlu0 %3544
        %3548 = vset.pattern.permute.xlu0 0
        %3549 = vperm.xlu0 %3548, %v3307
        %v3550 = vpop.permute.xlu0 %3549
        %3553 = vset.pattern.permute.xlu0 0
        %3554 = vperm.xlu0 %3553, %v3308
        %v3555 = vpop.permute.xlu0 %3554
        %3558 = vset.pattern.permute.xlu0 0
        %3559 = vperm.xlu0 %3558, %v3309
        %v3560 = vpop.permute.xlu0 %3559
        %3563 = vset.pattern.permute.xlu0 0
        %3564 = vperm.xlu0 %3563, %v3310
        %v3565 = vpop.permute.xlu0 %3564
        %3568 = vset.pattern.permute.xlu0 0
        %3569 = vperm.xlu0 %3568, %v3311
        %v3570 = vpop.permute.xlu0 %3569
        %3573 = vset.pattern.permute.xlu0 0
        %3574 = vperm.xlu0 %3573, %v3312
        %v3575 = vpop.permute.xlu0 %3574
        %3578 = vset.pattern.permute.xlu0 0
        %3579 = vperm.xlu0 %3578, %v3313
        %v3580 = vpop.permute.xlu0 %3579
        %3583 = vset.pattern.permute.xlu0 0
        %3584 = vperm.xlu0 %3583, %v3314
        %v3585 = vpop.permute.xlu0 %3584
        %3588 = vset.pattern.permute.xlu0 0
        %3589 = vperm.xlu0 %3588, %v3315
        %v3590 = vpop.permute.xlu0 %3589
        %3593 = vset.pattern.permute.xlu0 0
        %3594 = vperm.xlu0 %3593, %v3316
        %v3595 = vpop.permute.xlu0 %3594
        %3598 = vset.pattern.permute.xlu0 0
        %3599 = vperm.xlu0 %3598, %v3317
        %v3600 = vpop.permute.xlu0 %3599
        %3603 = vset.pattern.permute.xlu0 0
        %3604 = vperm.xlu0 %3603, %v3318
        %v3605 = vpop.permute.xlu0 %3604
        %3608 = vset.pattern.permute.xlu0 0
        %3609 = vperm.xlu0 %3608, %v3319
        %v3610 = vpop.permute.xlu0 %3609
        %3613 = vset.pattern.permute.xlu0 0
        %3614 = vperm.xlu0 %3613, %v3320
        %v3615 = vpop.permute.xlu0 %3614
        %3618 = vset.pattern.permute.xlu0 0
        %3619 = vperm.xlu0 %3618, %v3321
        %v3620 = vpop.permute.xlu0 %3619
        %3623 = vset.pattern.permute.xlu0 0
        %3624 = vperm.xlu0 %3623, %v3322
        %v3625 = vpop.permute.xlu0 %3624
        %3628 = vset.pattern.permute.xlu0 0
        %3629 = vperm.xlu0 %3628, %v3323
        %v3630 = vpop.permute.xlu0 %3629
        %3633 = vset.pattern.permute.xlu0 0
        %3634 = vperm.xlu0 %3633, %v3324
        %v3635 = vpop.permute.xlu0 %3634
        %3638 = vset.pattern.permute.xlu0 0
        %3639 = vperm.xlu0 %3638, %v3325
        %v3640 = vpop.permute.xlu0 %3639
        %3643 = vset.pattern.permute.xlu0 0
        %3644 = vperm.xlu0 %3643, %v3326
        %v3645 = vpop.permute.xlu0 %3644
        %3648 = vset.pattern.permute.xlu0 0
        %3649 = vperm.xlu0 %3648, %v3327
        %v3650 = vpop.permute.xlu0 %3649
        %3653 = vset.pattern.permute.xlu0 0
        %3654 = vperm.xlu0 %3653, %v3328
        %v3655 = vpop.permute.xlu0 %3654
        %3658 = vset.pattern.permute.xlu0 0
        %3659 = vperm.xlu0 %3658, %v3329
        %v3660 = vpop.permute.xlu0 %3659
        %3663 = vset.pattern.permute.xlu0 0
        %3664 = vperm.xlu0 %3663, %v3330
        %v3665 = vpop.permute.xlu0 %3664
        %3668 = vset.pattern.permute.xlu0 0
        %3669 = vperm.xlu0 %3668, %v3331
        %v3670 = vpop.permute.xlu0 %3669
        %3673 = vset.pattern.permute.xlu0 0
        %3674 = vperm.xlu0 %3673, %v3332
        %v3675 = vpop.permute.xlu0 %3674
        %3678 = vset.pattern.permute.xlu0 0
        %3679 = vperm.xlu0 %3678, %v3333
        %v3680 = vpop.permute.xlu0 %3679
        %3683 = vset.pattern.permute.xlu0 0
        %3684 = vperm.xlu0 %3683, %v3334
        %v3685 = vpop.permute.xlu0 %3684
        %3688 = vset.pattern.permute.xlu0 0
        %3689 = vperm.xlu0 %3688, %v3335
        %v3690 = vpop.permute.xlu0 %3689
        %3693 = vset.pattern.permute.xlu0 0
        %3694 = vperm.xlu0 %3693, %v3336
        %v3695 = vpop.permute.xlu0 %3694
        %3698 = vset.pattern.permute.xlu0 0
        %3699 = vperm.xlu0 %3698, %v3337
        %v3700 = vpop.permute.xlu0 %3699
        %3703 = vset.pattern.permute.xlu0 0
        %3704 = vperm.xlu0 %3703, %v3338
        %v3705 = vpop.permute.xlu0 %3704
        %3708 = vset.pattern.permute.xlu0 0
        %3709 = vperm.xlu0 %3708, %v3339
        %v3710 = vpop.permute.xlu0 %3709
        %3713 = vset.pattern.permute.xlu0 0
        %3714 = vperm.xlu0 %3713, %v3340
        %v3715 = vpop.permute.xlu0 %3714
        %3718 = vset.pattern.permute.xlu0 0
        %3719 = vperm.xlu0 %3718, %v3341
        %v3720 = vpop.permute.xlu0 %3719
        %3723 = vset.pattern.permute.xlu0 0
        %3724 = vperm.xlu0 %3723, %v3342
        %v3725 = vpop.permute.xlu0 %3724
        %3728 = vset.pattern.permute.xlu0 0
        %3729 = vperm.xlu0 %3728, %v3343
        %v3730 = vpop.permute.xlu0 %3729
        %3733 = vset.pattern.permute.xlu0 0
        %3734 = vperm.xlu0 %3733, %v3344
        %v3735 = vpop.permute.xlu0 %3734
        %3738 = vset.pattern.permute.xlu0 0
        %3739 = vperm.xlu0 %3738, %v3345
        %v3740 = vpop.permute.xlu0 %3739
        %3743 = vset.pattern.permute.xlu0 0
        %3744 = vperm.xlu0 %3743, %v3346
        %v3745 = vpop.permute.xlu0 %3744
        %3748 = vset.pattern.permute.xlu0 0
        %3749 = vperm.xlu0 %3748, %v3347
        %v3750 = vpop.permute.xlu0 %3749
        %3753 = vset.pattern.permute.xlu0 0
        %3754 = vperm.xlu0 %3753, %v3348
        %v3755 = vpop.permute.xlu0 %3754
        %3758 = vset.pattern.permute.xlu0 0
        %3759 = vperm.xlu0 %3758, %v3349
        %v3760 = vpop.permute.xlu0 %3759
        %3763 = vset.pattern.permute.xlu0 0
        %3764 = vperm.xlu0 %3763, %v3350
        %v3765 = vpop.permute.xlu0 %3764
        %3768 = vset.pattern.permute.xlu0 0
        %3769 = vperm.xlu0 %3768, %v3351
        %v3770 = vpop.permute.xlu0 %3769
        %3773 = vset.pattern.permute.xlu0 0
        %3774 = vperm.xlu0 %3773, %v3352
        %v3775 = vpop.permute.xlu0 %3774
        %3778 = vset.pattern.permute.xlu0 0
        %3779 = vperm.xlu0 %3778, %v3353
        %v3780 = vpop.permute.xlu0 %3779
        %3783 = vset.pattern.permute.xlu0 0
        %3784 = vperm.xlu0 %3783, %v3354
        %v3785 = vpop.permute.xlu0 %3784
        %3788 = vset.pattern.permute.xlu0 0
        %3789 = vperm.xlu0 %3788, %v3355
        %v3790 = vpop.permute.xlu0 %3789
        %3793 = vset.pattern.permute.xlu0 0
        %3794 = vperm.xlu0 %3793, %v3356
        %v3795 = vpop.permute.xlu0 %3794
        %3798 = vset.pattern.permute.xlu0 0
        %3799 = vperm.xlu0 %3798, %v3357
        %v3800 = vpop.permute.xlu0 %3799
        %3803 = vset.pattern.permute.xlu0 0
        %3804 = vperm.xlu0 %3803, %v3358
        %v3805 = vpop.permute.xlu0 %3804
        %3808 = vset.pattern.permute.xlu0 0
        %3809 = vperm.xlu0 %3808, %v3359
        %v3810 = vpop.permute.xlu0 %3809
        %3813 = vset.pattern.permute.xlu0 0
        %3814 = vperm.xlu0 %3813, %v3360
        %v3815 = vpop.permute.xlu0 %3814
        %3818 = vset.pattern.permute.xlu0 0
        %3819 = vperm.xlu0 %3818, %v3361
        %v3820 = vpop.permute.xlu0 %3819
        %3823 = vset.pattern.permute.xlu0 0
        %3824 = vperm.xlu0 %3823, %v3362
        %v3825 = vpop.permute.xlu0 %3824
        %3828 = vset.pattern.permute.xlu0 0
        %3829 = vperm.xlu0 %3828, %v3363
        %v3830 = vpop.permute.xlu0 %3829
        %3833 = vset.pattern.permute.xlu0 0
        %3834 = vperm.xlu0 %3833, %v3364
        %v3835 = vpop.permute.xlu0 %3834
        %3838 = vset.pattern.permute.xlu0 0
        %3839 = vperm.xlu0 %3838, %v3365
        %v3840 = vpop.permute.xlu0 %3839
        %3843 = vset.pattern.permute.xlu0 0
        %3844 = vperm.xlu0 %3843, %v3366
        %v3845 = vpop.permute.xlu0 %3844
        %3848 = vset.pattern.permute.xlu0 0
        %3849 = vperm.xlu0 %3848, %v3367
        %v3850 = vpop.permute.xlu0 %3849
        %3853 = vset.pattern.permute.xlu0 0
        %3854 = vperm.xlu0 %3853, %v3368
        %v3855 = vpop.permute.xlu0 %3854
        %3858 = vset.pattern.permute.xlu0 0
        %3859 = vperm.xlu0 %3858, %v3369
        %v3860 = vpop.permute.xlu0 %3859
        %3863 = vset.pattern.permute.xlu0 0
        %3864 = vperm.xlu0 %3863, %v3370
        %v3865 = vpop.permute.xlu0 %3864
        %3868 = vset.pattern.permute.xlu0 0
        %3869 = vperm.xlu0 %3868, %v3371
        %v3870 = vpop.permute.xlu0 %3869
        %3873 = vset.pattern.permute.xlu0 0
        %3874 = vperm.xlu0 %3873, %v3372
        %v3875 = vpop.permute.xlu0 %3874
        %3878 = vset.pattern.permute.xlu0 0
        %3879 = vperm.xlu0 %3878, %v3373
        %v3880 = vpop.permute.xlu0 %3879
        %3883 = vset.pattern.permute.xlu0 0
        %3884 = vperm.xlu0 %3883, %v3374
        %v3885 = vpop.permute.xlu0 %3884
        %3888 = vset.pattern.permute.xlu0 0
        %3889 = vperm.xlu0 %3888, %v3375
        %v3890 = vpop.permute.xlu0 %3889
        %3893 = vset.pattern.permute.xlu0 0
        %3894 = vperm.xlu0 %3893, %v3376
        %v3895 = vpop.permute.xlu0 %3894
        %3898 = vset.pattern.permute.xlu0 0
        %3899 = vperm.xlu0 %3898, %v3377
        %v3900 = vpop.permute.xlu0 %3899
        %3903 = vset.pattern.permute.xlu0 0
        %3904 = vperm.xlu0 %3903, %v3378
        %v3905 = vpop.permute.xlu0 %3904
        %3908 = vset.pattern.permute.xlu0 0
        %3909 = vperm.xlu0 %3908, %v3379
        %v3910 = vpop.permute.xlu0 %3909
        %3913 = vset.pattern.permute.xlu0 0
        %3914 = vperm.xlu0 %3913, %v3380
        %v3915 = vpop.permute.xlu0 %3914
        %3918 = vset.pattern.permute.xlu0 0
        %3919 = vperm.xlu0 %3918, %v3381
        %v3920 = vpop.permute.xlu0 %3919
        %3923 = vset.pattern.permute.xlu0 0
        %3924 = vperm.xlu0 %3923, %v3382
        %v3925 = vpop.permute.xlu0 %3924
        %3928 = vset.pattern.permute.xlu0 0
        %3929 = vperm.xlu0 %3928, %v3383
        %v3930 = vpop.permute.xlu0 %3929
        %3933 = vset.pattern.permute.xlu0 0
        %3934 = vperm.xlu0 %3933, %v3384
        %v3935 = vpop.permute.xlu0 %3934
        %3938 = vset.pattern.permute.xlu0 0
        %3939 = vperm.xlu0 %3938, %v3385
        %v3940 = vpop.permute.xlu0 %3939
        %3943 = vset.pattern.permute.xlu0 0
        %3944 = vperm.xlu0 %3943, %v3386
        %v3945 = vpop.permute.xlu0 %3944
        %3948 = vset.pattern.permute.xlu0 0
        %3949 = vperm.xlu0 %3948, %v3387
        %v3950 = vpop.permute.xlu0 %3949
        %3953 = vset.pattern.permute.xlu0 0
        %3954 = vperm.xlu0 %3953, %v3388
        %v3955 = vpop.permute.xlu0 %3954
        %3958 = vset.pattern.permute.xlu0 0
        %3959 = vperm.xlu0 %3958, %v3389
        %v3960 = vpop.permute.xlu0 %3959
        %3963 = vset.pattern.permute.xlu0 0
        %3964 = vperm.xlu0 %3963, %v3390
        %v3965 = vpop.permute.xlu0 %3964
        %3968 = vset.pattern.permute.xlu0 0
        %3969 = vperm.xlu0 %3968, %v3391
        %v3970 = vpop.permute.xlu0 %3969
        %3973 = vset.pattern.permute.xlu0 0
        %3974 = vperm.xlu0 %3973, %v3392
        %v3975 = vpop.permute.xlu0 %3974
        %3978 = vset.pattern.permute.xlu0 0
        %3979 = vperm.xlu0 %3978, %v3393
        %v3980 = vpop.permute.xlu0 %3979
        %3983 = vset.pattern.permute.xlu0 0
        %3984 = vperm.xlu0 %3983, %v3394
        %v3985 = vpop.permute.xlu0 %3984
        %3988 = vset.pattern.permute.xlu0 0
        %3989 = vperm.xlu0 %3988, %v3395
        %v3990 = vpop.permute.xlu0 %3989
        %3993 = vset.pattern.permute.xlu0 0
        %3994 = vperm.xlu0 %3993, %v3396
        %v3995 = vpop.permute.xlu0 %3994
        %3998 = vset.pattern.permute.xlu0 0
        %3999 = vperm.xlu0 %3998, %v3397
        %v4000 = vpop.permute.xlu0 %3999
        %4003 = vset.pattern.permute.xlu0 0
        %4004 = vperm.xlu0 %4003, %v3398
        %v4005 = vpop.permute.xlu0 %4004
        %4008 = vset.pattern.permute.xlu0 0
        %4009 = vperm.xlu0 %4008, %v3399
        %v4010 = vpop.permute.xlu0 %4009
        %4013 = vset.pattern.permute.xlu0 0
        %4014 = vperm.xlu0 %4013, %v3400
        %v4015 = vpop.permute.xlu0 %4014
        %4018 = vset.pattern.permute.xlu0 0
        %4019 = vperm.xlu0 %4018, %v3401
        %v4020 = vpop.permute.xlu0 %4019
        %4023 = vset.pattern.permute.xlu0 0
        %4024 = vperm.xlu0 %4023, %v3402
        %v4025 = vpop.permute.xlu0 %4024
        %4028 = vset.pattern.permute.xlu0 0
        %4029 = vperm.xlu0 %4028, %v3403
        %v4030 = vpop.permute.xlu0 %4029
        %4033 = vset.pattern.permute.xlu0 0
        %4034 = vperm.xlu0 %4033, %v3404
        %v4035 = vpop.permute.xlu0 %4034
        %4038 = vset.pattern.permute.xlu0 0
        %4039 = vperm.xlu0 %4038, %v3405
        %v4040 = vpop.permute.xlu0 %4039
        %4043 = vset.pattern.permute.xlu0 0
        %4044 = vperm.xlu0 %4043, %v3406
        %v4045 = vpop.permute.xlu0 %4044
        %v4047 = vmul.f32 %v202, %v3410
        %v4048 = vmul.f32 %v203, %v3415
        %v4049 = vmul.f32 %v204, %v3420
        %v4050 = vmul.f32 %v205, %v3425
        %v4051 = vmul.f32 %v206, %v3430
        %v4052 = vmul.f32 %v207, %v3435
        %v4053 = vmul.f32 %v208, %v3440
        %v4054 = vmul.f32 %v209, %v3445
        %v4055 = vmul.f32 %v210, %v3450
        %v4056 = vmul.f32 %v211, %v3455
        %v4057 = vmul.f32 %v212, %v3460
        %v4058 = vmul.f32 %v213, %v3465
        %v4059 = vmul.f32 %v214, %v3470
        %v4060 = vmul.f32 %v215, %v3475
        %v4061 = vmul.f32 %v216, %v3480
        %v4062 = vmul.f32 %v217, %v3485
        %v4063 = vmul.f32 %v218, %v3490
        %v4064 = vmul.f32 %v219, %v3495
        %v4065 = vmul.f32 %v220, %v3500
        %v4066 = vmul.f32 %v221, %v3505
        %v4067 = vmul.f32 %v222, %v3510
        %v4068 = vmul.f32 %v223, %v3515
        %v4069 = vmul.f32 %v224, %v3520
        %v4070 = vmul.f32 %v225, %v3525
        %v4071 = vmul.f32 %v226, %v3530
        %v4072 = vmul.f32 %v227, %v3535
        %v4073 = vmul.f32 %v228, %v3540
        %v4074 = vmul.f32 %v229, %v3545
        %v4075 = vmul.f32 %v230, %v3550
        %v4076 = vmul.f32 %v231, %v3555
        %v4077 = vmul.f32 %v232, %v3560
        %v4078 = vmul.f32 %v233, %v3565
        %v4079 = vmul.f32 %v234, %v3570
        %v4080 = vmul.f32 %v235, %v3575
        %v4081 = vmul.f32 %v236, %v3580
        %v4082 = vmul.f32 %v237, %v3585
        %v4083 = vmul.f32 %v238, %v3590
        %v4084 = vmul.f32 %v239, %v3595
        %v4085 = vmul.f32 %v240, %v3600
        %v4086 = vmul.f32 %v241, %v3605
        %v4087 = vmul.f32 %v242, %v3610
        %v4088 = vmul.f32 %v243, %v3615
        %v4089 = vmul.f32 %v244, %v3620
        %v4090 = vmul.f32 %v245, %v3625
        %v4091 = vmul.f32 %v246, %v3630
        %v4092 = vmul.f32 %v247, %v3635
        %v4093 = vmul.f32 %v248, %v3640
        %v4094 = vmul.f32 %v249, %v3645
        %v4095 = vmul.f32 %v250, %v3650
        %v4096 = vmul.f32 %v251, %v3655
        %v4097 = vmul.f32 %v252, %v3660
        %v4098 = vmul.f32 %v253, %v3665
        %v4099 = vmul.f32 %v254, %v3670
        %v4100 = vmul.f32 %v255, %v3675
        %v4101 = vmul.f32 %v256, %v3680
        %v4102 = vmul.f32 %v257, %v3685
        %v4103 = vmul.f32 %v258, %v3690
        %v4104 = vmul.f32 %v259, %v3695
        %v4105 = vmul.f32 %v260, %v3700
        %v4106 = vmul.f32 %v261, %v3705
        %v4107 = vmul.f32 %v262, %v3710
        %v4108 = vmul.f32 %v263, %v3715
        %v4109 = vmul.f32 %v264, %v3720
        %v4110 = vmul.f32 %v265, %v3725
        %v4111 = vmul.f32 %v266, %v3730
        %v4112 = vmul.f32 %v267, %v3735
        %v4113 = vmul.f32 %v268, %v3740
        %v4114 = vmul.f32 %v269, %v3745
        %v4115 = vmul.f32 %v270, %v3750
        %v4116 = vmul.f32 %v271, %v3755
        %v4117 = vmul.f32 %v272, %v3760
        %v4118 = vmul.f32 %v273, %v3765
        %v4119 = vmul.f32 %v274, %v3770
        %v4120 = vmul.f32 %v275, %v3775
        %v4121 = vmul.f32 %v276, %v3780
        %v4122 = vmul.f32 %v277, %v3785
        %v4123 = vmul.f32 %v278, %v3790
        %v4124 = vmul.f32 %v279, %v3795
        %v4125 = vmul.f32 %v280, %v3800
        %v4126 = vmul.f32 %v281, %v3805
        %v4127 = vmul.f32 %v282, %v3810
        %v4128 = vmul.f32 %v283, %v3815
        %v4129 = vmul.f32 %v284, %v3820
        %v4130 = vmul.f32 %v285, %v3825
        %v4131 = vmul.f32 %v286, %v3830
        %v4132 = vmul.f32 %v287, %v3835
        %v4133 = vmul.f32 %v288, %v3840
        %v4134 = vmul.f32 %v289, %v3845
        %v4135 = vmul.f32 %v290, %v3850
        %v4136 = vmul.f32 %v291, %v3855
        %v4137 = vmul.f32 %v292, %v3860
        %v4138 = vmul.f32 %v293, %v3865
        %v4139 = vmul.f32 %v294, %v3870
        %v4140 = vmul.f32 %v295, %v3875
        %v4141 = vmul.f32 %v296, %v3880
        %v4142 = vmul.f32 %v297, %v3885
        %v4143 = vmul.f32 %v298, %v3890
        %v4144 = vmul.f32 %v299, %v3895
        %v4145 = vmul.f32 %v300, %v3900
        %v4146 = vmul.f32 %v301, %v3905
        %v4147 = vmul.f32 %v302, %v3910
        %v4148 = vmul.f32 %v303, %v3915
        %v4149 = vmul.f32 %v304, %v3920
        %v4150 = vmul.f32 %v305, %v3925
        %v4151 = vmul.f32 %v306, %v3930
        %v4152 = vmul.f32 %v307, %v3935
        %v4153 = vmul.f32 %v308, %v3940
        %v4154 = vmul.f32 %v309, %v3945
        %v4155 = vmul.f32 %v310, %v3950
        %v4156 = vmul.f32 %v311, %v3955
        %v4157 = vmul.f32 %v312, %v3960
        %v4158 = vmul.f32 %v313, %v3965
        %v4159 = vmul.f32 %v314, %v3970
        %v4160 = vmul.f32 %v315, %v3975
        %v4161 = vmul.f32 %v316, %v3980
        %v4162 = vmul.f32 %v317, %v3985
        %v4163 = vmul.f32 %v318, %v3990
        %v4164 = vmul.f32 %v319, %v3995
        %v4165 = vmul.f32 %v320, %v4000
        %v4166 = vmul.f32 %v321, %v4005
        %v4167 = vmul.f32 %v322, %v4010
        %v4168 = vmul.f32 %v323, %v4015
        %v4169 = vmul.f32 %v324, %v4020
        %v4170 = vmul.f32 %v325, %v4025
        %v4171 = vmul.f32 %v326, %v4030
        %v4172 = vmul.f32 %v327, %v4035
        %v4173 = vmul.f32 %v328, %v4040
        %v4174 = vmul.f32 %v329, %v4045
        %v4175 = vadd.f32 %v4047, %v4048
        %v4176 = vadd.f32 %v4175, %v4049
        %v4177 = vadd.f32 %v4176, %v4050
        %v4178 = vadd.f32 %v4177, %v4051
        %v4179 = vadd.f32 %v4178, %v4052
        %v4180 = vadd.f32 %v4179, %v4053
        %v4181 = vadd.f32 %v4180, %v4054
        %v4182 = vadd.f32 %v4181, %v4055
        %v4183 = vadd.f32 %v4182, %v4056
        %v4184 = vadd.f32 %v4183, %v4057
        %v4185 = vadd.f32 %v4184, %v4058
        %v4186 = vadd.f32 %v4185, %v4059
        %v4187 = vadd.f32 %v4186, %v4060
        %v4188 = vadd.f32 %v4187, %v4061
        %v4189 = vadd.f32 %v4188, %v4062
        %v4190 = vrot.slane %v4189, 4
        %v4191 = vadd.f32 %v4189, %v4190
        %v4192 = vrot.slane %v4191, 2
        %v4193 = vadd.f32 %v4191, %v4192
        %v4194 = vrot.slane %v4193, 1
        %v4195 = vadd.f32 %v4193, %v4194
        %v4196 = vadd.f32 %v4063, %v4064
        %v4197 = vadd.f32 %v4196, %v4065
        %v4198 = vadd.f32 %v4197, %v4066
        %v4199 = vadd.f32 %v4198, %v4067
        %v4200 = vadd.f32 %v4199, %v4068
        %v4201 = vadd.f32 %v4200, %v4069
        %v4202 = vadd.f32 %v4201, %v4070
        %v4203 = vadd.f32 %v4202, %v4071
        %v4204 = vadd.f32 %v4203, %v4072
        %v4205 = vadd.f32 %v4204, %v4073
        %v4206 = vadd.f32 %v4205, %v4074
        %v4207 = vadd.f32 %v4206, %v4075
        %v4208 = vadd.f32 %v4207, %v4076
        %v4209 = vadd.f32 %v4208, %v4077
        %v4210 = vadd.f32 %v4209, %v4078
        %v4211 = vrot.slane %v4210, 4
        %v4212 = vadd.f32 %v4210, %v4211
        %v4213 = vrot.slane %v4212, 2
        %v4214 = vadd.f32 %v4212, %v4213
        %v4215 = vrot.slane %v4214, 1
        %v4216 = vadd.f32 %v4214, %v4215
        %v4217 = vadd.f32 %v4079, %v4080
        %v4218 = vadd.f32 %v4217, %v4081
        %v4219 = vadd.f32 %v4218, %v4082
        %v4220 = vadd.f32 %v4219, %v4083
        %v4221 = vadd.f32 %v4220, %v4084
        %v4222 = vadd.f32 %v4221, %v4085
        %v4223 = vadd.f32 %v4222, %v4086
        %v4224 = vadd.f32 %v4223, %v4087
        %v4225 = vadd.f32 %v4224, %v4088
        %v4226 = vadd.f32 %v4225, %v4089
        %v4227 = vadd.f32 %v4226, %v4090
        %v4228 = vadd.f32 %v4227, %v4091
        %v4229 = vadd.f32 %v4228, %v4092
        %v4230 = vadd.f32 %v4229, %v4093
        %v4231 = vadd.f32 %v4230, %v4094
        %v4232 = vrot.slane %v4231, 4
        %v4233 = vadd.f32 %v4231, %v4232
        %v4234 = vrot.slane %v4233, 2
        %v4235 = vadd.f32 %v4233, %v4234
        %v4236 = vrot.slane %v4235, 1
        %v4237 = vadd.f32 %v4235, %v4236
        %v4238 = vadd.f32 %v4095, %v4096
        %v4239 = vadd.f32 %v4238, %v4097
        %v4240 = vadd.f32 %v4239, %v4098
        %v4241 = vadd.f32 %v4240, %v4099
        %v4242 = vadd.f32 %v4241, %v4100
        %v4243 = vadd.f32 %v4242, %v4101
        %v4244 = vadd.f32 %v4243, %v4102
        %v4245 = vadd.f32 %v4244, %v4103
        %v4246 = vadd.f32 %v4245, %v4104
        %v4247 = vadd.f32 %v4246, %v4105
        %v4248 = vadd.f32 %v4247, %v4106
        %v4249 = vadd.f32 %v4248, %v4107
        %v4250 = vadd.f32 %v4249, %v4108
        %v4251 = vadd.f32 %v4250, %v4109
        %v4252 = vadd.f32 %v4251, %v4110
        %v4253 = vrot.slane %v4252, 4
        %v4254 = vadd.f32 %v4252, %v4253
        %v4255 = vrot.slane %v4254, 2
        %v4256 = vadd.f32 %v4254, %v4255
        %v4257 = vrot.slane %v4256, 1
        %v4258 = vadd.f32 %v4256, %v4257
        %v4259 = vadd.f32 %v4111, %v4112
        %v4260 = vadd.f32 %v4259, %v4113
        %v4261 = vadd.f32 %v4260, %v4114
        %v4262 = vadd.f32 %v4261, %v4115
        %v4263 = vadd.f32 %v4262, %v4116
        %v4264 = vadd.f32 %v4263, %v4117
        %v4265 = vadd.f32 %v4264, %v4118
        %v4266 = vadd.f32 %v4265, %v4119
        %v4267 = vadd.f32 %v4266, %v4120
        %v4268 = vadd.f32 %v4267, %v4121
        %v4269 = vadd.f32 %v4268, %v4122
        %v4270 = vadd.f32 %v4269, %v4123
        %v4271 = vadd.f32 %v4270, %v4124
        %v4272 = vadd.f32 %v4271, %v4125
        %v4273 = vadd.f32 %v4272, %v4126
        %v4274 = vrot.slane %v4273, 4
        %v4275 = vadd.f32 %v4273, %v4274
        %v4276 = vrot.slane %v4275, 2
        %v4277 = vadd.f32 %v4275, %v4276
        %v4278 = vrot.slane %v4277, 1
        %v4279 = vadd.f32 %v4277, %v4278
        %v4280 = vadd.f32 %v4127, %v4128
        %v4281 = vadd.f32 %v4280, %v4129
        %v4282 = vadd.f32 %v4281, %v4130
        %v4283 = vadd.f32 %v4282, %v4131
        %v4284 = vadd.f32 %v4283, %v4132
        %v4285 = vadd.f32 %v4284, %v4133
        %v4286 = vadd.f32 %v4285, %v4134
        %v4287 = vadd.f32 %v4286, %v4135
        %v4288 = vadd.f32 %v4287, %v4136
        %v4289 = vadd.f32 %v4288, %v4137
        %v4290 = vadd.f32 %v4289, %v4138
        %v4291 = vadd.f32 %v4290, %v4139
        %v4292 = vadd.f32 %v4291, %v4140
        %v4293 = vadd.f32 %v4292, %v4141
        %v4294 = vadd.f32 %v4293, %v4142
        %v4295 = vrot.slane %v4294, 4
        %v4296 = vadd.f32 %v4294, %v4295
        %v4297 = vrot.slane %v4296, 2
        %v4298 = vadd.f32 %v4296, %v4297
        %v4299 = vrot.slane %v4298, 1
        %v4300 = vadd.f32 %v4298, %v4299
        %v4301 = vadd.f32 %v4143, %v4144
        %v4302 = vadd.f32 %v4301, %v4145
        %v4303 = vadd.f32 %v4302, %v4146
        %v4304 = vadd.f32 %v4303, %v4147
        %v4305 = vadd.f32 %v4304, %v4148
        %v4306 = vadd.f32 %v4305, %v4149
        %v4307 = vadd.f32 %v4306, %v4150
        %v4308 = vadd.f32 %v4307, %v4151
        %v4309 = vadd.f32 %v4308, %v4152
        %v4310 = vadd.f32 %v4309, %v4153
        %v4311 = vadd.f32 %v4310, %v4154
        %v4312 = vadd.f32 %v4311, %v4155
        %v4313 = vadd.f32 %v4312, %v4156
        %v4314 = vadd.f32 %v4313, %v4157
        %v4315 = vadd.f32 %v4314, %v4158
        %v4316 = vrot.slane %v4315, 4
        %v4317 = vadd.f32 %v4315, %v4316
        %v4318 = vrot.slane %v4317, 2
        %v4319 = vadd.f32 %v4317, %v4318
        %v4320 = vrot.slane %v4319, 1
        %v4321 = vadd.f32 %v4319, %v4320
        %v4322 = vadd.f32 %v4159, %v4160
        %v4323 = vadd.f32 %v4322, %v4161
        %v4324 = vadd.f32 %v4323, %v4162
        %v4325 = vadd.f32 %v4324, %v4163
        %v4326 = vadd.f32 %v4325, %v4164
        %v4327 = vadd.f32 %v4326, %v4165
        %v4328 = vadd.f32 %v4327, %v4166
        %v4329 = vadd.f32 %v4328, %v4167
        %v4330 = vadd.f32 %v4329, %v4168
        %v4331 = vadd.f32 %v4330, %v4169
        %v4332 = vadd.f32 %v4331, %v4170
        %v4333 = vadd.f32 %v4332, %v4171
        %v4334 = vadd.f32 %v4333, %v4172
        %v4335 = vadd.f32 %v4334, %v4173
        %v4336 = vadd.f32 %v4335, %v4174
        %v4337 = vrot.slane %v4336, 4
        %v4338 = vadd.f32 %v4336, %v4337
        %v4339 = vrot.slane %v4338, 2
        %v4340 = vadd.f32 %v4338, %v4339
        %v4341 = vrot.slane %v4340, 1
        %v4342 = vadd.f32 %v4340, %v4341
        %v4351 = vsel %vm1641, %v4216, %v4195
        %v4352 = vsel %vm1643, %v4237, %v4351
        %v4353 = vsel %vm1645, %v4258, %v4352
        %v4354 = vsel %vm1647, %v4279, %v4353
        %v4355 = vsel %vm1649, %v4300, %v4354
        %v4356 = vsel %vm1651, %v4321, %v4355
        %v4357 = vsel %vm1653, %v4342, %v4356
        %4359 = vst [vmem:[%s193] sm:$0xff] %v4357
        %v4360 = vlaneseq
        %v4361 = vshrl.u32 %v4360, 7
        %v4362 = vsub.s32 %v978, %v4361
        %v4363 = vrot.slane %v3410, %v4362
        %v4364 = vlaneseq
        %v4365 = vshrl.u32 %v4364, 7
        %v4366 = vsub.s32 %v983, %v4365
        %v4367 = vrot.slane %v3415, %v4366
        %v4368 = vsel %vm988, %v4367, %v4363
        %v4369 = vlaneseq
        %v4370 = vshrl.u32 %v4369, 7
        %v4371 = vsub.s32 %v990, %v4370
        %v4372 = vrot.slane %v3420, %v4371
        %v4373 = vsel %vm995, %v4372, %v4368
        %v4374 = vlaneseq
        %v4375 = vshrl.u32 %v4374, 7
        %v4376 = vsub.s32 %v997, %v4375
        %v4377 = vrot.slane %v3425, %v4376
        %v4378 = vsel %vm1002, %v4377, %v4373
        %v4379 = vlaneseq
        %v4380 = vshrl.u32 %v4379, 7
        %v4381 = vsub.s32 %v1004, %v4380
        %v4382 = vrot.slane %v3430, %v4381
        %v4383 = vsel %vm1009, %v4382, %v4378
        %v4384 = vlaneseq
        %v4385 = vshrl.u32 %v4384, 7
        %v4386 = vsub.s32 %v1011, %v4385
        %v4387 = vrot.slane %v3435, %v4386
        %v4388 = vsel %vm1016, %v4387, %v4383
        %v4389 = vlaneseq
        %v4390 = vshrl.u32 %v4389, 7
        %v4391 = vsub.s32 %v1018, %v4390
        %v4392 = vrot.slane %v3440, %v4391
        %v4393 = vsel %vm1023, %v4392, %v4388
        %v4394 = vlaneseq
        %v4395 = vshrl.u32 %v4394, 7
        %v4396 = vsub.s32 %v1025, %v4395
        %v4397 = vrot.slane %v3445, %v4396
        %v4398 = vsel %vm1030, %v4397, %v4393
        %v4399 = vlaneseq
        %v4400 = vshrl.u32 %v4399, 7
        %v4401 = vsub.s32 %v1032, %v4400
        %v4402 = vrot.slane %v3450, %v4401
        %v4403 = vsel %vm1037, %v4402, %v4398
        %v4404 = vlaneseq
        %v4405 = vshrl.u32 %v4404, 7
        %v4406 = vsub.s32 %v1039, %v4405
        %v4407 = vrot.slane %v3455, %v4406
        %v4408 = vsel %vm1044, %v4407, %v4403
        %v4409 = vlaneseq
        %v4410 = vshrl.u32 %v4409, 7
        %v4411 = vsub.s32 %v1046, %v4410
        %v4412 = vrot.slane %v3460, %v4411
        %v4413 = vsel %vm1051, %v4412, %v4408
        %v4414 = vlaneseq
        %v4415 = vshrl.u32 %v4414, 7
        %v4416 = vsub.s32 %v1053, %v4415
        %v4417 = vrot.slane %v3465, %v4416
        %v4418 = vsel %vm1058, %v4417, %v4413
        %v4419 = vlaneseq
        %v4420 = vshrl.u32 %v4419, 7
        %v4421 = vsub.s32 %v1060, %v4420
        %v4422 = vrot.slane %v3470, %v4421
        %v4423 = vsel %vm1065, %v4422, %v4418
        %v4424 = vlaneseq
        %v4425 = vshrl.u32 %v4424, 7
        %v4426 = vsub.s32 %v1067, %v4425
        %v4427 = vrot.slane %v3475, %v4426
        %v4428 = vsel %vm1072, %v4427, %v4423
        %v4429 = vlaneseq
        %v4430 = vshrl.u32 %v4429, 7
        %v4431 = vsub.s32 %v1074, %v4430
        %v4432 = vrot.slane %v3480, %v4431
        %v4433 = vsel %vm1079, %v4432, %v4428
        %v4434 = vlaneseq
        %v4435 = vshrl.u32 %v4434, 7
        %v4436 = vsub.s32 %v1081, %v4435
        %v4437 = vrot.slane %v3485, %v4436
        %v4438 = vsel %vm1086, %v4437, %v4433
        %v4439 = vlaneseq
        %v4440 = vshrl.u32 %v4439, 7
        %v4441 = vsub.s32 %v978, %v4440
        %v4442 = vrot.slane %v3490, %v4441
        %v4443 = vlaneseq
        %v4444 = vshrl.u32 %v4443, 7
        %v4445 = vsub.s32 %v983, %v4444
        %v4446 = vrot.slane %v3495, %v4445
        %v4447 = vsel %vm988, %v4446, %v4442
        %v4448 = vlaneseq
        %v4449 = vshrl.u32 %v4448, 7
        %v4450 = vsub.s32 %v990, %v4449
        %v4451 = vrot.slane %v3500, %v4450
        %v4452 = vsel %vm995, %v4451, %v4447
        %v4453 = vlaneseq
        %v4454 = vshrl.u32 %v4453, 7
        %v4455 = vsub.s32 %v997, %v4454
        %v4456 = vrot.slane %v3505, %v4455
        %v4457 = vsel %vm1002, %v4456, %v4452
        %v4458 = vlaneseq
        %v4459 = vshrl.u32 %v4458, 7
        %v4460 = vsub.s32 %v1004, %v4459
        %v4461 = vrot.slane %v3510, %v4460
        %v4462 = vsel %vm1009, %v4461, %v4457
        %v4463 = vlaneseq
        %v4464 = vshrl.u32 %v4463, 7
        %v4465 = vsub.s32 %v1011, %v4464
        %v4466 = vrot.slane %v3515, %v4465
        %v4467 = vsel %vm1016, %v4466, %v4462
        %v4468 = vlaneseq
        %v4469 = vshrl.u32 %v4468, 7
        %v4470 = vsub.s32 %v1018, %v4469
        %v4471 = vrot.slane %v3520, %v4470
        %v4472 = vsel %vm1023, %v4471, %v4467
        %v4473 = vlaneseq
        %v4474 = vshrl.u32 %v4473, 7
        %v4475 = vsub.s32 %v1025, %v4474
        %v4476 = vrot.slane %v3525, %v4475
        %v4477 = vsel %vm1030, %v4476, %v4472
        %v4478 = vlaneseq
        %v4479 = vshrl.u32 %v4478, 7
        %v4480 = vsub.s32 %v1032, %v4479
        %v4481 = vrot.slane %v3530, %v4480
        %v4482 = vsel %vm1037, %v4481, %v4477
        %v4483 = vlaneseq
        %v4484 = vshrl.u32 %v4483, 7
        %v4485 = vsub.s32 %v1039, %v4484
        %v4486 = vrot.slane %v3535, %v4485
        %v4487 = vsel %vm1044, %v4486, %v4482
        %v4488 = vlaneseq
        %v4489 = vshrl.u32 %v4488, 7
        %v4490 = vsub.s32 %v1046, %v4489
        %v4491 = vrot.slane %v3540, %v4490
        %v4492 = vsel %vm1051, %v4491, %v4487
        %v4493 = vlaneseq
        %v4494 = vshrl.u32 %v4493, 7
        %v4495 = vsub.s32 %v1053, %v4494
        %v4496 = vrot.slane %v3545, %v4495
        %v4497 = vsel %vm1058, %v4496, %v4492
        %v4498 = vlaneseq
        %v4499 = vshrl.u32 %v4498, 7
        %v4500 = vsub.s32 %v1060, %v4499
        %v4501 = vrot.slane %v3550, %v4500
        %v4502 = vsel %vm1065, %v4501, %v4497
        %v4503 = vlaneseq
        %v4504 = vshrl.u32 %v4503, 7
        %v4505 = vsub.s32 %v1067, %v4504
        %v4506 = vrot.slane %v3555, %v4505
        %v4507 = vsel %vm1072, %v4506, %v4502
        %v4508 = vlaneseq
        %v4509 = vshrl.u32 %v4508, 7
        %v4510 = vsub.s32 %v1074, %v4509
        %v4511 = vrot.slane %v3560, %v4510
        %v4512 = vsel %vm1079, %v4511, %v4507
        %v4513 = vlaneseq
        %v4514 = vshrl.u32 %v4513, 7
        %v4515 = vsub.s32 %v1081, %v4514
        %v4516 = vrot.slane %v3565, %v4515
        %v4517 = vsel %vm1086, %v4516, %v4512
        %v4518 = vlaneseq
        %v4519 = vshrl.u32 %v4518, 7
        %v4520 = vsub.s32 %v978, %v4519
        %v4521 = vrot.slane %v3570, %v4520
        %v4522 = vlaneseq
        %v4523 = vshrl.u32 %v4522, 7
        %v4524 = vsub.s32 %v983, %v4523
        %v4525 = vrot.slane %v3575, %v4524
        %v4526 = vsel %vm988, %v4525, %v4521
        %v4527 = vlaneseq
        %v4528 = vshrl.u32 %v4527, 7
        %v4529 = vsub.s32 %v990, %v4528
        %v4530 = vrot.slane %v3580, %v4529
        %v4531 = vsel %vm995, %v4530, %v4526
        %v4532 = vlaneseq
        %v4533 = vshrl.u32 %v4532, 7
        %v4534 = vsub.s32 %v997, %v4533
        %v4535 = vrot.slane %v3585, %v4534
        %v4536 = vsel %vm1002, %v4535, %v4531
        %v4537 = vlaneseq
        %v4538 = vshrl.u32 %v4537, 7
        %v4539 = vsub.s32 %v1004, %v4538
        %v4540 = vrot.slane %v3590, %v4539
        %v4541 = vsel %vm1009, %v4540, %v4536
        %v4542 = vlaneseq
        %v4543 = vshrl.u32 %v4542, 7
        %v4544 = vsub.s32 %v1011, %v4543
        %v4545 = vrot.slane %v3595, %v4544
        %v4546 = vsel %vm1016, %v4545, %v4541
        %v4547 = vlaneseq
        %v4548 = vshrl.u32 %v4547, 7
        %v4549 = vsub.s32 %v1018, %v4548
        %v4550 = vrot.slane %v3600, %v4549
        %v4551 = vsel %vm1023, %v4550, %v4546
        %v4552 = vlaneseq
        %v4553 = vshrl.u32 %v4552, 7
        %v4554 = vsub.s32 %v1025, %v4553
        %v4555 = vrot.slane %v3605, %v4554
        %v4556 = vsel %vm1030, %v4555, %v4551
        %v4557 = vlaneseq
        %v4558 = vshrl.u32 %v4557, 7
        %v4559 = vsub.s32 %v1032, %v4558
        %v4560 = vrot.slane %v3610, %v4559
        %v4561 = vsel %vm1037, %v4560, %v4556
        %v4562 = vlaneseq
        %v4563 = vshrl.u32 %v4562, 7
        %v4564 = vsub.s32 %v1039, %v4563
        %v4565 = vrot.slane %v3615, %v4564
        %v4566 = vsel %vm1044, %v4565, %v4561
        %v4567 = vlaneseq
        %v4568 = vshrl.u32 %v4567, 7
        %v4569 = vsub.s32 %v1046, %v4568
        %v4570 = vrot.slane %v3620, %v4569
        %v4571 = vsel %vm1051, %v4570, %v4566
        %v4572 = vlaneseq
        %v4573 = vshrl.u32 %v4572, 7
        %v4574 = vsub.s32 %v1053, %v4573
        %v4575 = vrot.slane %v3625, %v4574
        %v4576 = vsel %vm1058, %v4575, %v4571
        %v4577 = vlaneseq
        %v4578 = vshrl.u32 %v4577, 7
        %v4579 = vsub.s32 %v1060, %v4578
        %v4580 = vrot.slane %v3630, %v4579
        %v4581 = vsel %vm1065, %v4580, %v4576
        %v4582 = vlaneseq
        %v4583 = vshrl.u32 %v4582, 7
        %v4584 = vsub.s32 %v1067, %v4583
        %v4585 = vrot.slane %v3635, %v4584
        %v4586 = vsel %vm1072, %v4585, %v4581
        %v4587 = vlaneseq
        %v4588 = vshrl.u32 %v4587, 7
        %v4589 = vsub.s32 %v1074, %v4588
        %v4590 = vrot.slane %v3640, %v4589
        %v4591 = vsel %vm1079, %v4590, %v4586
        %v4592 = vlaneseq
        %v4593 = vshrl.u32 %v4592, 7
        %v4594 = vsub.s32 %v1081, %v4593
        %v4595 = vrot.slane %v3645, %v4594
        %v4596 = vsel %vm1086, %v4595, %v4591
        %v4597 = vlaneseq
        %v4598 = vshrl.u32 %v4597, 7
        %v4599 = vsub.s32 %v978, %v4598
        %v4600 = vrot.slane %v3650, %v4599
        %v4601 = vlaneseq
        %v4602 = vshrl.u32 %v4601, 7
        %v4603 = vsub.s32 %v983, %v4602
        %v4604 = vrot.slane %v3655, %v4603
        %v4605 = vsel %vm988, %v4604, %v4600
        %v4606 = vlaneseq
        %v4607 = vshrl.u32 %v4606, 7
        %v4608 = vsub.s32 %v990, %v4607
        %v4609 = vrot.slane %v3660, %v4608
        %v4610 = vsel %vm995, %v4609, %v4605
        %v4611 = vlaneseq
        %v4612 = vshrl.u32 %v4611, 7
        %v4613 = vsub.s32 %v997, %v4612
        %v4614 = vrot.slane %v3665, %v4613
        %v4615 = vsel %vm1002, %v4614, %v4610
        %v4616 = vlaneseq
        %v4617 = vshrl.u32 %v4616, 7
        %v4618 = vsub.s32 %v1004, %v4617
        %v4619 = vrot.slane %v3670, %v4618
        %v4620 = vsel %vm1009, %v4619, %v4615
        %v4621 = vlaneseq
        %v4622 = vshrl.u32 %v4621, 7
        %v4623 = vsub.s32 %v1011, %v4622
        %v4624 = vrot.slane %v3675, %v4623
        %v4625 = vsel %vm1016, %v4624, %v4620
        %v4626 = vlaneseq
        %v4627 = vshrl.u32 %v4626, 7
        %v4628 = vsub.s32 %v1018, %v4627
        %v4629 = vrot.slane %v3680, %v4628
        %v4630 = vsel %vm1023, %v4629, %v4625
        %v4631 = vlaneseq
        %v4632 = vshrl.u32 %v4631, 7
        %v4633 = vsub.s32 %v1025, %v4632
        %v4634 = vrot.slane %v3685, %v4633
        %v4635 = vsel %vm1030, %v4634, %v4630
        %v4636 = vlaneseq
        %v4637 = vshrl.u32 %v4636, 7
        %v4638 = vsub.s32 %v1032, %v4637
        %v4639 = vrot.slane %v3690, %v4638
        %v4640 = vsel %vm1037, %v4639, %v4635
        %v4641 = vlaneseq
        %v4642 = vshrl.u32 %v4641, 7
        %v4643 = vsub.s32 %v1039, %v4642
        %v4644 = vrot.slane %v3695, %v4643
        %v4645 = vsel %vm1044, %v4644, %v4640
        %v4646 = vlaneseq
        %v4647 = vshrl.u32 %v4646, 7
        %v4648 = vsub.s32 %v1046, %v4647
        %v4649 = vrot.slane %v3700, %v4648
        %v4650 = vsel %vm1051, %v4649, %v4645
        %v4651 = vlaneseq
        %v4652 = vshrl.u32 %v4651, 7
        %v4653 = vsub.s32 %v1053, %v4652
        %v4654 = vrot.slane %v3705, %v4653
        %v4655 = vsel %vm1058, %v4654, %v4650
        %v4656 = vlaneseq
        %v4657 = vshrl.u32 %v4656, 7
        %v4658 = vsub.s32 %v1060, %v4657
        %v4659 = vrot.slane %v3710, %v4658
        %v4660 = vsel %vm1065, %v4659, %v4655
        %v4661 = vlaneseq
        %v4662 = vshrl.u32 %v4661, 7
        %v4663 = vsub.s32 %v1067, %v4662
        %v4664 = vrot.slane %v3715, %v4663
        %v4665 = vsel %vm1072, %v4664, %v4660
        %v4666 = vlaneseq
        %v4667 = vshrl.u32 %v4666, 7
        %v4668 = vsub.s32 %v1074, %v4667
        %v4669 = vrot.slane %v3720, %v4668
        %v4670 = vsel %vm1079, %v4669, %v4665
        %v4671 = vlaneseq
        %v4672 = vshrl.u32 %v4671, 7
        %v4673 = vsub.s32 %v1081, %v4672
        %v4674 = vrot.slane %v3725, %v4673
        %v4675 = vsel %vm1086, %v4674, %v4670
        %v4676 = vlaneseq
        %v4677 = vshrl.u32 %v4676, 7
        %v4678 = vsub.s32 %v978, %v4677
        %v4679 = vrot.slane %v3730, %v4678
        %v4680 = vlaneseq
        %v4681 = vshrl.u32 %v4680, 7
        %v4682 = vsub.s32 %v983, %v4681
        %v4683 = vrot.slane %v3735, %v4682
        %v4684 = vsel %vm988, %v4683, %v4679
        %v4685 = vlaneseq
        %v4686 = vshrl.u32 %v4685, 7
        %v4687 = vsub.s32 %v990, %v4686
        %v4688 = vrot.slane %v3740, %v4687
        %v4689 = vsel %vm995, %v4688, %v4684
        %v4690 = vlaneseq
        %v4691 = vshrl.u32 %v4690, 7
        %v4692 = vsub.s32 %v997, %v4691
        %v4693 = vrot.slane %v3745, %v4692
        %v4694 = vsel %vm1002, %v4693, %v4689
        %v4695 = vlaneseq
        %v4696 = vshrl.u32 %v4695, 7
        %v4697 = vsub.s32 %v1004, %v4696
        %v4698 = vrot.slane %v3750, %v4697
        %v4699 = vsel %vm1009, %v4698, %v4694
        %v4700 = vlaneseq
        %v4701 = vshrl.u32 %v4700, 7
        %v4702 = vsub.s32 %v1011, %v4701
        %v4703 = vrot.slane %v3755, %v4702
        %v4704 = vsel %vm1016, %v4703, %v4699
        %v4705 = vlaneseq
        %v4706 = vshrl.u32 %v4705, 7
        %v4707 = vsub.s32 %v1018, %v4706
        %v4708 = vrot.slane %v3760, %v4707
        %v4709 = vsel %vm1023, %v4708, %v4704
        %v4710 = vlaneseq
        %v4711 = vshrl.u32 %v4710, 7
        %v4712 = vsub.s32 %v1025, %v4711
        %v4713 = vrot.slane %v3765, %v4712
        %v4714 = vsel %vm1030, %v4713, %v4709
        %v4715 = vlaneseq
        %v4716 = vshrl.u32 %v4715, 7
        %v4717 = vsub.s32 %v1032, %v4716
        %v4718 = vrot.slane %v3770, %v4717
        %v4719 = vsel %vm1037, %v4718, %v4714
        %v4720 = vlaneseq
        %v4721 = vshrl.u32 %v4720, 7
        %v4722 = vsub.s32 %v1039, %v4721
        %v4723 = vrot.slane %v3775, %v4722
        %v4724 = vsel %vm1044, %v4723, %v4719
        %v4725 = vlaneseq
        %v4726 = vshrl.u32 %v4725, 7
        %v4727 = vsub.s32 %v1046, %v4726
        %v4728 = vrot.slane %v3780, %v4727
        %v4729 = vsel %vm1051, %v4728, %v4724
        %v4730 = vlaneseq
        %v4731 = vshrl.u32 %v4730, 7
        %v4732 = vsub.s32 %v1053, %v4731
        %v4733 = vrot.slane %v3785, %v4732
        %v4734 = vsel %vm1058, %v4733, %v4729
        %v4735 = vlaneseq
        %v4736 = vshrl.u32 %v4735, 7
        %v4737 = vsub.s32 %v1060, %v4736
        %v4738 = vrot.slane %v3790, %v4737
        %v4739 = vsel %vm1065, %v4738, %v4734
        %v4740 = vlaneseq
        %v4741 = vshrl.u32 %v4740, 7
        %v4742 = vsub.s32 %v1067, %v4741
        %v4743 = vrot.slane %v3795, %v4742
        %v4744 = vsel %vm1072, %v4743, %v4739
        %v4745 = vlaneseq
        %v4746 = vshrl.u32 %v4745, 7
        %v4747 = vsub.s32 %v1074, %v4746
        %v4748 = vrot.slane %v3800, %v4747
        %v4749 = vsel %vm1079, %v4748, %v4744
        %v4750 = vlaneseq
        %v4751 = vshrl.u32 %v4750, 7
        %v4752 = vsub.s32 %v1081, %v4751
        %v4753 = vrot.slane %v3805, %v4752
        %v4754 = vsel %vm1086, %v4753, %v4749
        %v4755 = vlaneseq
        %v4756 = vshrl.u32 %v4755, 7
        %v4757 = vsub.s32 %v978, %v4756
        %v4758 = vrot.slane %v3810, %v4757
        %v4759 = vlaneseq
        %v4760 = vshrl.u32 %v4759, 7
        %v4761 = vsub.s32 %v983, %v4760
        %v4762 = vrot.slane %v3815, %v4761
        %v4763 = vsel %vm988, %v4762, %v4758
        %v4764 = vlaneseq
        %v4765 = vshrl.u32 %v4764, 7
        %v4766 = vsub.s32 %v990, %v4765
        %v4767 = vrot.slane %v3820, %v4766
        %v4768 = vsel %vm995, %v4767, %v4763
        %v4769 = vlaneseq
        %v4770 = vshrl.u32 %v4769, 7
        %v4771 = vsub.s32 %v997, %v4770
        %v4772 = vrot.slane %v3825, %v4771
        %v4773 = vsel %vm1002, %v4772, %v4768
        %v4774 = vlaneseq
        %v4775 = vshrl.u32 %v4774, 7
        %v4776 = vsub.s32 %v1004, %v4775
        %v4777 = vrot.slane %v3830, %v4776
        %v4778 = vsel %vm1009, %v4777, %v4773
        %v4779 = vlaneseq
        %v4780 = vshrl.u32 %v4779, 7
        %v4781 = vsub.s32 %v1011, %v4780
        %v4782 = vrot.slane %v3835, %v4781
        %v4783 = vsel %vm1016, %v4782, %v4778
        %v4784 = vlaneseq
        %v4785 = vshrl.u32 %v4784, 7
        %v4786 = vsub.s32 %v1018, %v4785
        %v4787 = vrot.slane %v3840, %v4786
        %v4788 = vsel %vm1023, %v4787, %v4783
        %v4789 = vlaneseq
        %v4790 = vshrl.u32 %v4789, 7
        %v4791 = vsub.s32 %v1025, %v4790
        %v4792 = vrot.slane %v3845, %v4791
        %v4793 = vsel %vm1030, %v4792, %v4788
        %v4794 = vlaneseq
        %v4795 = vshrl.u32 %v4794, 7
        %v4796 = vsub.s32 %v1032, %v4795
        %v4797 = vrot.slane %v3850, %v4796
        %v4798 = vsel %vm1037, %v4797, %v4793
        %v4799 = vlaneseq
        %v4800 = vshrl.u32 %v4799, 7
        %v4801 = vsub.s32 %v1039, %v4800
        %v4802 = vrot.slane %v3855, %v4801
        %v4803 = vsel %vm1044, %v4802, %v4798
        %v4804 = vlaneseq
        %v4805 = vshrl.u32 %v4804, 7
        %v4806 = vsub.s32 %v1046, %v4805
        %v4807 = vrot.slane %v3860, %v4806
        %v4808 = vsel %vm1051, %v4807, %v4803
        %v4809 = vlaneseq
        %v4810 = vshrl.u32 %v4809, 7
        %v4811 = vsub.s32 %v1053, %v4810
        %v4812 = vrot.slane %v3865, %v4811
        %v4813 = vsel %vm1058, %v4812, %v4808
        %v4814 = vlaneseq
        %v4815 = vshrl.u32 %v4814, 7
        %v4816 = vsub.s32 %v1060, %v4815
        %v4817 = vrot.slane %v3870, %v4816
        %v4818 = vsel %vm1065, %v4817, %v4813
        %v4819 = vlaneseq
        %v4820 = vshrl.u32 %v4819, 7
        %v4821 = vsub.s32 %v1067, %v4820
        %v4822 = vrot.slane %v3875, %v4821
        %v4823 = vsel %vm1072, %v4822, %v4818
        %v4824 = vlaneseq
        %v4825 = vshrl.u32 %v4824, 7
        %v4826 = vsub.s32 %v1074, %v4825
        %v4827 = vrot.slane %v3880, %v4826
        %v4828 = vsel %vm1079, %v4827, %v4823
        %v4829 = vlaneseq
        %v4830 = vshrl.u32 %v4829, 7
        %v4831 = vsub.s32 %v1081, %v4830
        %v4832 = vrot.slane %v3885, %v4831
        %v4833 = vsel %vm1086, %v4832, %v4828
        %v4834 = vlaneseq
        %v4835 = vshrl.u32 %v4834, 7
        %v4836 = vsub.s32 %v978, %v4835
        %v4837 = vrot.slane %v3890, %v4836
        %v4838 = vlaneseq
        %v4839 = vshrl.u32 %v4838, 7
        %v4840 = vsub.s32 %v983, %v4839
        %v4841 = vrot.slane %v3895, %v4840
        %v4842 = vsel %vm988, %v4841, %v4837
        %v4843 = vlaneseq
        %v4844 = vshrl.u32 %v4843, 7
        %v4845 = vsub.s32 %v990, %v4844
        %v4846 = vrot.slane %v3900, %v4845
        %v4847 = vsel %vm995, %v4846, %v4842
        %v4848 = vlaneseq
        %v4849 = vshrl.u32 %v4848, 7
        %v4850 = vsub.s32 %v997, %v4849
        %v4851 = vrot.slane %v3905, %v4850
        %v4852 = vsel %vm1002, %v4851, %v4847
        %v4853 = vlaneseq
        %v4854 = vshrl.u32 %v4853, 7
        %v4855 = vsub.s32 %v1004, %v4854
        %v4856 = vrot.slane %v3910, %v4855
        %v4857 = vsel %vm1009, %v4856, %v4852
        %v4858 = vlaneseq
        %v4859 = vshrl.u32 %v4858, 7
        %v4860 = vsub.s32 %v1011, %v4859
        %v4861 = vrot.slane %v3915, %v4860
        %v4862 = vsel %vm1016, %v4861, %v4857
        %v4863 = vlaneseq
        %v4864 = vshrl.u32 %v4863, 7
        %v4865 = vsub.s32 %v1018, %v4864
        %v4866 = vrot.slane %v3920, %v4865
        %v4867 = vsel %vm1023, %v4866, %v4862
        %v4868 = vlaneseq
        %v4869 = vshrl.u32 %v4868, 7
        %v4870 = vsub.s32 %v1025, %v4869
        %v4871 = vrot.slane %v3925, %v4870
        %v4872 = vsel %vm1030, %v4871, %v4867
        %v4873 = vlaneseq
        %v4874 = vshrl.u32 %v4873, 7
        %v4875 = vsub.s32 %v1032, %v4874
        %v4876 = vrot.slane %v3930, %v4875
        %v4877 = vsel %vm1037, %v4876, %v4872
        %v4878 = vlaneseq
        %v4879 = vshrl.u32 %v4878, 7
        %v4880 = vsub.s32 %v1039, %v4879
        %v4881 = vrot.slane %v3935, %v4880
        %v4882 = vsel %vm1044, %v4881, %v4877
        %v4883 = vlaneseq
        %v4884 = vshrl.u32 %v4883, 7
        %v4885 = vsub.s32 %v1046, %v4884
        %v4886 = vrot.slane %v3940, %v4885
        %v4887 = vsel %vm1051, %v4886, %v4882
        %v4888 = vlaneseq
        %v4889 = vshrl.u32 %v4888, 7
        %v4890 = vsub.s32 %v1053, %v4889
        %v4891 = vrot.slane %v3945, %v4890
        %v4892 = vsel %vm1058, %v4891, %v4887
        %v4893 = vlaneseq
        %v4894 = vshrl.u32 %v4893, 7
        %v4895 = vsub.s32 %v1060, %v4894
        %v4896 = vrot.slane %v3950, %v4895
        %v4897 = vsel %vm1065, %v4896, %v4892
        %v4898 = vlaneseq
        %v4899 = vshrl.u32 %v4898, 7
        %v4900 = vsub.s32 %v1067, %v4899
        %v4901 = vrot.slane %v3955, %v4900
        %v4902 = vsel %vm1072, %v4901, %v4897
        %v4903 = vlaneseq
        %v4904 = vshrl.u32 %v4903, 7
        %v4905 = vsub.s32 %v1074, %v4904
        %v4906 = vrot.slane %v3960, %v4905
        %v4907 = vsel %vm1079, %v4906, %v4902
        %v4908 = vlaneseq
        %v4909 = vshrl.u32 %v4908, 7
        %v4910 = vsub.s32 %v1081, %v4909
        %v4911 = vrot.slane %v3965, %v4910
        %v4912 = vsel %vm1086, %v4911, %v4907
        %v4913 = vlaneseq
        %v4914 = vshrl.u32 %v4913, 7
        %v4915 = vsub.s32 %v978, %v4914
        %v4916 = vrot.slane %v3970, %v4915
        %v4917 = vlaneseq
        %v4918 = vshrl.u32 %v4917, 7
        %v4919 = vsub.s32 %v983, %v4918
        %v4920 = vrot.slane %v3975, %v4919
        %v4921 = vsel %vm988, %v4920, %v4916
        %v4922 = vlaneseq
        %v4923 = vshrl.u32 %v4922, 7
        %v4924 = vsub.s32 %v990, %v4923
        %v4925 = vrot.slane %v3980, %v4924
        %v4926 = vsel %vm995, %v4925, %v4921
        %v4927 = vlaneseq
        %v4928 = vshrl.u32 %v4927, 7
        %v4929 = vsub.s32 %v997, %v4928
        %v4930 = vrot.slane %v3985, %v4929
        %v4931 = vsel %vm1002, %v4930, %v4926
        %v4932 = vlaneseq
        %v4933 = vshrl.u32 %v4932, 7
        %v4934 = vsub.s32 %v1004, %v4933
        %v4935 = vrot.slane %v3990, %v4934
        %v4936 = vsel %vm1009, %v4935, %v4931
        %v4937 = vlaneseq
        %v4938 = vshrl.u32 %v4937, 7
        %v4939 = vsub.s32 %v1011, %v4938
        %v4940 = vrot.slane %v3995, %v4939
        %v4941 = vsel %vm1016, %v4940, %v4936
        %v4942 = vlaneseq
        %v4943 = vshrl.u32 %v4942, 7
        %v4944 = vsub.s32 %v1018, %v4943
        %v4945 = vrot.slane %v4000, %v4944
        %v4946 = vsel %vm1023, %v4945, %v4941
        %v4947 = vlaneseq
        %v4948 = vshrl.u32 %v4947, 7
        %v4949 = vsub.s32 %v1025, %v4948
        %v4950 = vrot.slane %v4005, %v4949
        %v4951 = vsel %vm1030, %v4950, %v4946
        %v4952 = vlaneseq
        %v4953 = vshrl.u32 %v4952, 7
        %v4954 = vsub.s32 %v1032, %v4953
        %v4955 = vrot.slane %v4010, %v4954
        %v4956 = vsel %vm1037, %v4955, %v4951
        %v4957 = vlaneseq
        %v4958 = vshrl.u32 %v4957, 7
        %v4959 = vsub.s32 %v1039, %v4958
        %v4960 = vrot.slane %v4015, %v4959
        %v4961 = vsel %vm1044, %v4960, %v4956
        %v4962 = vlaneseq
        %v4963 = vshrl.u32 %v4962, 7
        %v4964 = vsub.s32 %v1046, %v4963
        %v4965 = vrot.slane %v4020, %v4964
        %v4966 = vsel %vm1051, %v4965, %v4961
        %v4967 = vlaneseq
        %v4968 = vshrl.u32 %v4967, 7
        %v4969 = vsub.s32 %v1053, %v4968
        %v4970 = vrot.slane %v4025, %v4969
        %v4971 = vsel %vm1058, %v4970, %v4966
        %v4972 = vlaneseq
        %v4973 = vshrl.u32 %v4972, 7
        %v4974 = vsub.s32 %v1060, %v4973
        %v4975 = vrot.slane %v4030, %v4974
        %v4976 = vsel %vm1065, %v4975, %v4971
        %v4977 = vlaneseq
        %v4978 = vshrl.u32 %v4977, 7
        %v4979 = vsub.s32 %v1067, %v4978
        %v4980 = vrot.slane %v4035, %v4979
        %v4981 = vsel %vm1072, %v4980, %v4976
        %v4982 = vlaneseq
        %v4983 = vshrl.u32 %v4982, 7
        %v4984 = vsub.s32 %v1074, %v4983
        %v4985 = vrot.slane %v4040, %v4984
        %v4986 = vsel %vm1079, %v4985, %v4981
        %v4987 = vlaneseq
        %v4988 = vshrl.u32 %v4987, 7
        %v4989 = vsub.s32 %v1081, %v4988
        %v4990 = vrot.slane %v4045, %v4989
        %v4991 = vsel %vm1086, %v4990, %v4986
        %v4992 = vsel %vm1641, %v4517, %v4438
        %v4993 = vsel %vm1643, %v4596, %v4992
        %v4994 = vsel %vm1645, %v4675, %v4993
        %v4995 = vsel %vm1647, %v4754, %v4994
        %v4996 = vsel %vm1649, %v4833, %v4995
        %v4997 = vsel %vm1651, %v4912, %v4996
        %v4998 = vsel %vm1653, %v4991, %v4997
        %5000 = vst [vmem:[%s200] sm:$0xff] %v4998
        %s5001 = sand.u32 %s79, 1
        %s5002 = scalar_lea.sflag [#allocation4], %s5001
        %s5003 = sand.u32 %s79, 1
        %s5004 = smul.addr %s5003, 8
        %s5005 = scalar_lea.vmem [#allocation5], %s5004
        %s5006 = sand.u32 %s105, 1
        %s5007 = scalar_lea.sflag [#allocation7], %s5006
        %s5008 = sand.u32 %s105, 1
        %s5009 = smul.addr %s5008, 8
        %s5010 = scalar_lea.vmem [#allocation6], %s5009
        // Predicated region
        $region33: #{tpu_custom_call.1} parent=27 // pred_check
          %p5011 = pneg %p89
        $region34: #{tpu_custom_call.1} parent=27 // pred_check_branch
          %5013 = sbr.rel (%p5011) target = $region36
        $region35: #{tpu_custom_call.1} parent=27 // pred_region
          %s5015 = ssub.s32 128, 128
          %5016 = vsyncadd %s5002, %s5015
          %s5017 = smul.addr %s24, 128
          %s5018 = scalar_lea.hbm %s2, %s5017
          %s5020 = sshll.u32 %s5005, 4
          %s5021 = int_to_ptr.vmem [resolvable:$true] %s5020
          %5023 = dma.vmem_to_hbm [thread:$0]  %s5021, 128, %s5018, %s5002
        $region36: #{tpu_custom_call.1} parent=27 // pred_fallthru
          _
        // Predicated region
        $region37: #{tpu_custom_call.1} parent=27 // pred_check
          %p5024 = pneg %p115
        $region38: #{tpu_custom_call.1} parent=27 // pred_check_branch
          %5026 = sbr.rel (%p5024) target = $region40
        $region39: #{tpu_custom_call.1} parent=27 // pred_region
          %s5028 = ssub.s32 128, 128
          %5029 = vsyncadd %s5007, %s5028
          %s5030 = smul.addr %s24, 128
          %s5031 = scalar_lea.hbm %s3, %s5030
          %s5033 = sshll.u32 %s5010, 4
          %s5034 = int_to_ptr.vmem [resolvable:$true] %s5033
          %5036 = dma.vmem_to_hbm [thread:$0]  %s5034, 128, %s5031, %s5007
        $region40: #{tpu_custom_call.1} parent=27 // pred_fallthru
          _
      $region28: #{tpu_custom_call.1} parent=5 // pred_fallthru
        _
      %p5037 = scmp.le.s32.totalorder 2, %s19
      // Predicated region
      $region41: #{tpu_custom_call.1} parent=5 // pred_check
        %p5038 = pneg %p5037
      $region42: #{tpu_custom_call.1} parent=5 // pred_check_branch
        %5040 = sbr.rel (%p5038) target = $region44
      $region43: #{tpu_custom_call.1} parent=5 // pred_region
        %s5041 = ssub.s32 %s19, 2
        // Predicated region
        $region45: #{tpu_custom_call.1} parent=43 // pred_check
          %p5042 = pneg %p95
        $region46: #{tpu_custom_call.1} parent=43 // pred_check_branch
          %5044 = sbr.rel (%p5042) target = $region48
        $region47: #{tpu_custom_call.1} parent=43 // pred_region
          %s5045 = sand.u32 %s80, 1
          %s5046 = scalar_lea.sflag [#allocation4], %s5045
          %s5047 = sand.u32 %s80, 1
          %s5048 = smul.addr %s5047, 8
          %s5049 = scalar_lea.vmem [#allocation5], %s5048
          %5050 = dma.done %s5046, 128
        $region48: #{tpu_custom_call.1} parent=43 // pred_fallthru
          _
        // Predicated region
        $region49: #{tpu_custom_call.1} parent=43 // pred_check
          %p5051 = pneg %p121
        $region50: #{tpu_custom_call.1} parent=43 // pred_check_branch
          %5053 = sbr.rel (%p5051) target = $region52
        $region51: #{tpu_custom_call.1} parent=43 // pred_region
          %s5054 = sand.u32 %s106, 1
          %s5055 = scalar_lea.sflag [#allocation7], %s5054
          %s5056 = sand.u32 %s106, 1
          %s5057 = smul.addr %s5056, 8
          %s5058 = scalar_lea.vmem [#allocation6], %s5057
          %5059 = dma.done %s5055, 128
        $region52: #{tpu_custom_call.1} parent=43 // pred_fallthru
          _
      $region44: #{tpu_custom_call.1} parent=5 // pred_fallthru
        _
    $region6: #{tpu_custom_call.1} parent=1 // loop_footer
      %s23 = sadd.s32 1, %s19
    $region7: #{tpu_custom_call.1} parent=1 // loop_footer_branch
      %18 = sbr.rel target = $region3
    $region8: #{tpu_custom_call.1} parent=1 // loop_exit
      _
    %5060 = vsyncpa [#allocation3], 1
    %s5061 = scalar_lea.sflag [#allocation3], 1
    %5062 = vsyncpa %s5061, 1
    %5063 = vsyncpa [#allocation4], 1
    %s5064 = scalar_lea.sflag [#allocation4], 1
    %5065 = vsyncpa %s5064, 1
    %5066 = vsyncpa [#allocation7], 1
    %s5067 = scalar_lea.sflag [#allocation7], 1
    %5068 = vsyncpa %s5067, 1

</llo_original>
